<compile_context>
chip_gen: v6e
topology: v6e:2x2x1
jax: 0.10.0
libtpu: 0.0.40
codegen_flags: <defaults>
</compile_context>

<pallas_src>
import functools

import jax
import jax.numpy as jnp
import numpy as np
from jax.experimental import pallas as pl
from jax.experimental.pallas import tpu as pltpu


def _round_up(x, m):
    return ((x + m - 1) // m) * m


_LANE_ALIGN = 256   # MXU-aligned tile width (v6e/v7x 2x256 MXU; fine on v5e)
_M_PAD = 16         # bf16 sublane packing for the batch/M dimension


def _vmem_capacity_bytes():
    """Physical per-core VMEM; conservative fallback = 64 MiB (v7x)."""
    try:
        info = pltpu.get_tpu_info()
        cap = getattr(info, "vmem_capacity_bytes", None)
        if cap:
            return int(cap)
    except Exception:
        pass
    return 64 * 1024 * 1024


_VMEM_PHYS = _vmem_capacity_bytes()
if _VMEM_PHYS >= 96 * 1024 * 1024:
    # v5e / v6e: 128 MiB VMEM, single TensorCore -> wide N tiles are free.
    _MAX_TK = 12544
    _MAX_TN = 1024
    _VMEM_LIMIT_BYTES = 88 * 1024 * 1024
else:
    # v7x: 64 MiB VMEM, 2 TensorCores -> keep >=2 N tiles for megacore.
    _MAX_TK = 12544
    _MAX_TN = 512
    _VMEM_LIMIT_BYTES = 48 * 1024 * 1024


def _pick_tile(dim, align, max_tile):
    """Largest multiple of `align` <= max_tile dividing round_up(dim, align).

    Keeps tiles MXU-aligned while adding no padding beyond the `align`
    round-up, so no redundant weight bytes are streamed from HBM.
    """
    padded = _round_up(dim, align)
    units = padded // align
    best = 1
    for k in range(1, max(1, max_tile // align) + 1):
        if units % k == 0:
            best = k
    return best * align, padded


def _linear_kernel_acc(x_ref, w_ref, b_ref, o_ref, acc_ref, *, apply_relu, tk):
    """Multi-K-tile fused matmul+bias(+ReLU). Grid=(N tiles, K tiles), K inner.

    x_ref is the full resident (Mp, Kp) activation block; only the weights are
    streamed per grid step.
    """
    k = pl.program_id(1)

    @pl.when(k == 0)
    def _():
        acc_ref[...] = jnp.zeros_like(acc_ref)

    start = pl.multiple_of(k * tk, tk)
    acc_ref[...] += jnp.dot(
        x_ref[:, pl.ds(start, tk)], w_ref[...],
        preferred_element_type=jnp.float32,
    )

    @pl.when(k == pl.num_programs(1) - 1)
    def _():
        y = acc_ref[...] + b_ref[...]          # bias added in f32
        if apply_relu:
            y = jnp.maximum(y, 0.0)
        o_ref[...] = y.astype(o_ref.dtype)


def _linear_kernel_noacc(x_ref, w_ref, b_ref, o_ref, *, apply_relu):
    """Single-K-tile specialization: no scratch, no init/finalize phases."""
    y = jnp.dot(x_ref[...], w_ref[...], preferred_element_type=jnp.float32)
    y = y + b_ref[...]
    if apply_relu:
        y = jnp.maximum(y, 0.0)
    o_ref[...] = y.astype(o_ref.dtype)


class PallasLinear:
    """One Linear layer operating on padded activations.

    Weights are padded to tile multiples and cast to bf16 once at construction
    (halves HBM bytes streamed each forward); the bias stays f32 for the
    epilogue add.
    """

    def __init__(self, w, b, *, max_tk=_MAX_TK, max_tn=_MAX_TN):
        K, N = w.shape
        assert b.shape == (N,)
        self.K, self.N = K, N
        self.tk, self.Kp = _pick_tile(K, _LANE_ALIGN, max_tk)
        self.tn, self.Np = _pick_tile(N, _LANE_ALIGN, max_tn)
        self.w = jnp.pad(w, ((0, self.Kp - K), (0, self.Np - N))).astype(jnp.bfloat16)
        self.b = jnp.pad(b.reshape(1, -1), ((0, 0), (0, self.Np - N)))  # f32

    def apply_padded(self, xp, *, apply_relu, out_dtype):
        """xp: (Mp, Kp) bf16 padded activations -> (Mp, Np) padded output."""
        Mp, Kin = xp.shape
        assert Kin == self.Kp and Mp % _M_PAD == 0
        tk, tn, Kp, Np = self.tk, self.tn, self.Kp, self.Np
        n_k = Kp // tk

        if n_k == 1:
            kernel = functools.partial(_linear_kernel_noacc, apply_relu=apply_relu)
            grid = (Np // tn,)
            in_specs = [
                pl.BlockSpec((Mp, Kp), lambda j: (0, 0)),     # resident activations
                pl.BlockSpec((Kp, tn), lambda j: (0, j)),     # streamed weights
                pl.BlockSpec((1, tn), lambda j: (0, j)),      # bias
            ]
            out_specs = pl.BlockSpec((Mp, tn), lambda j: (0, j))
            scratch_shapes = []
            dim_sem = ("parallel",)
        else:
            kernel = functools.partial(
                _linear_kernel_acc, apply_relu=apply_relu, tk=tk
            )
            grid = (Np // tn, n_k)
            in_specs = [
                pl.BlockSpec((Mp, Kp), lambda j, k: (0, 0)),  # resident activations
                pl.BlockSpec((tk, tn), lambda j, k: (k, j)),  # streamed weights
                pl.BlockSpec((1, tn), lambda j, k: (0, j)),   # bias
            ]
            out_specs = pl.BlockSpec((Mp, tn), lambda j, k: (0, j))
            scratch_shapes = [pltpu.VMEM((Mp, tn), jnp.float32)]
            dim_sem = ("parallel", "arbitrary")

        return pl.pallas_call(
            kernel,
            out_shape=jax.ShapeDtypeStruct((Mp, Np), out_dtype),
            grid_spec=pltpu.PrefetchScalarGridSpec(
                num_scalar_prefetch=0,
                grid=grid,
                in_specs=in_specs,
                out_specs=out_specs,
                scratch_shapes=scratch_shapes,
            ),
            compiler_params=pltpu.CompilerParams(
                dimension_semantics=dim_sem,
                vmem_limit_bytes=_VMEM_LIMIT_BYTES,
            ),
        )(xp, self.w, self.b)


class VGG19Classifier:
    """Scaled-down VGG19 classifier head (feature_mode=False forward path)."""

    def __init__(self, key, in_features, hidden, num_classes):
        ks = jax.random.split(key, 6)

        def init_linear(kw, kb, fan_in, fan_out):
            bound = 1.0 / np.sqrt(fan_in)
            w = jax.random.uniform(kw, (fan_in, fan_out), jnp.float32, -bound, bound)
            b = jax.random.uniform(kb, (fan_out,), jnp.float32, -bound, bound)
            return w, b

        self.w1, self.b1 = init_linear(ks[0], ks[1], in_features, hidden)
        self.w2, self.b2 = init_linear(ks[2], ks[3], hidden, hidden)
        self.w3, self.b3 = init_linear(ks[4], ks[5], hidden, num_classes)

        self.lin1 = PallasLinear(self.w1, self.b1)
        self.lin2 = PallasLinear(self.w2, self.b2)
        self.lin3 = PallasLinear(self.w3, self.b3)
        # Padded out-width of layer i equals padded in-width of layer i+1
        # (same 256-alignment round-up), so layers chain in padded bf16 form.
        assert self.lin1.Np == self.lin2.Kp and self.lin2.Np == self.lin3.Kp

        # Whole classifier under one jit: one input pad, chained padded
        # activations, one final slice (no per-layer pad/slice/cast glue).
        self._jit_forward = jax.jit(self._forward)

    def _forward(self, x_nchw):
        b = x_nchw.shape[0]
        x = x_nchw.reshape(b, -1)                 # torch: x.view(x.size(0), -1)
        Mp = _round_up(max(b, _M_PAD), _M_PAD)
        xp = jnp.pad(
            x.astype(jnp.bfloat16),
            ((0, Mp - b), (0, self.lin1.Kp - x.shape[1])),
        )
        # classifier: Linear -> ReLU -> (Dropout=id) -> Linear -> ReLU ->
        #             (Dropout=id) -> Linear
        h = self.lin1.apply_padded(xp, apply_relu=True, out_dtype=jnp.bfloat16)
        h = self.lin2.apply_padded(h, apply_relu=True, out_dtype=jnp.bfloat16)
        h = self.lin3.apply_padded(h, apply_relu=False, out_dtype=jnp.float32)
        return h[:b, : self.lin3.N]

    def __call__(self, x_nchw):
        return self._jit_forward(x_nchw)

    def reference(self, x_nchw):
        b = x_nchw.shape[0]
        x = x_nchw.reshape(b, -1)
        hp = jax.lax.Precision.HIGHEST
        x = jnp.maximum(jnp.dot(x, self.w1, precision=hp) + self.b1, 0.0)
        x = jnp.maximum(jnp.dot(x, self.w2, precision=hp) + self.b2, 0.0)
        x = jnp.dot(x, self.w3, precision=hp) + self.b3
        return x


if __name__ == "__main__":
    # Small, VGG-consistent shapes: spatial 7x7 (what the classifier expects),
    # channels/hidden/classes scaled down from 512/4096/1000 -> 128/256/128.
    B, C, H, W = 2, 128, 7, 7
    HIDDEN, NUM_CLASSES = 256, 128

    key = jax.random.PRNGKey(0)
    k_x, k_params, k_lin = jax.random.split(key, 3)
    x = jax.random.normal(k_x, (B, C, H, W), jnp.float32)

    model = VGG19Classifier(
        k_params, in_features=C * H * W, hidden=HIDDEN, num_classes=NUM_CLASSES
    )

    out = jax.block_until_ready(model(x))
    assert out.shape == (B, NUM_CLASSES), out.shape

    # Reference is f32 HIGHEST; kernel uses bf16 weights/activations with f32
    # accumulation, so allow a small numeric drift.
    ref = model.reference(x)
    np.testing.assert_allclose(np.asarray(out), np.asarray(ref), rtol=5e-2, atol=5e-2)

    # Also exercise the multi-K-tile accumulation + multi-N-tile path (the one
    # the real 25088x4096 VGG layer 1 selects) by forcing small tile caps on a
    # standalone layer and checking it against a dense reference.
    kw, kb, kx2 = jax.random.split(k_lin, 3)
    K2, N2, B2 = 512, 384, 4
    w2 = jax.random.uniform(kw, (K2, N2), jnp.float32, -0.05, 0.05)
    b2 = jax.random.uniform(kb, (N2,), jnp.float32, -0.05, 0.05)
    x2 = jax.random.normal(kx2, (B2, K2), jnp.float32)
    lin = PallasLinear(w2, b2, max_tk=256, max_tn=256)   # grid = (2 N, 2 K)
    Mp2 = _round_up(max(B2, _M_PAD), _M_PAD)
    xp2 = jnp.pad(x2.astype(jnp.bfloat16), ((0, Mp2 - B2), (0, lin.Kp - K2)))
    y2 = jax.block_until_ready(
        lin.apply_padded(xp2, apply_relu=True, out_dtype=jnp.float32)
    )[:B2, :N2]
    ref2 = jnp.maximum(
        jnp.dot(x2, w2, precision=jax.lax.Precision.HIGHEST) + b2, 0.0
    )
    np.testing.assert_allclose(np.asarray(y2), np.asarray(ref2), rtol=5e-2, atol=5e-2)

    print("KERNEL_OK")
</pallas_src>

<mosaic_0001>
module attributes {stable_mosaic.version = 11 : i64} {
  func.func @_linear_kernel_noacc(%arg0: i32, %arg1: memref<16x6400xbf16, #tpu.memory_space<vmem>>, %arg2: memref<6400x256xbf16, #tpu.memory_space<vmem>>, %arg3: memref<1x256xf32, #tpu.memory_space<vmem>>, %arg4: memref<16x256xbf16, #tpu.memory_space<vmem>>) attributes {dimension_semantics = [#tpu.dimension_semantics<parallel>], iteration_bounds = array<i64: 1>, scalar_prefetch = 0 : i64, scratch_operands = 0 : i64, tpu.core_type = #tpu.core_type<tc>, window_params = [{pipeline_mode = #tpu.pipeline_mode<synchronous>, transform_indices = @transform_0, window_bounds = array<i64: 16, 6400>}, {transform_indices = @transform_1, window_bounds = array<i64: 6400, 256>}, {transform_indices = @transform_2, window_bounds = array<i64: 1, 256>}, {transform_indices = @transform_3, window_bounds = array<i64: 16, 256>}]} {
    %c0 = arith.constant 0 : index
    %c0_0 = arith.constant 0 : index
    %0 = vector.load %arg1[%c0, %c0_0] : memref<16x6400xbf16, #tpu.memory_space<vmem>>, vector<16x6400xbf16>
    %c0_1 = arith.constant 0 : index
    %c0_2 = arith.constant 0 : index
    %1 = vector.load %arg2[%c0_1, %c0_2] : memref<6400x256xbf16, #tpu.memory_space<vmem>>, vector<6400x256xbf16>
    %cst = arith.constant dense<0.000000e+00> : vector<16x256xf32>
    %2 = tpu.matmul %0, %1, %cst {dimension_numbers = #tpu.dot_dimension_numbers<[1], [0], [0], [1], [0, 0, 1, 1], [], []>} : vector<16x6400xbf16>, vector<6400x256xbf16>, vector<16x256xf32> -> vector<16x256xf32>
    %c0_3 = arith.constant 0 : index
    %c0_4 = arith.constant 0 : index
    %3 = vector.load %arg3[%c0_3, %c0_4] : memref<1x256xf32, #tpu.memory_space<vmem>>, vector<1x256xf32>
    %4 = vector.broadcast %3 : vector<1x256xf32> to vector<16x256xf32>
    %5 = arith.addf %2, %4 : vector<16x256xf32>
    %cst_5 = arith.constant 0.000000e+00 : f32
    %6 = vector.broadcast %cst_5 : f32 to vector<16x256xf32>
    %7 = arith.maximumf %5, %6 : vector<16x256xf32>
    %8 = arith.truncf %7 : vector<16x256xf32> to vector<16x256xbf16>
    %c0_6 = arith.constant 0 : index
    %c0_7 = arith.constant 0 : index
    %9 = vector.load %arg4[%c0_6, %c0_7] : memref<16x256xbf16, #tpu.memory_space<vmem>>, vector<16x256xbf16>
    tpu.vector_store %arg4[%c0_6, %c0_7], %8 {strides = array<i32>} : memref<16x256xbf16, #tpu.memory_space<vmem>>, vector<16x256xbf16>,
    return
  }
  func.func @transform_0(%arg0: i32) -> (i32, i32) {
    %c0_i32 = arith.constant 0 : i32
    %c0_i32_0 = arith.constant 0 : i32
    %c0_i32_1 = arith.constant 0 : i32
    return %c0_i32, %c0_i32_0 : i32, i32
  }
  func.func @transform_1(%arg0: i32) -> (i32, i32) {
    %c0_i32 = arith.constant 0 : i32
    %c0_i32_0 = arith.constant 0 : i32
    return %c0_i32, %arg0 : i32, i32
  }
  func.func @transform_2(%arg0: i32) -> (i32, i32) {
    %c0_i32 = arith.constant 0 : i32
    %c0_i32_0 = arith.constant 0 : i32
    return %c0_i32, %arg0 : i32, i32
  }
  func.func @transform_3(%arg0: i32) -> (i32, i32) {
    %c0_i32 = arith.constant 0 : i32
    %c0_i32_0 = arith.constant 0 : i32
    return %c0_i32, %arg0 : i32, i32
  }
}

module attributes {stable_mosaic.version = 11 : i64} {
  func.func @_linear_kernel_noacc(%arg0: i32, %arg1: memref<16x256xbf16, #tpu.memory_space<vmem>>, %arg2: memref<256x256xbf16, #tpu.memory_space<vmem>>, %arg3: memref<1x256xf32, #tpu.memory_space<vmem>>, %arg4: memref<16x256xbf16, #tpu.memory_space<vmem>>) attributes {dimension_semantics = [#tpu.dimension_semantics<parallel>], iteration_bounds = array<i64: 1>, scalar_prefetch = 0 : i64, scratch_operands = 0 : i64, tpu.core_type = #tpu.core_type<tc>, window_params = [{pipeline_mode = #tpu.pipeline_mode<synchronous>, transform_indices = @transform_0, window_bounds = array<i64: 16, 256>}, {transform_indices = @transform_1, window_bounds = array<i64: 256, 256>}, {transform_indices = @transform_2, window_bounds = array<i64: 1, 256>}, {transform_indices = @transform_3, window_bounds = array<i64: 16, 256>}]} {
    %c0 = arith.constant 0 : index
    %c0_0 = arith.constant 0 : index
    %0 = vector.load %arg1[%c0, %c0_0] : memref<16x256xbf16, #tpu.memory_space<vmem>>, vector<16x256xbf16>
    %c0_1 = arith.constant 0 : index
    %c0_2 = arith.constant 0 : index
    %1 = vector.load %arg2[%c0_1, %c0_2] : memref<256x256xbf16, #tpu.memory_space<vmem>>, vector<256x256xbf16>
    %cst = arith.constant dense<0.000000e+00> : vector<16x256xf32>
    %2 = tpu.matmul %0, %1, %cst {dimension_numbers = #tpu.dot_dimension_numbers<[1], [0], [0], [1], [0, 0, 1, 1], [], []>} : vector<16x256xbf16>, vector<256x256xbf16>, vector<16x256xf32> -> vector<16x256xf32>
    %c0_3 = arith.constant 0 : index
    %c0_4 = arith.constant 0 : index
    %3 = vector.load %arg3[%c0_3, %c0_4] : memref<1x256xf32, #tpu.memory_space<vmem>>, vector<1x256xf32>
    %4 = vector.broadcast %3 : vector<1x256xf32> to vector<16x256xf32>
    %5 = arith.addf %2, %4 : vector<16x256xf32>
    %cst_5 = arith.constant 0.000000e+00 : f32
    %6 = vector.broadcast %cst_5 : f32 to vector<16x256xf32>
    %7 = arith.maximumf %5, %6 : vector<16x256xf32>
    %8 = arith.truncf %7 : vector<16x256xf32> to vector<16x256xbf16>
    %c0_6 = arith.constant 0 : index
    %c0_7 = arith.constant 0 : index
    %9 = vector.load %arg4[%c0_6, %c0_7] : memref<16x256xbf16, #tpu.memory_space<vmem>>, vector<16x256xbf16>
    tpu.vector_store %arg4[%c0_6, %c0_7], %8 {strides = array<i32>} : memref<16x256xbf16, #tpu.memory_space<vmem>>, vector<16x256xbf16>,
    return
  }
  func.func @transform_0(%arg0: i32) -> (i32, i32) {
    %c0_i32 = arith.constant 0 : i32
    %c0_i32_0 = arith.constant 0 : i32
    %c0_i32_1 = arith.constant 0 : i32
    return %c0_i32, %c0_i32_0 : i32, i32
  }
  func.func @transform_1(%arg0: i32) -> (i32, i32) {
    %c0_i32 = arith.constant 0 : i32
    %c0_i32_0 = arith.constant 0 : i32
    return %c0_i32, %arg0 : i32, i32
  }
  func.func @transform_2(%arg0: i32) -> (i32, i32) {
    %c0_i32 = arith.constant 0 : i32
    %c0_i32_0 = arith.constant 0 : i32
    return %c0_i32, %arg0 : i32, i32
  }
  func.func @transform_3(%arg0: i32) -> (i32, i32) {
    %c0_i32 = arith.constant 0 : i32
    %c0_i32_0 = arith.constant 0 : i32
    return %c0_i32, %arg0 : i32, i32
  }
}

module attributes {stable_mosaic.version = 11 : i64} {
  func.func @_linear_kernel_noacc(%arg0: i32, %arg1: memref<16x256xbf16, #tpu.memory_space<vmem>>, %arg2: memref<256x256xbf16, #tpu.memory_space<vmem>>, %arg3: memref<1x256xf32, #tpu.memory_space<vmem>>, %arg4: memref<16x256xf32, #tpu.memory_space<vmem>>) attributes {dimension_semantics = [#tpu.dimension_semantics<parallel>], iteration_bounds = array<i64: 1>, scalar_prefetch = 0 : i64, scratch_operands = 0 : i64, tpu.core_type = #tpu.core_type<tc>, window_params = [{pipeline_mode = #tpu.pipeline_mode<synchronous>, transform_indices = @transform_0, window_bounds = array<i64: 16, 256>}, {transform_indices = @transform_1, window_bounds = array<i64: 256, 256>}, {transform_indices = @transform_2, window_bounds = array<i64: 1, 256>}, {transform_indices = @transform_3, window_bounds = array<i64: 16, 256>}]} {
    %c0 = arith.constant 0 : index
    %c0_0 = arith.constant 0 : index
    %0 = vector.load %arg1[%c0, %c0_0] : memref<16x256xbf16, #tpu.memory_space<vmem>>, vector<16x256xbf16>
    %c0_1 = arith.constant 0 : index
    %c0_2 = arith.constant 0 : index
    %1 = vector.load %arg2[%c0_1, %c0_2] : memref<256x256xbf16, #tpu.memory_space<vmem>>, vector<256x256xbf16>
    %cst = arith.constant dense<0.000000e+00> : vector<16x256xf32>
    %2 = tpu.matmul %0, %1, %cst {dimension_numbers = #tpu.dot_dimension_numbers<[1], [0], [0], [1], [0, 0, 1, 1], [], []>} : vector<16x256xbf16>, vector<256x256xbf16>, vector<16x256xf32> -> vector<16x256xf32>
    %c0_3 = arith.constant 0 : index
    %c0_4 = arith.constant 0 : index
    %3 = vector.load %arg3[%c0_3, %c0_4] : memref<1x256xf32, #tpu.memory_space<vmem>>, vector<1x256xf32>
    %4 = vector.broadcast %3 : vector<1x256xf32> to vector<16x256xf32>
    %5 = arith.addf %2, %4 : vector<16x256xf32>
    %c0_5 = arith.constant 0 : index
    %c0_6 = arith.constant 0 : index
    %6 = vector.load %arg4[%c0_5, %c0_6] : memref<16x256xf32, #tpu.memory_space<vmem>>, vector<16x256xf32>
    tpu.vector_store %arg4[%c0_5, %c0_6], %5 {strides = array<i32>} : memref<16x256xf32, #tpu.memory_space<vmem>>, vector<16x256xf32>,
    return
  }
  func.func @transform_0(%arg0: i32) -> (i32, i32) {
    %c0_i32 = arith.constant 0 : i32
    %c0_i32_0 = arith.constant 0 : i32
    %c0_i32_1 = arith.constant 0 : i32
    return %c0_i32, %c0_i32_0 : i32, i32
  }
  func.func @transform_1(%arg0: i32) -> (i32, i32) {
    %c0_i32 = arith.constant 0 : i32
    %c0_i32_0 = arith.constant 0 : i32
    return %c0_i32, %arg0 : i32, i32
  }
  func.func @transform_2(%arg0: i32) -> (i32, i32) {
    %c0_i32 = arith.constant 0 : i32
    %c0_i32_0 = arith.constant 0 : i32
    return %c0_i32, %arg0 : i32, i32
  }
  func.func @transform_3(%arg0: i32) -> (i32, i32) {
    %c0_i32 = arith.constant 0 : i32
    %c0_i32_0 = arith.constant 0 : i32
    return %c0_i32, %arg0 : i32, i32
  }
}

</mosaic_0001>

<llo_original>
// kernel: _forward.4
$region0: #{_forward.4}
  #allocation0 [shape = 'u32[]', space=smem, size = 0x4, offset = 0x4, fixed_abs, tag = 'smem constant byte address 0x4 - core index']
  #allocation1 [shape = 'u32[144,128]{1,0:T(1,128)}', space=vmem, size = 0x12000, scoped, tag = 'internal scratch']
  %s0 = inlined_call_operand.vmem [shape: bf16[16,256], index: 0, kind: input, shape index: {}]
  %s1 = inlined_call_operand.vmem [shape: bf16[256,256], index: 1, kind: input, shape index: {}]
  %s2 = inlined_call_operand.vmem [shape: f32[1,256], index: 2, kind: input, shape index: {}]
  %s3 = inlined_call_operand.vmem [shape: bf16[16,256], index: 3, kind: output, shape index: {}]
  %s4 = sld [smem:[#allocation0]]
  $region22: #{_forward.4} parent=0
    _
  %s6 = ssub.s32 1, %s4
  %s7 = scalar_select 0, %s6, %s4
  // Predicated region
  $region2: #{_forward.4} parent=0 // pred_check
    _
  $region3: #{_forward.4} parent=0 // pred_check_branch
    %9 = sbr.rel (0) target = $region5
  $region4: #{_forward.4} parent=0 // pred_region
    _
  $region5: #{_forward.4} parent=0 // pred_fallthru
    _
  // Predicated region
  $region6: #{_forward.4} parent=0 // pred_check
    _
  $region7: #{_forward.4} parent=0 // pred_check_branch
    %11 = sbr.rel (0) target = $region9
  $region8: #{_forward.4} parent=0 // pred_region
    _
  $region9: #{_forward.4} parent=0 // pred_fallthru
    _
  // Predicated region
  $region10: #{_forward.4} parent=0 // pred_check
    _
  $region11: #{_forward.4} parent=0 // pred_check_branch
    %13 = sbr.rel (0) target = $region13
  $region12: #{_forward.4} parent=0 // pred_region
    _
  $region13: #{_forward.4} parent=0 // pred_fallthru
    _
  %v14 = vld [vmem:[%s0] sm:$0xff]
  %v15 = vld [vmem:[%s0 + $0x8] sm:$0xff]
  %v16 = vld [vmem:[%s1] sm:$0xff]
  %v17 = vld [vmem:[%s1 + $0x8] sm:$0xff]
  %v18 = vld [vmem:[%s1 + $0x10] sm:$0xff]
  %v19 = vld [vmem:[%s1 + $0x18] sm:$0xff]
  %v20 = vld [vmem:[%s1 + $0x20] sm:$0xff]
  %v21 = vld [vmem:[%s1 + $0x28] sm:$0xff]
  %v22 = vld [vmem:[%s1 + $0x30] sm:$0xff]
  %v23 = vld [vmem:[%s1 + $0x38] sm:$0xff]
  %v24 = vld [vmem:[%s1 + $0x40] sm:$0xff]
  %v25 = vld [vmem:[%s1 + $0x48] sm:$0xff]
  %v26 = vld [vmem:[%s1 + $0x50] sm:$0xff]
  %v27 = vld [vmem:[%s1 + $0x58] sm:$0xff]
  %v28 = vld [vmem:[%s1 + $0x60] sm:$0xff]
  %v29 = vld [vmem:[%s1 + $0x68] sm:$0xff]
  %v30 = vld [vmem:[%s1 + $0x70] sm:$0xff]
  %v31 = vld [vmem:[%s1 + $0x78] sm:$0xff]
  %v32 = vld [vmem:[%s1 + $0x80] sm:$0xff]
  %v33 = vld [vmem:[%s1 + $0x88] sm:$0xff]
  %v34 = vld [vmem:[%s1 + $0x90] sm:$0xff]
  %v35 = vld [vmem:[%s1 + $0x98] sm:$0xff]
  %v36 = vld [vmem:[%s1 + $0xa0] sm:$0xff]
  %v37 = vld [vmem:[%s1 + $0xa8] sm:$0xff]
  %v38 = vld [vmem:[%s1 + $0xb0] sm:$0xff]
  %v39 = vld [vmem:[%s1 + $0xb8] sm:$0xff]
  %v40 = vld [vmem:[%s1 + $0xc0] sm:$0xff]
  %v41 = vld [vmem:[%s1 + $0xc8] sm:$0xff]
  %v42 = vld [vmem:[%s1 + $0xd0] sm:$0xff]
  %v43 = vld [vmem:[%s1 + $0xd8] sm:$0xff]
  %v44 = vld [vmem:[%s1 + $0xe0] sm:$0xff]
  %v45 = vld [vmem:[%s1 + $0xe8] sm:$0xff]
  %v46 = vld [vmem:[%s1 + $0xf0] sm:$0xff]
  %v47 = vld [vmem:[%s1 + $0xf8] sm:$0xff]
  %v48 = vld [vmem:[%s2] sm:$0x3]
  %v50 = vlaneseq
  %v51 = vshrl.u32 %v50, 7
  %v52 = vsub.s32 0, %v51
  %v53 = vrot.slane %v48, %v52
  %v54 = vlaneseq
  %v55 = vshrl.u32 %v54, 7
  %v56 = vsub.s32 1, %v55
  %v57 = vrot.slane %v48, %v56
  %v62 = vunpack.c.l.b16 %v14
  %v63 = vunpack.c.h.b16 %v14
  %v64 = vunpack.c.l.b16 %v15
  %v65 = vunpack.c.h.b16 %v15
  %v66 = vpack.c.b16 %v64, %v62
  %v67 = vpack.c.b16 %v65, %v63
  %v102 = vunpack.c.l.b16 %v16
  %v103 = vunpack.c.h.b16 %v16
  %v104 = vunpack.c.l.b16 %v17
  %v105 = vunpack.c.h.b16 %v17
  %v106 = vunpack.c.l.b16 %v18
  %v107 = vunpack.c.h.b16 %v18
  %v108 = vunpack.c.l.b16 %v19
  %v109 = vunpack.c.h.b16 %v19
  %v110 = vunpack.c.l.b16 %v20
  %v111 = vunpack.c.h.b16 %v20
  %v112 = vunpack.c.l.b16 %v21
  %v113 = vunpack.c.h.b16 %v21
  %v114 = vunpack.c.l.b16 %v22
  %v115 = vunpack.c.h.b16 %v22
  %v116 = vunpack.c.l.b16 %v23
  %v117 = vunpack.c.h.b16 %v23
  %v118 = vunpack.c.l.b16 %v24
  %v119 = vunpack.c.h.b16 %v24
  %v120 = vunpack.c.l.b16 %v25
  %v121 = vunpack.c.h.b16 %v25
  %v122 = vunpack.c.l.b16 %v26
  %v123 = vunpack.c.h.b16 %v26
  %v124 = vunpack.c.l.b16 %v27
  %v125 = vunpack.c.h.b16 %v27
  %v126 = vunpack.c.l.b16 %v28
  %v127 = vunpack.c.h.b16 %v28
  %v128 = vunpack.c.l.b16 %v29
  %v129 = vunpack.c.h.b16 %v29
  %v130 = vunpack.c.l.b16 %v30
  %v131 = vunpack.c.h.b16 %v30
  %v132 = vunpack.c.l.b16 %v31
  %v133 = vunpack.c.h.b16 %v31
  %v134 = vunpack.c.l.b16 %v32
  %v135 = vunpack.c.h.b16 %v32
  %v136 = vunpack.c.l.b16 %v33
  %v137 = vunpack.c.h.b16 %v33
  %v138 = vunpack.c.l.b16 %v34
  %v139 = vunpack.c.h.b16 %v34
  %v140 = vunpack.c.l.b16 %v35
  %v141 = vunpack.c.h.b16 %v35
  %v142 = vunpack.c.l.b16 %v36
  %v143 = vunpack.c.h.b16 %v36
  %v144 = vunpack.c.l.b16 %v37
  %v145 = vunpack.c.h.b16 %v37
  %v146 = vunpack.c.l.b16 %v38
  %v147 = vunpack.c.h.b16 %v38
  %v148 = vunpack.c.l.b16 %v39
  %v149 = vunpack.c.h.b16 %v39
  %v150 = vunpack.c.l.b16 %v40
  %v151 = vunpack.c.h.b16 %v40
  %v152 = vunpack.c.l.b16 %v41
  %v153 = vunpack.c.h.b16 %v41
  %v154 = vunpack.c.l.b16 %v42
  %v155 = vunpack.c.h.b16 %v42
  %v156 = vunpack.c.l.b16 %v43
  %v157 = vunpack.c.h.b16 %v43
  %v158 = vunpack.c.l.b16 %v44
  %v159 = vunpack.c.h.b16 %v44
  %v160 = vunpack.c.l.b16 %v45
  %v161 = vunpack.c.h.b16 %v45
  %v162 = vunpack.c.l.b16 %v46
  %v163 = vunpack.c.h.b16 %v46
  %v164 = vunpack.c.l.b16 %v47
  %v165 = vunpack.c.h.b16 %v47
  %v166 = vpack.c.b16 %v104, %v102
  %v167 = vpack.c.b16 %v105, %v103
  %v168 = vpack.c.b16 %v108, %v106
  %v169 = vpack.c.b16 %v109, %v107
  %v170 = vpack.c.b16 %v112, %v110
  %v171 = vpack.c.b16 %v113, %v111
  %v172 = vpack.c.b16 %v116, %v114
  %v173 = vpack.c.b16 %v117, %v115
  %v174 = vpack.c.b16 %v120, %v118
  %v175 = vpack.c.b16 %v121, %v119
  %v176 = vpack.c.b16 %v124, %v122
  %v177 = vpack.c.b16 %v125, %v123
  %v178 = vpack.c.b16 %v128, %v126
  %v179 = vpack.c.b16 %v129, %v127
  %v180 = vpack.c.b16 %v132, %v130
  %v181 = vpack.c.b16 %v133, %v131
  %v182 = vpack.c.b16 %v136, %v134
  %v183 = vpack.c.b16 %v137, %v135
  %v184 = vpack.c.b16 %v140, %v138
  %v185 = vpack.c.b16 %v141, %v139
  %v186 = vpack.c.b16 %v144, %v142
  %v187 = vpack.c.b16 %v145, %v143
  %v188 = vpack.c.b16 %v148, %v146
  %v189 = vpack.c.b16 %v149, %v147
  %v190 = vpack.c.b16 %v152, %v150
  %v191 = vpack.c.b16 %v153, %v151
  %v192 = vpack.c.b16 %v156, %v154
  %v193 = vpack.c.b16 %v157, %v155
  %v194 = vpack.c.b16 %v160, %v158
  %v195 = vpack.c.b16 %v161, %v159
  %v196 = vpack.c.b16 %v164, %v162
  %v197 = vpack.c.b16 %v165, %v163
  %230 = vmatprep.subr.bf16.mxu0 %v181
  %231 = vmatpush1.bf16.msra.mxu0 %v180
  %232 = vmatprep.subr.bf16.mxu0 %v179
  %233 = vmatpush1.bf16.msra.mxu0 %v178
  %234 = vmatprep.subr.bf16.mxu0 %v177
  %235 = vmatpush1.bf16.msra.mxu0 %v176
  %236 = vmatprep.subr.bf16.mxu0 %v175
  %237 = vmatpush1.bf16.msra.mxu0 %v174
  %238 = vmatprep.subr.bf16.mxu0 %v173
  %239 = vmatpush1.bf16.msra.mxu0 %v172
  %240 = vmatprep.subr.bf16.mxu0 %v171
  %241 = vmatpush1.bf16.msra.mxu0 %v170
  %242 = vmatprep.subr.bf16.mxu0 %v169
  %243 = vmatpush1.bf16.msra.mxu0 %v168
  %244 = vmatprep.subr.bf16.mxu0 %v167
  %245 = vmatpush1.bf16.msra.mxu0 %v166
  %246 = vmatprep.subr.bf16.mxu0 %v197
  %247 = vmatpush2.bf16.msra.mxu0 %v196
  %248 = vmatprep.subr.bf16.mxu0 %v195
  %249 = vmatpush2.bf16.msra.mxu0 %v194
  %250 = vmatprep.subr.bf16.mxu0 %v193
  %251 = vmatpush2.bf16.msra.mxu0 %v192
  %252 = vmatprep.subr.bf16.mxu0 %v191
  %253 = vmatpush2.bf16.msra.mxu0 %v190
  %254 = vmatprep.subr.bf16.mxu0 %v189
  %255 = vmatpush2.bf16.msra.mxu0 %v188
  %256 = vmatprep.subr.bf16.mxu0 %v187
  %257 = vmatpush2.bf16.msra.mxu0 %v186
  %258 = vmatprep.subr.bf16.mxu0 %v185
  %259 = vmatpush2.bf16.msra.mxu0 %v184
  %260 = vmatprep.subr.bf16.mxu0 %v183
  %261 = vmatpush2.bf16.msra.mxu0 %v182
  %262 = vmatprep.mubr.bf16.mxu0 %v67
  %263 = vmatmul.mubr.bf16.gmra.mxu0 %v66
  %v264 = vpop.f32.mrf.mxu0
  %v265 = vadd.f32 %v53, %v264
  %v266 = vpop.f32.mrf.mxu0
  %v267 = vadd.f32 %v57, %v266
  %v268 = vpop.f32.mrf.mxu0
  %v269 = vadd.f32 %v53, %v268
  %v270 = vpop.f32.mrf.mxu0
  %v271 = vadd.f32 %v57, %v270
  %272 = vdwg.mxu0
  %v273 = vmax.f32 %v265, 0.0
  %v274 = vmax.f32 %v267, 0.0
  %v275 = vmax.f32 %v269, 0.0
  %v276 = vmax.f32 %v271, 0.0
  %v277 = vpack.c.bf16 %v275, %v273
  %v278 = vpack.c.bf16 %v276, %v274
  %v281 = vunpack.c.l.b16 %v277
  %v282 = vunpack.c.l.b16 %v278
  %v283 = vunpack.c.h.b16 %v277
  %v284 = vunpack.c.h.b16 %v278
  %v285 = vpack.c.b16 %v282, %v281
  %v286 = vpack.c.b16 %v284, %v283
  %289 = vst [vmem:[%s3] sm:$0xff] %v285
  %290 = vst [vmem:[%s3 + $0x8] sm:$0xff] %v286
  // Predicated region
  $region14: #{_forward.4} parent=0 // pred_check
    _
  $region15: #{_forward.4} parent=0 // pred_check_branch
    %292 = sbr.rel (0) target = $region17
  $region16: #{_forward.4} parent=0 // pred_region
    _
  $region17: #{_forward.4} parent=0 // pred_fallthru
    _
  // Predicated region
  $region18: #{_forward.4} parent=0 // pred_check
    _
  $region19: #{_forward.4} parent=0 // pred_check_branch
    %294 = sbr.rel (0) target = $region21
  $region20: #{_forward.4} parent=0 // pred_region
    _
  $region21: #{_forward.4} parent=0 // pred_fallthru
    _

// kernel: _forward.5
$region0: #{_forward.5}
  #allocation0 [shape = 'u32[]', space=smem, size = 0x4, offset = 0x4, fixed_abs, tag = 'smem constant byte address 0x4 - core index']
  #allocation1 [shape = 'u32[144,128]{1,0:T(1,128)}', space=vmem, size = 0x12000, scoped, tag = 'internal scratch']
  %s0 = inlined_call_operand.vmem [shape: bf16[16,256], index: 0, kind: input, shape index: {}]
  %s1 = inlined_call_operand.vmem [shape: bf16[256,256], index: 1, kind: input, shape index: {}]
  %s2 = inlined_call_operand.vmem [shape: f32[1,256], index: 2, kind: input, shape index: {}]
  %s3 = inlined_call_operand.vmem [shape: f32[16,256], index: 3, kind: output, shape index: {}]
  %s4 = sld [smem:[#allocation0]]
  $region22: #{_forward.5} parent=0
    _
  %s6 = ssub.s32 1, %s4
  %s7 = scalar_select 0, %s6, %s4
  // Predicated region
  $region2: #{_forward.5} parent=0 // pred_check
    _
  $region3: #{_forward.5} parent=0 // pred_check_branch
    %9 = sbr.rel (0) target = $region5
  $region4: #{_forward.5} parent=0 // pred_region
    _
  $region5: #{_forward.5} parent=0 // pred_fallthru
    _
  // Predicated region
  $region6: #{_forward.5} parent=0 // pred_check
    _
  $region7: #{_forward.5} parent=0 // pred_check_branch
    %11 = sbr.rel (0) target = $region9
  $region8: #{_forward.5} parent=0 // pred_region
    _
  $region9: #{_forward.5} parent=0 // pred_fallthru
    _
  // Predicated region
  $region10: #{_forward.5} parent=0 // pred_check
    _
  $region11: #{_forward.5} parent=0 // pred_check_branch
    %13 = sbr.rel (0) target = $region13
  $region12: #{_forward.5} parent=0 // pred_region
    _
  $region13: #{_forward.5} parent=0 // pred_fallthru
    _
  %v14 = vld [vmem:[%s0] sm:$0xff]
  %v15 = vld [vmem:[%s0 + $0x8] sm:$0xff]
  %v16 = vld [vmem:[%s1] sm:$0xff]
  %v17 = vld [vmem:[%s1 + $0x8] sm:$0xff]
  %v18 = vld [vmem:[%s1 + $0x10] sm:$0xff]
  %v19 = vld [vmem:[%s1 + $0x18] sm:$0xff]
  %v20 = vld [vmem:[%s1 + $0x20] sm:$0xff]
  %v21 = vld [vmem:[%s1 + $0x28] sm:$0xff]
  %v22 = vld [vmem:[%s1 + $0x30] sm:$0xff]
  %v23 = vld [vmem:[%s1 + $0x38] sm:$0xff]
  %v24 = vld [vmem:[%s1 + $0x40] sm:$0xff]
  %v25 = vld [vmem:[%s1 + $0x48] sm:$0xff]
  %v26 = vld [vmem:[%s1 + $0x50] sm:$0xff]
  %v27 = vld [vmem:[%s1 + $0x58] sm:$0xff]
  %v28 = vld [vmem:[%s1 + $0x60] sm:$0xff]
  %v29 = vld [vmem:[%s1 + $0x68] sm:$0xff]
  %v30 = vld [vmem:[%s1 + $0x70] sm:$0xff]
  %v31 = vld [vmem:[%s1 + $0x78] sm:$0xff]
  %v32 = vld [vmem:[%s1 + $0x80] sm:$0xff]
  %v33 = vld [vmem:[%s1 + $0x88] sm:$0xff]
  %v34 = vld [vmem:[%s1 + $0x90] sm:$0xff]
  %v35 = vld [vmem:[%s1 + $0x98] sm:$0xff]
  %v36 = vld [vmem:[%s1 + $0xa0] sm:$0xff]
  %v37 = vld [vmem:[%s1 + $0xa8] sm:$0xff]
  %v38 = vld [vmem:[%s1 + $0xb0] sm:$0xff]
  %v39 = vld [vmem:[%s1 + $0xb8] sm:$0xff]
  %v40 = vld [vmem:[%s1 + $0xc0] sm:$0xff]
  %v41 = vld [vmem:[%s1 + $0xc8] sm:$0xff]
  %v42 = vld [vmem:[%s1 + $0xd0] sm:$0xff]
  %v43 = vld [vmem:[%s1 + $0xd8] sm:$0xff]
  %v44 = vld [vmem:[%s1 + $0xe0] sm:$0xff]
  %v45 = vld [vmem:[%s1 + $0xe8] sm:$0xff]
  %v46 = vld [vmem:[%s1 + $0xf0] sm:$0xff]
  %v47 = vld [vmem:[%s1 + $0xf8] sm:$0xff]
  %v48 = vld [vmem:[%s2] sm:$0x3]
  %v50 = vlaneseq
  %v51 = vshrl.u32 %v50, 7
  %v52 = vsub.s32 0, %v51
  %v53 = vrot.slane %v48, %v52
  %v54 = vlaneseq
  %v55 = vshrl.u32 %v54, 7
  %v56 = vsub.s32 1, %v55
  %v57 = vrot.slane %v48, %v56
  %v62 = vunpack.c.l.b16 %v14
  %v63 = vunpack.c.h.b16 %v14
  %v64 = vunpack.c.l.b16 %v15
  %v65 = vunpack.c.h.b16 %v15
  %v66 = vpack.c.b16 %v64, %v62
  %v67 = vpack.c.b16 %v65, %v63
  %v102 = vunpack.c.l.b16 %v16
  %v103 = vunpack.c.h.b16 %v16
  %v104 = vunpack.c.l.b16 %v17
  %v105 = vunpack.c.h.b16 %v17
  %v106 = vunpack.c.l.b16 %v18
  %v107 = vunpack.c.h.b16 %v18
  %v108 = vunpack.c.l.b16 %v19
  %v109 = vunpack.c.h.b16 %v19
  %v110 = vunpack.c.l.b16 %v20
  %v111 = vunpack.c.h.b16 %v20
  %v112 = vunpack.c.l.b16 %v21
  %v113 = vunpack.c.h.b16 %v21
  %v114 = vunpack.c.l.b16 %v22
  %v115 = vunpack.c.h.b16 %v22
  %v116 = vunpack.c.l.b16 %v23
  %v117 = vunpack.c.h.b16 %v23
  %v118 = vunpack.c.l.b16 %v24
  %v119 = vunpack.c.h.b16 %v24
  %v120 = vunpack.c.l.b16 %v25
  %v121 = vunpack.c.h.b16 %v25
  %v122 = vunpack.c.l.b16 %v26
  %v123 = vunpack.c.h.b16 %v26
  %v124 = vunpack.c.l.b16 %v27
  %v125 = vunpack.c.h.b16 %v27
  %v126 = vunpack.c.l.b16 %v28
  %v127 = vunpack.c.h.b16 %v28
  %v128 = vunpack.c.l.b16 %v29
  %v129 = vunpack.c.h.b16 %v29
  %v130 = vunpack.c.l.b16 %v30
  %v131 = vunpack.c.h.b16 %v30
  %v132 = vunpack.c.l.b16 %v31
  %v133 = vunpack.c.h.b16 %v31
  %v134 = vunpack.c.l.b16 %v32
  %v135 = vunpack.c.h.b16 %v32
  %v136 = vunpack.c.l.b16 %v33
  %v137 = vunpack.c.h.b16 %v33
  %v138 = vunpack.c.l.b16 %v34
  %v139 = vunpack.c.h.b16 %v34
  %v140 = vunpack.c.l.b16 %v35
  %v141 = vunpack.c.h.b16 %v35
  %v142 = vunpack.c.l.b16 %v36
  %v143 = vunpack.c.h.b16 %v36
  %v144 = vunpack.c.l.b16 %v37
  %v145 = vunpack.c.h.b16 %v37
  %v146 = vunpack.c.l.b16 %v38
  %v147 = vunpack.c.h.b16 %v38
  %v148 = vunpack.c.l.b16 %v39
  %v149 = vunpack.c.h.b16 %v39
  %v150 = vunpack.c.l.b16 %v40
  %v151 = vunpack.c.h.b16 %v40
  %v152 = vunpack.c.l.b16 %v41
  %v153 = vunpack.c.h.b16 %v41
  %v154 = vunpack.c.l.b16 %v42
  %v155 = vunpack.c.h.b16 %v42
  %v156 = vunpack.c.l.b16 %v43
  %v157 = vunpack.c.h.b16 %v43
  %v158 = vunpack.c.l.b16 %v44
  %v159 = vunpack.c.h.b16 %v44
  %v160 = vunpack.c.l.b16 %v45
  %v161 = vunpack.c.h.b16 %v45
  %v162 = vunpack.c.l.b16 %v46
  %v163 = vunpack.c.h.b16 %v46
  %v164 = vunpack.c.l.b16 %v47
  %v165 = vunpack.c.h.b16 %v47
  %v166 = vpack.c.b16 %v104, %v102
  %v167 = vpack.c.b16 %v105, %v103
  %v168 = vpack.c.b16 %v108, %v106
  %v169 = vpack.c.b16 %v109, %v107
  %v170 = vpack.c.b16 %v112, %v110
  %v171 = vpack.c.b16 %v113, %v111
  %v172 = vpack.c.b16 %v116, %v114
  %v173 = vpack.c.b16 %v117, %v115
  %v174 = vpack.c.b16 %v120, %v118
  %v175 = vpack.c.b16 %v121, %v119
  %v176 = vpack.c.b16 %v124, %v122
  %v177 = vpack.c.b16 %v125, %v123
  %v178 = vpack.c.b16 %v128, %v126
  %v179 = vpack.c.b16 %v129, %v127
  %v180 = vpack.c.b16 %v132, %v130
  %v181 = vpack.c.b16 %v133, %v131
  %v182 = vpack.c.b16 %v136, %v134
  %v183 = vpack.c.b16 %v137, %v135
  %v184 = vpack.c.b16 %v140, %v138
  %v185 = vpack.c.b16 %v141, %v139
  %v186 = vpack.c.b16 %v144, %v142
  %v187 = vpack.c.b16 %v145, %v143
  %v188 = vpack.c.b16 %v148, %v146
  %v189 = vpack.c.b16 %v149, %v147
  %v190 = vpack.c.b16 %v152, %v150
  %v191 = vpack.c.b16 %v153, %v151
  %v192 = vpack.c.b16 %v156, %v154
  %v193 = vpack.c.b16 %v157, %v155
  %v194 = vpack.c.b16 %v160, %v158
  %v195 = vpack.c.b16 %v161, %v159
  %v196 = vpack.c.b16 %v164, %v162
  %v197 = vpack.c.b16 %v165, %v163
  %230 = vmatprep.subr.bf16.mxu0 %v181
  %231 = vmatpush1.bf16.msra.mxu0 %v180
  %232 = vmatprep.subr.bf16.mxu0 %v179
  %233 = vmatpush1.bf16.msra.mxu0 %v178
  %234 = vmatprep.subr.bf16.mxu0 %v177
  %235 = vmatpush1.bf16.msra.mxu0 %v176
  %236 = vmatprep.subr.bf16.mxu0 %v175
  %237 = vmatpush1.bf16.msra.mxu0 %v174
  %238 = vmatprep.subr.bf16.mxu0 %v173
  %239 = vmatpush1.bf16.msra.mxu0 %v172
  %240 = vmatprep.subr.bf16.mxu0 %v171
  %241 = vmatpush1.bf16.msra.mxu0 %v170
  %242 = vmatprep.subr.bf16.mxu0 %v169
  %243 = vmatpush1.bf16.msra.mxu0 %v168
  %244 = vmatprep.subr.bf16.mxu0 %v167
  %245 = vmatpush1.bf16.msra.mxu0 %v166
  %246 = vmatprep.subr.bf16.mxu0 %v197
  %247 = vmatpush2.bf16.msra.mxu0 %v196
  %248 = vmatprep.subr.bf16.mxu0 %v195
  %249 = vmatpush2.bf16.msra.mxu0 %v194
  %250 = vmatprep.subr.bf16.mxu0 %v193
  %251 = vmatpush2.bf16.msra.mxu0 %v192
  %252 = vmatprep.subr.bf16.mxu0 %v191
  %253 = vmatpush2.bf16.msra.mxu0 %v190
  %254 = vmatprep.subr.bf16.mxu0 %v189
  %255 = vmatpush2.bf16.msra.mxu0 %v188
  %256 = vmatprep.subr.bf16.mxu0 %v187
  %257 = vmatpush2.bf16.msra.mxu0 %v186
  %258 = vmatprep.subr.bf16.mxu0 %v185
  %259 = vmatpush2.bf16.msra.mxu0 %v184
  %260 = vmatprep.subr.bf16.mxu0 %v183
  %261 = vmatpush2.bf16.msra.mxu0 %v182
  %262 = vmatprep.mubr.bf16.mxu0 %v67
  %263 = vmatmul.mubr.bf16.gmra.mxu0 %v66
  %v264 = vpop.f32.mrf.mxu0
  %v265 = vadd.f32 %v53, %v264
  %v266 = vpop.f32.mrf.mxu0
  %v267 = vadd.f32 %v57, %v266
  %v268 = vpop.f32.mrf.mxu0
  %v269 = vadd.f32 %v53, %v268
  %v270 = vpop.f32.mrf.mxu0
  %v271 = vadd.f32 %v57, %v270
  %272 = vdwg.mxu0
  %273 = vst [vmem:[%s3] sm:$0xff] %v265
  %274 = vst [vmem:[%s3 + $0x8] sm:$0xff] %v267
  %275 = vst [vmem:[%s3 + $0x10] sm:$0xff] %v269
  %276 = vst [vmem:[%s3 + $0x18] sm:$0xff] %v271
  // Predicated region
  $region14: #{_forward.5} parent=0 // pred_check
    _
  $region15: #{_forward.5} parent=0 // pred_check_branch
    %278 = sbr.rel (0) target = $region17
  $region16: #{_forward.5} parent=0 // pred_region
    _
  $region17: #{_forward.5} parent=0 // pred_fallthru
    _
  // Predicated region
  $region18: #{_forward.5} parent=0 // pred_check
    _
  $region19: #{_forward.5} parent=0 // pred_check_branch
    %280 = sbr.rel (0) target = $region21
  $region20: #{_forward.5} parent=0 // pred_region
    _
  $region21: #{_forward.5} parent=0 // pred_fallthru
    _

// kernel: _forward.3
$region0: #{_forward.3}
  #allocation0 [shape = 'u32[]', space=smem, size = 0x4, offset = 0x4, fixed_abs, tag = 'smem constant byte address 0x4 - core index']
  #allocation1 [shape = 'u32[144,128]{1,0:T(1,128)}', space=vmem, size = 0x12000, scoped, tag = 'internal scratch']
  %s0 = inlined_call_operand.vmem [shape: bf16[16,6400], index: 0, kind: input, shape index: {}]
  %s1 = inlined_call_operand.hbm [shape: bf16[6400,256], index: 1, kind: input, shape index: {}]
  %s2 = inlined_call_operand.hbm [shape: f32[1,256], index: 2, kind: input, shape index: {}]
  %s3 = inlined_call_operand.vmem [shape: bf16[16,256], index: 3, kind: output, shape index: {}]
  %s4 = sld [smem:[#allocation0]]
  $region30: #{_forward.3} parent=0
    _
  %s6 = ssub.s32 1, %s4
  %s7 = scalar_select 0, %s6, %s4
  $region1: #{_forward.3} parent=0
    #allocation2 [shape = 'u8[3276800]{0}', space=vmem, size = 0x320000, scoped, tag = 'input window, operand 1, single buffered']
    #allocation3 [shape = 's32[1]{0}', space=sflag, size = 0x4, scoped, tag = 'scoped memory for _forward.3']
    #allocation4 [shape = 'u8[1024]{0}', space=vmem, size = 0x400, scoped, tag = 'input window, operand 2, single buffered']
    #allocation5 [shape = 's32[1]{0}', space=sflag, size = 0x4, scoped, tag = 'scoped memory for _forward.3']
    %8 = vsyncpa [#allocation3], 0
    %9 = vsyncpa [#allocation5], 0
    // Predicated region
    $region2: #{_forward.3} parent=1 // pred_check
      _
    $region3: #{_forward.3} parent=1 // pred_check_branch
      %11 = sbr.rel (0) target = $region5
    $region4: #{_forward.3} parent=1 // pred_region
      _
    $region5: #{_forward.3} parent=1 // pred_fallthru
      _
    // Predicated region
    $region6: #{_forward.3} parent=1 // pred_check
      _
    $region7: #{_forward.3} parent=1 // pred_check_branch
      %13 = sbr.rel (0) target = $region9
    $region8: #{_forward.3} parent=1 // pred_region
      %s15 = ssub.s32 102400, 102400
      %16 = vsyncadd [#allocation3], %s15
      %s17 = sshll.u32 [#allocation2], 4
      %s18 = int_to_ptr.vmem [resolvable:$true] %s17
      %23 = dma.hbm_to_vmem [thread:$0]  %s1, 102400, %s18, [#allocation3], 128, 128, 8
    $region9: #{_forward.3} parent=1 // pred_fallthru
      _
    // Predicated region
    $region10: #{_forward.3} parent=1 // pred_check
      _
    $region11: #{_forward.3} parent=1 // pred_check_branch
      %25 = sbr.rel (0) target = $region13
    $region12: #{_forward.3} parent=1 // pred_region
      %s27 = ssub.s32 32, 32
      %28 = vsyncadd [#allocation5], %s27
      %s30 = sshll.u32 [#allocation4], 4
      %s31 = int_to_ptr.vmem [resolvable:$true] %s30
      %33 = dma.hbm_to_vmem [thread:$0]  %s2, 32, %s31, [#allocation5]
    $region13: #{_forward.3} parent=1 // pred_fallthru
      _
    // Predicated region
    $region14: #{_forward.3} parent=1 // pred_check
      _
    $region15: #{_forward.3} parent=1 // pred_check_branch
      %35 = sbr.rel (0) target = $region17
    $region16: #{_forward.3} parent=1 // pred_region
      %36 = dma.done [#allocation3], 102400
    $region17: #{_forward.3} parent=1 // pred_fallthru
      _
    // Predicated region
    $region18: #{_forward.3} parent=1 // pred_check
      _
    $region19: #{_forward.3} parent=1 // pred_check_branch
      %38 = sbr.rel (0) target = $region21
    $region20: #{_forward.3} parent=1 // pred_region
      %39 = dma.done [#allocation5], 32
    $region21: #{_forward.3} parent=1 // pred_fallthru
      _
    %v40 = vld [vmem:[%s0] sm:$0xff]
    %v41 = vld [vmem:[%s0 + $0x8] sm:$0xff]
    %v42 = vld [vmem:[%s0 + $0x10] sm:$0xff]
    %v43 = vld [vmem:[%s0 + $0x18] sm:$0xff]
    %v44 = vld [vmem:[%s0 + $0x20] sm:$0xff]
    %v45 = vld [vmem:[%s0 + $0x28] sm:$0xff]
    %v46 = vld [vmem:[%s0 + $0x30] sm:$0xff]
    %v47 = vld [vmem:[%s0 + $0x38] sm:$0xff]
    %v48 = vld [vmem:[%s0 + $0x40] sm:$0xff]
    %v49 = vld [vmem:[%s0 + $0x48] sm:$0xff]
    %v50 = vld [vmem:[%s0 + $0x50] sm:$0xff]
    %v51 = vld [vmem:[%s0 + $0x58] sm:$0xff]
    %v52 = vld [vmem:[%s0 + $0x60] sm:$0xff]
    %v53 = vld [vmem:[%s0 + $0x68] sm:$0xff]
    %v54 = vld [vmem:[%s0 + $0x70] sm:$0xff]
    %v55 = vld [vmem:[%s0 + $0x78] sm:$0xff]
    %v56 = vld [vmem:[%s0 + $0x80] sm:$0xff]
    %v57 = vld [vmem:[%s0 + $0x88] sm:$0xff]
    %v58 = vld [vmem:[%s0 + $0x90] sm:$0xff]
    %v59 = vld [vmem:[%s0 + $0x98] sm:$0xff]
    %v60 = vld [vmem:[%s0 + $0xa0] sm:$0xff]
    %v61 = vld [vmem:[%s0 + $0xa8] sm:$0xff]
    %v62 = vld [vmem:[%s0 + $0xb0] sm:$0xff]
    %v63 = vld [vmem:[%s0 + $0xb8] sm:$0xff]
    %v64 = vld [vmem:[%s0 + $0xc0] sm:$0xff]
    %v65 = vld [vmem:[%s0 + $0xc8] sm:$0xff]
    %v66 = vld [vmem:[%s0 + $0xd0] sm:$0xff]
    %v67 = vld [vmem:[%s0 + $0xd8] sm:$0xff]
    %v68 = vld [vmem:[%s0 + $0xe0] sm:$0xff]
    %v69 = vld [vmem:[%s0 + $0xe8] sm:$0xff]
    %v70 = vld [vmem:[%s0 + $0xf0] sm:$0xff]
    %v71 = vld [vmem:[%s0 + $0xf8] sm:$0xff]
    %v72 = vld [vmem:[%s0 + $0x100] sm:$0xff]
    %v73 = vld [vmem:[%s0 + $0x108] sm:$0xff]
    %v74 = vld [vmem:[%s0 + $0x110] sm:$0xff]
    %v75 = vld [vmem:[%s0 + $0x118] sm:$0xff]
    %v76 = vld [vmem:[%s0 + $0x120] sm:$0xff]
    %v77 = vld [vmem:[%s0 + $0x128] sm:$0xff]
    %v78 = vld [vmem:[%s0 + $0x130] sm:$0xff]
    %v79 = vld [vmem:[%s0 + $0x138] sm:$0xff]
    %v80 = vld [vmem:[%s0 + $0x140] sm:$0xff]
    %v81 = vld [vmem:[%s0 + $0x148] sm:$0xff]
    %v82 = vld [vmem:[%s0 + $0x150] sm:$0xff]
    %v83 = vld [vmem:[%s0 + $0x158] sm:$0xff]
    %v84 = vld [vmem:[%s0 + $0x160] sm:$0xff]
    %v85 = vld [vmem:[%s0 + $0x168] sm:$0xff]
    %v86 = vld [vmem:[%s0 + $0x170] sm:$0xff]
    %v87 = vld [vmem:[%s0 + $0x178] sm:$0xff]
    %v88 = vld [vmem:[%s0 + $0x180] sm:$0xff]
    %v89 = vld [vmem:[%s0 + $0x188] sm:$0xff]
    %v90 = vld [vmem:[#allocation2] sm:$0xff]
    %v91 = vld [vmem:[#allocation2 + $0x8] sm:$0xff]
    %v92 = vld [vmem:[#allocation2 + $0x10] sm:$0xff]
    %v93 = vld [vmem:[#allocation2 + $0x18] sm:$0xff]
    %v94 = vld [vmem:[#allocation2 + $0x20] sm:$0xff]
    %v95 = vld [vmem:[#allocation2 + $0x28] sm:$0xff]
    %v96 = vld [vmem:[#allocation2 + $0x30] sm:$0xff]
    %v97 = vld [vmem:[#allocation2 + $0x38] sm:$0xff]
    %v98 = vld [vmem:[#allocation2 + $0x40] sm:$0xff]
    %v99 = vld [vmem:[#allocation2 + $0x48] sm:$0xff]
    %v100 = vld [vmem:[#allocation2 + $0x50] sm:$0xff]
    %v101 = vld [vmem:[#allocation2 + $0x58] sm:$0xff]
    %v102 = vld [vmem:[#allocation2 + $0x60] sm:$0xff]
    %v103 = vld [vmem:[#allocation2 + $0x68] sm:$0xff]
    %v104 = vld [vmem:[#allocation2 + $0x70] sm:$0xff]
    %v105 = vld [vmem:[#allocation2 + $0x78] sm:$0xff]
    %v106 = vld [vmem:[#allocation2 + $0x80] sm:$0xff]
    %v107 = vld [vmem:[#allocation2 + $0x88] sm:$0xff]
    %v108 = vld [vmem:[#allocation2 + $0x90] sm:$0xff]
    %v109 = vld [vmem:[#allocation2 + $0x98] sm:$0xff]
    %v110 = vld [vmem:[#allocation2 + $0xa0] sm:$0xff]
    %v111 = vld [vmem:[#allocation2 + $0xa8] sm:$0xff]
    %v112 = vld [vmem:[#allocation2 + $0xb0] sm:$0xff]
    %v113 = vld [vmem:[#allocation2 + $0xb8] sm:$0xff]
    %v114 = vld [vmem:[#allocation2 + $0xc0] sm:$0xff]
    %v115 = vld [vmem:[#allocation2 + $0xc8] sm:$0xff]
    %v116 = vld [vmem:[#allocation2 + $0xd0] sm:$0xff]
    %v117 = vld [vmem:[#allocation2 + $0xd8] sm:$0xff]
    %v118 = vld [vmem:[#allocation2 + $0xe0] sm:$0xff]
    %v119 = vld [vmem:[#allocation2 + $0xe8] sm:$0xff]
    %v120 = vld [vmem:[#allocation2 + $0xf0] sm:$0xff]
    %v121 = vld [vmem:[#allocation2 + $0xf8] sm:$0xff]
    %v122 = vld [vmem:[#allocation2 + $0x100] sm:$0xff]
    %v123 = vld [vmem:[#allocation2 + $0x108] sm:$0xff]
    %v124 = vld [vmem:[#allocation2 + $0x110] sm:$0xff]
    %v125 = vld [vmem:[#allocation2 + $0x118] sm:$0xff]
    %v126 = vld [vmem:[#allocation2 + $0x120] sm:$0xff]
    %v127 = vld [vmem:[#allocation2 + $0x128] sm:$0xff]
    %v128 = vld [vmem:[#allocation2 + $0x130] sm:$0xff]
    %v129 = vld [vmem:[#allocation2 + $0x138] sm:$0xff]
    %v130 = vld [vmem:[#allocation2 + $0x140] sm:$0xff]
    %v131 = vld [vmem:[#allocation2 + $0x148] sm:$0xff]
    %v132 = vld [vmem:[#allocation2 + $0x150] sm:$0xff]
    %v133 = vld [vmem:[#allocation2 + $0x158] sm:$0xff]
    %v134 = vld [vmem:[#allocation2 + $0x160] sm:$0xff]
    %v135 = vld [vmem:[#allocation2 + $0x168] sm:$0xff]
    %v136 = vld [vmem:[#allocation2 + $0x170] sm:$0xff]
    %v137 = vld [vmem:[#allocation2 + $0x178] sm:$0xff]
    %v138 = vld [vmem:[#allocation2 + $0x180] sm:$0xff]
    %v139 = vld [vmem:[#allocation2 + $0x188] sm:$0xff]
    %v140 = vld [vmem:[#allocation2 + $0x190] sm:$0xff]
    %v141 = vld [vmem:[#allocation2 + $0x198] sm:$0xff]
    %v142 = vld [vmem:[#allocation2 + $0x1a0] sm:$0xff]
    %v143 = vld [vmem:[#allocation2 + $0x1a8] sm:$0xff]
    %v144 = vld [vmem:[#allocation2 + $0x1b0] sm:$0xff]
    %v145 = vld [vmem:[#allocation2 + $0x1b8] sm:$0xff]
    %v146 = vld [vmem:[#allocation2 + $0x1c0] sm:$0xff]
    %v147 = vld [vmem:[#allocation2 + $0x1c8] sm:$0xff]
    %v148 = vld [vmem:[#allocation2 + $0x1d0] sm:$0xff]
    %v149 = vld [vmem:[#allocation2 + $0x1d8] sm:$0xff]
    %v150 = vld [vmem:[#allocation2 + $0x1e0] sm:$0xff]
    %v151 = vld [vmem:[#allocation2 + $0x1e8] sm:$0xff]
    %v152 = vld [vmem:[#allocation2 + $0x1f0] sm:$0xff]
    %v153 = vld [vmem:[#allocation2 + $0x1f8] sm:$0xff]
    %v154 = vld [vmem:[#allocation2 + $0x200] sm:$0xff]
    %v155 = vld [vmem:[#allocation2 + $0x208] sm:$0xff]
    %v156 = vld [vmem:[#allocation2 + $0x210] sm:$0xff]
    %v157 = vld [vmem:[#allocation2 + $0x218] sm:$0xff]
    %v158 = vld [vmem:[#allocation2 + $0x220] sm:$0xff]
    %v159 = vld [vmem:[#allocation2 + $0x228] sm:$0xff]
    %v160 = vld [vmem:[#allocation2 + $0x230] sm:$0xff]
    %v161 = vld [vmem:[#allocation2 + $0x238] sm:$0xff]
    %v162 = vld [vmem:[#allocation2 + $0x240] sm:$0xff]
    %v163 = vld [vmem:[#allocation2 + $0x248] sm:$0xff]
    %v164 = vld [vmem:[#allocation2 + $0x250] sm:$0xff]
    %v165 = vld [vmem:[#allocation2 + $0x258] sm:$0xff]
    %v166 = vld [vmem:[#allocation2 + $0x260] sm:$0xff]
    %v167 = vld [vmem:[#allocation2 + $0x268] sm:$0xff]
    %v168 = vld [vmem:[#allocation2 + $0x270] sm:$0xff]
    %v169 = vld [vmem:[#allocation2 + $0x278] sm:$0xff]
    %v170 = vld [vmem:[#allocation2 + $0x280] sm:$0xff]
    %v171 = vld [vmem:[#allocation2 + $0x288] sm:$0xff]
    %v172 = vld [vmem:[#allocation2 + $0x290] sm:$0xff]
    %v173 = vld [vmem:[#allocation2 + $0x298] sm:$0xff]
    %v174 = vld [vmem:[#allocation2 + $0x2a0] sm:$0xff]
    %v175 = vld [vmem:[#allocation2 + $0x2a8] sm:$0xff]
    %v176 = vld [vmem:[#allocation2 + $0x2b0] sm:$0xff]
    %v177 = vld [vmem:[#allocation2 + $0x2b8] sm:$0xff]
    %v178 = vld [vmem:[#allocation2 + $0x2c0] sm:$0xff]
    %v179 = vld [vmem:[#allocation2 + $0x2c8] sm:$0xff]
    %v180 = vld [vmem:[#allocation2 + $0x2d0] sm:$0xff]
    %v181 = vld [vmem:[#allocation2 + $0x2d8] sm:$0xff]
    %v182 = vld [vmem:[#allocation2 + $0x2e0] sm:$0xff]
    %v183 = vld [vmem:[#allocation2 + $0x2e8] sm:$0xff]
    %v184 = vld [vmem:[#allocation2 + $0x2f0] sm:$0xff]
    %v185 = vld [vmem:[#allocation2 + $0x2f8] sm:$0xff]
    %v186 = vld [vmem:[#allocation2 + $0x300] sm:$0xff]
    %v187 = vld [vmem:[#allocation2 + $0x308] sm:$0xff]
    %v188 = vld [vmem:[#allocation2 + $0x310] sm:$0xff]
    %v189 = vld [vmem:[#allocation2 + $0x318] sm:$0xff]
    %v190 = vld [vmem:[#allocation2 + $0x320] sm:$0xff]
    %v191 = vld [vmem:[#allocation2 + $0x328] sm:$0xff]
    %v192 = vld [vmem:[#allocation2 + $0x330] sm:$0xff]
    %v193 = vld [vmem:[#allocation2 + $0x338] sm:$0xff]
    %v194 = vld [vmem:[#allocation2 + $0x340] sm:$0xff]
    %v195 = vld [vmem:[#allocation2 + $0x348] sm:$0xff]
    %v196 = vld [vmem:[#allocation2 + $0x350] sm:$0xff]
    %v197 = vld [vmem:[#allocation2 + $0x358] sm:$0xff]
    %v198 = vld [vmem:[#allocation2 + $0x360] sm:$0xff]
    %v199 = vld [vmem:[#allocation2 + $0x368] sm:$0xff]
    %v200 = vld [vmem:[#allocation2 + $0x370] sm:$0xff]
    %v201 = vld [vmem:[#allocation2 + $0x378] sm:$0xff]
    %v202 = vld [vmem:[#allocation2 + $0x380] sm:$0xff]
    %v203 = vld [vmem:[#allocation2 + $0x388] sm:$0xff]
    %v204 = vld [vmem:[#allocation2 + $0x390] sm:$0xff]
    %v205 = vld [vmem:[#allocation2 + $0x398] sm:$0xff]
    %v206 = vld [vmem:[#allocation2 + $0x3a0] sm:$0xff]
    %v207 = vld [vmem:[#allocation2 + $0x3a8] sm:$0xff]
    %v208 = vld [vmem:[#allocation2 + $0x3b0] sm:$0xff]
    %v209 = vld [vmem:[#allocation2 + $0x3b8] sm:$0xff]
    %v210 = vld [vmem:[#allocation2 + $0x3c0] sm:$0xff]
    %v211 = vld [vmem:[#allocation2 + $0x3c8] sm:$0xff]
    %v212 = vld [vmem:[#allocation2 + $0x3d0] sm:$0xff]
    %v213 = vld [vmem:[#allocation2 + $0x3d8] sm:$0xff]
    %v214 = vld [vmem:[#allocation2 + $0x3e0] sm:$0xff]
    %v215 = vld [vmem:[#allocation2 + $0x3e8] sm:$0xff]
    %v216 = vld [vmem:[#allocation2 + $0x3f0] sm:$0xff]
    %v217 = vld [vmem:[#allocation2 + $0x3f8] sm:$0xff]
    %v218 = vld [vmem:[#allocation2 + $0x400] sm:$0xff]
    %v219 = vld [vmem:[#allocation2 + $0x408] sm:$0xff]
    %v220 = vld [vmem:[#allocation2 + $0x410] sm:$0xff]
    %v221 = vld [vmem:[#allocation2 + $0x418] sm:$0xff]
    %v222 = vld [vmem:[#allocation2 + $0x420] sm:$0xff]
    %v223 = vld [vmem:[#allocation2 + $0x428] sm:$0xff]
    %v224 = vld [vmem:[#allocation2 + $0x430] sm:$0xff]
    %v225 = vld [vmem:[#allocation2 + $0x438] sm:$0xff]
    %v226 = vld [vmem:[#allocation2 + $0x440] sm:$0xff]
    %v227 = vld [vmem:[#allocation2 + $0x448] sm:$0xff]
    %v228 = vld [vmem:[#allocation2 + $0x450] sm:$0xff]
    %v229 = vld [vmem:[#allocation2 + $0x458] sm:$0xff]
    %v230 = vld [vmem:[#allocation2 + $0x460] sm:$0xff]
    %v231 = vld [vmem:[#allocation2 + $0x468] sm:$0xff]
    %v232 = vld [vmem:[#allocation2 + $0x470] sm:$0xff]
    %v233 = vld [vmem:[#allocation2 + $0x478] sm:$0xff]
    %v234 = vld [vmem:[#allocation2 + $0x480] sm:$0xff]
    %v235 = vld [vmem:[#allocation2 + $0x488] sm:$0xff]
    %v236 = vld [vmem:[#allocation2 + $0x490] sm:$0xff]
    %v237 = vld [vmem:[#allocation2 + $0x498] sm:$0xff]
    %v238 = vld [vmem:[#allocation2 + $0x4a0] sm:$0xff]
    %v239 = vld [vmem:[#allocation2 + $0x4a8] sm:$0xff]
    %v240 = vld [vmem:[#allocation2 + $0x4b0] sm:$0xff]
    %v241 = vld [vmem:[#allocation2 + $0x4b8] sm:$0xff]
    %v242 = vld [vmem:[#allocation2 + $0x4c0] sm:$0xff]
    %v243 = vld [vmem:[#allocation2 + $0x4c8] sm:$0xff]
    %v244 = vld [vmem:[#allocation2 + $0x4d0] sm:$0xff]
    %v245 = vld [vmem:[#allocation2 + $0x4d8] sm:$0xff]
    %v246 = vld [vmem:[#allocation2 + $0x4e0] sm:$0xff]
    %v247 = vld [vmem:[#allocation2 + $0x4e8] sm:$0xff]
    %v248 = vld [vmem:[#allocation2 + $0x4f0] sm:$0xff]
    %v249 = vld [vmem:[#allocation2 + $0x4f8] sm:$0xff]
    %v250 = vld [vmem:[#allocation2 + $0x500] sm:$0xff]
    %v251 = vld [vmem:[#allocation2 + $0x508] sm:$0xff]
    %v252 = vld [vmem:[#allocation2 + $0x510] sm:$0xff]
    %v253 = vld [vmem:[#allocation2 + $0x518] sm:$0xff]
    %v254 = vld [vmem:[#allocation2 + $0x520] sm:$0xff]
    %v255 = vld [vmem:[#allocation2 + $0x528] sm:$0xff]
    %v256 = vld [vmem:[#allocation2 + $0x530] sm:$0xff]
    %v257 = vld [vmem:[#allocation2 + $0x538] sm:$0xff]
    %v258 = vld [vmem:[#allocation2 + $0x540] sm:$0xff]
    %v259 = vld [vmem:[#allocation2 + $0x548] sm:$0xff]
    %v260 = vld [vmem:[#allocation2 + $0x550] sm:$0xff]
    %v261 = vld [vmem:[#allocation2 + $0x558] sm:$0xff]
    %v262 = vld [vmem:[#allocation2 + $0x560] sm:$0xff]
    %v263 = vld [vmem:[#allocation2 + $0x568] sm:$0xff]
    %v264 = vld [vmem:[#allocation2 + $0x570] sm:$0xff]
    %v265 = vld [vmem:[#allocation2 + $0x578] sm:$0xff]
    %v266 = vld [vmem:[#allocation2 + $0x580] sm:$0xff]
    %v267 = vld [vmem:[#allocation2 + $0x588] sm:$0xff]
    %v268 = vld [vmem:[#allocation2 + $0x590] sm:$0xff]
    %v269 = vld [vmem:[#allocation2 + $0x598] sm:$0xff]
    %v270 = vld [vmem:[#allocation2 + $0x5a0] sm:$0xff]
    %v271 = vld [vmem:[#allocation2 + $0x5a8] sm:$0xff]
    %v272 = vld [vmem:[#allocation2 + $0x5b0] sm:$0xff]
    %v273 = vld [vmem:[#allocation2 + $0x5b8] sm:$0xff]
    %v274 = vld [vmem:[#allocation2 + $0x5c0] sm:$0xff]
    %v275 = vld [vmem:[#allocation2 + $0x5c8] sm:$0xff]
    %v276 = vld [vmem:[#allocation2 + $0x5d0] sm:$0xff]
    %v277 = vld [vmem:[#allocation2 + $0x5d8] sm:$0xff]
    %v278 = vld [vmem:[#allocation2 + $0x5e0] sm:$0xff]
    %v279 = vld [vmem:[#allocation2 + $0x5e8] sm:$0xff]
    %v280 = vld [vmem:[#allocation2 + $0x5f0] sm:$0xff]
    %v281 = vld [vmem:[#allocation2 + $0x5f8] sm:$0xff]
    %v282 = vld [vmem:[#allocation2 + $0x600] sm:$0xff]
    %v283 = vld [vmem:[#allocation2 + $0x608] sm:$0xff]
    %v284 = vld [vmem:[#allocation2 + $0x610] sm:$0xff]
    %v285 = vld [vmem:[#allocation2 + $0x618] sm:$0xff]
    %v286 = vld [vmem:[#allocation2 + $0x620] sm:$0xff]
    %v287 = vld [vmem:[#allocation2 + $0x628] sm:$0xff]
    %v288 = vld [vmem:[#allocation2 + $0x630] sm:$0xff]
    %v289 = vld [vmem:[#allocation2 + $0x638] sm:$0xff]
    %v290 = vld [vmem:[#allocation2 + $0x640] sm:$0xff]
    %v291 = vld [vmem:[#allocation2 + $0x648] sm:$0xff]
    %v292 = vld [vmem:[#allocation2 + $0x650] sm:$0xff]
    %v293 = vld [vmem:[#allocation2 + $0x658] sm:$0xff]
    %v294 = vld [vmem:[#allocation2 + $0x660] sm:$0xff]
    %v295 = vld [vmem:[#allocation2 + $0x668] sm:$0xff]
    %v296 = vld [vmem:[#allocation2 + $0x670] sm:$0xff]
    %v297 = vld [vmem:[#allocation2 + $0x678] sm:$0xff]
    %v298 = vld [vmem:[#allocation2 + $0x680] sm:$0xff]
    %v299 = vld [vmem:[#allocation2 + $0x688] sm:$0xff]
    %v300 = vld [vmem:[#allocation2 + $0x690] sm:$0xff]
    %v301 = vld [vmem:[#allocation2 + $0x698] sm:$0xff]
    %v302 = vld [vmem:[#allocation2 + $0x6a0] sm:$0xff]
    %v303 = vld [vmem:[#allocation2 + $0x6a8] sm:$0xff]
    %v304 = vld [vmem:[#allocation2 + $0x6b0] sm:$0xff]
    %v305 = vld [vmem:[#allocation2 + $0x6b8] sm:$0xff]
    %v306 = vld [vmem:[#allocation2 + $0x6c0] sm:$0xff]
    %v307 = vld [vmem:[#allocation2 + $0x6c8] sm:$0xff]
    %v308 = vld [vmem:[#allocation2 + $0x6d0] sm:$0xff]
    %v309 = vld [vmem:[#allocation2 + $0x6d8] sm:$0xff]
    %v310 = vld [vmem:[#allocation2 + $0x6e0] sm:$0xff]
    %v311 = vld [vmem:[#allocation2 + $0x6e8] sm:$0xff]
    %v312 = vld [vmem:[#allocation2 + $0x6f0] sm:$0xff]
    %v313 = vld [vmem:[#allocation2 + $0x6f8] sm:$0xff]
    %v314 = vld [vmem:[#allocation2 + $0x700] sm:$0xff]
    %v315 = vld [vmem:[#allocation2 + $0x708] sm:$0xff]
    %v316 = vld [vmem:[#allocation2 + $0x710] sm:$0xff]
    %v317 = vld [vmem:[#allocation2 + $0x718] sm:$0xff]
    %v318 = vld [vmem:[#allocation2 + $0x720] sm:$0xff]
    %v319 = vld [vmem:[#allocation2 + $0x728] sm:$0xff]
    %v320 = vld [vmem:[#allocation2 + $0x730] sm:$0xff]
    %v321 = vld [vmem:[#allocation2 + $0x738] sm:$0xff]
    %v322 = vld [vmem:[#allocation2 + $0x740] sm:$0xff]
    %v323 = vld [vmem:[#allocation2 + $0x748] sm:$0xff]
    %v324 = vld [vmem:[#allocation2 + $0x750] sm:$0xff]
    %v325 = vld [vmem:[#allocation2 + $0x758] sm:$0xff]
    %v326 = vld [vmem:[#allocation2 + $0x760] sm:$0xff]
    %v327 = vld [vmem:[#allocation2 + $0x768] sm:$0xff]
    %v328 = vld [vmem:[#allocation2 + $0x770] sm:$0xff]
    %v329 = vld [vmem:[#allocation2 + $0x778] sm:$0xff]
    %v330 = vld [vmem:[#allocation2 + $0x780] sm:$0xff]
    %v331 = vld [vmem:[#allocation2 + $0x788] sm:$0xff]
    %v332 = vld [vmem:[#allocation2 + $0x790] sm:$0xff]
    %v333 = vld [vmem:[#allocation2 + $0x798] sm:$0xff]
    %v334 = vld [vmem:[#allocation2 + $0x7a0] sm:$0xff]
    %v335 = vld [vmem:[#allocation2 + $0x7a8] sm:$0xff]
    %v336 = vld [vmem:[#allocation2 + $0x7b0] sm:$0xff]
    %v337 = vld [vmem:[#allocation2 + $0x7b8] sm:$0xff]
    %v338 = vld [vmem:[#allocation2 + $0x7c0] sm:$0xff]
    %v339 = vld [vmem:[#allocation2 + $0x7c8] sm:$0xff]
    %v340 = vld [vmem:[#allocation2 + $0x7d0] sm:$0xff]
    %v341 = vld [vmem:[#allocation2 + $0x7d8] sm:$0xff]
    %v342 = vld [vmem:[#allocation2 + $0x7e0] sm:$0xff]
    %v343 = vld [vmem:[#allocation2 + $0x7e8] sm:$0xff]
    %v344 = vld [vmem:[#allocation2 + $0x7f0] sm:$0xff]
    %v345 = vld [vmem:[#allocation2 + $0x7f8] sm:$0xff]
    %v346 = vld [vmem:[#allocation2 + $0x800] sm:$0xff]
    %v347 = vld [vmem:[#allocation2 + $0x808] sm:$0xff]
    %v348 = vld [vmem:[#allocation2 + $0x810] sm:$0xff]
    %v349 = vld [vmem:[#allocation2 + $0x818] sm:$0xff]
    %v350 = vld [vmem:[#allocation2 + $0x820] sm:$0xff]
    %v351 = vld [vmem:[#allocation2 + $0x828] sm:$0xff]
    %v352 = vld [vmem:[#allocation2 + $0x830] sm:$0xff]
    %v353 = vld [vmem:[#allocation2 + $0x838] sm:$0xff]
    %v354 = vld [vmem:[#allocation2 + $0x840] sm:$0xff]
    %v355 = vld [vmem:[#allocation2 + $0x848] sm:$0xff]
    %v356 = vld [vmem:[#allocation2 + $0x850] sm:$0xff]
    %v357 = vld [vmem:[#allocation2 + $0x858] sm:$0xff]
    %v358 = vld [vmem:[#allocation2 + $0x860] sm:$0xff]
    %v359 = vld [vmem:[#allocation2 + $0x868] sm:$0xff]
    %v360 = vld [vmem:[#allocation2 + $0x870] sm:$0xff]
    %v361 = vld [vmem:[#allocation2 + $0x878] sm:$0xff]
    %v362 = vld [vmem:[#allocation2 + $0x880] sm:$0xff]
    %v363 = vld [vmem:[#allocation2 + $0x888] sm:$0xff]
    %v364 = vld [vmem:[#allocation2 + $0x890] sm:$0xff]
    %v365 = vld [vmem:[#allocation2 + $0x898] sm:$0xff]
    %v366 = vld [vmem:[#allocation2 + $0x8a0] sm:$0xff]
    %v367 = vld [vmem:[#allocation2 + $0x8a8] sm:$0xff]
    %v368 = vld [vmem:[#allocation2 + $0x8b0] sm:$0xff]
    %v369 = vld [vmem:[#allocation2 + $0x8b8] sm:$0xff]
    %v370 = vld [vmem:[#allocation2 + $0x8c0] sm:$0xff]
    %v371 = vld [vmem:[#allocation2 + $0x8c8] sm:$0xff]
    %v372 = vld [vmem:[#allocation2 + $0x8d0] sm:$0xff]
    %v373 = vld [vmem:[#allocation2 + $0x8d8] sm:$0xff]
    %v374 = vld [vmem:[#allocation2 + $0x8e0] sm:$0xff]
    %v375 = vld [vmem:[#allocation2 + $0x8e8] sm:$0xff]
    %v376 = vld [vmem:[#allocation2 + $0x8f0] sm:$0xff]
    %v377 = vld [vmem:[#allocation2 + $0x8f8] sm:$0xff]
    %v378 = vld [vmem:[#allocation2 + $0x900] sm:$0xff]
    %v379 = vld [vmem:[#allocation2 + $0x908] sm:$0xff]
    %v380 = vld [vmem:[#allocation2 + $0x910] sm:$0xff]
    %v381 = vld [vmem:[#allocation2 + $0x918] sm:$0xff]
    %v382 = vld [vmem:[#allocation2 + $0x920] sm:$0xff]
    %v383 = vld [vmem:[#allocation2 + $0x928] sm:$0xff]
    %v384 = vld [vmem:[#allocation2 + $0x930] sm:$0xff]
    %v385 = vld [vmem:[#allocation2 + $0x938] sm:$0xff]
    %v386 = vld [vmem:[#allocation2 + $0x940] sm:$0xff]
    %v387 = vld [vmem:[#allocation2 + $0x948] sm:$0xff]
    %v388 = vld [vmem:[#allocation2 + $0x950] sm:$0xff]
    %v389 = vld [vmem:[#allocation2 + $0x958] sm:$0xff]
    %v390 = vld [vmem:[#allocation2 + $0x960] sm:$0xff]
    %v391 = vld [vmem:[#allocation2 + $0x968] sm:$0xff]
    %v392 = vld [vmem:[#allocation2 + $0x970] sm:$0xff]
    %v393 = vld [vmem:[#allocation2 + $0x978] sm:$0xff]
    %v394 = vld [vmem:[#allocation2 + $0x980] sm:$0xff]
    %v395 = vld [vmem:[#allocation2 + $0x988] sm:$0xff]
    %v396 = vld [vmem:[#allocation2 + $0x990] sm:$0xff]
    %v397 = vld [vmem:[#allocation2 + $0x998] sm:$0xff]
    %v398 = vld [vmem:[#allocation2 + $0x9a0] sm:$0xff]
    %v399 = vld [vmem:[#allocation2 + $0x9a8] sm:$0xff]
    %v400 = vld [vmem:[#allocation2 + $0x9b0] sm:$0xff]
    %v401 = vld [vmem:[#allocation2 + $0x9b8] sm:$0xff]
    %v402 = vld [vmem:[#allocation2 + $0x9c0] sm:$0xff]
    %v403 = vld [vmem:[#allocation2 + $0x9c8] sm:$0xff]
    %v404 = vld [vmem:[#allocation2 + $0x9d0] sm:$0xff]
    %v405 = vld [vmem:[#allocation2 + $0x9d8] sm:$0xff]
    %v406 = vld [vmem:[#allocation2 + $0x9e0] sm:$0xff]
    %v407 = vld [vmem:[#allocation2 + $0x9e8] sm:$0xff]
    %v408 = vld [vmem:[#allocation2 + $0x9f0] sm:$0xff]
    %v409 = vld [vmem:[#allocation2 + $0x9f8] sm:$0xff]
    %v410 = vld [vmem:[#allocation2 + $0xa00] sm:$0xff]
    %v411 = vld [vmem:[#allocation2 + $0xa08] sm:$0xff]
    %v412 = vld [vmem:[#allocation2 + $0xa10] sm:$0xff]
    %v413 = vld [vmem:[#allocation2 + $0xa18] sm:$0xff]
    %v414 = vld [vmem:[#allocation2 + $0xa20] sm:$0xff]
    %v415 = vld [vmem:[#allocation2 + $0xa28] sm:$0xff]
    %v416 = vld [vmem:[#allocation2 + $0xa30] sm:$0xff]
    %v417 = vld [vmem:[#allocation2 + $0xa38] sm:$0xff]
    %v418 = vld [vmem:[#allocation2 + $0xa40] sm:$0xff]
    %v419 = vld [vmem:[#allocation2 + $0xa48] sm:$0xff]
    %v420 = vld [vmem:[#allocation2 + $0xa50] sm:$0xff]
    %v421 = vld [vmem:[#allocation2 + $0xa58] sm:$0xff]
    %v422 = vld [vmem:[#allocation2 + $0xa60] sm:$0xff]
    %v423 = vld [vmem:[#allocation2 + $0xa68] sm:$0xff]
    %v424 = vld [vmem:[#allocation2 + $0xa70] sm:$0xff]
    %v425 = vld [vmem:[#allocation2 + $0xa78] sm:$0xff]
    %v426 = vld [vmem:[#allocation2 + $0xa80] sm:$0xff]
    %v427 = vld [vmem:[#allocation2 + $0xa88] sm:$0xff]
    %v428 = vld [vmem:[#allocation2 + $0xa90] sm:$0xff]
    %v429 = vld [vmem:[#allocation2 + $0xa98] sm:$0xff]
    %v430 = vld [vmem:[#allocation2 + $0xaa0] sm:$0xff]
    %v431 = vld [vmem:[#allocation2 + $0xaa8] sm:$0xff]
    %v432 = vld [vmem:[#allocation2 + $0xab0] sm:$0xff]
    %v433 = vld [vmem:[#allocation2 + $0xab8] sm:$0xff]
    %v434 = vld [vmem:[#allocation2 + $0xac0] sm:$0xff]
    %v435 = vld [vmem:[#allocation2 + $0xac8] sm:$0xff]
    %v436 = vld [vmem:[#allocation2 + $0xad0] sm:$0xff]
    %v437 = vld [vmem:[#allocation2 + $0xad8] sm:$0xff]
    %v438 = vld [vmem:[#allocation2 + $0xae0] sm:$0xff]
    %v439 = vld [vmem:[#allocation2 + $0xae8] sm:$0xff]
    %v440 = vld [vmem:[#allocation2 + $0xaf0] sm:$0xff]
    %v441 = vld [vmem:[#allocation2 + $0xaf8] sm:$0xff]
    %v442 = vld [vmem:[#allocation2 + $0xb00] sm:$0xff]
    %v443 = vld [vmem:[#allocation2 + $0xb08] sm:$0xff]
    %v444 = vld [vmem:[#allocation2 + $0xb10] sm:$0xff]
    %v445 = vld [vmem:[#allocation2 + $0xb18] sm:$0xff]
    %v446 = vld [vmem:[#allocation2 + $0xb20] sm:$0xff]
    %v447 = vld [vmem:[#allocation2 + $0xb28] sm:$0xff]
    %v448 = vld [vmem:[#allocation2 + $0xb30] sm:$0xff]
    %v449 = vld [vmem:[#allocation2 + $0xb38] sm:$0xff]
    %v450 = vld [vmem:[#allocation2 + $0xb40] sm:$0xff]
    %v451 = vld [vmem:[#allocation2 + $0xb48] sm:$0xff]
    %v452 = vld [vmem:[#allocation2 + $0xb50] sm:$0xff]
    %v453 = vld [vmem:[#allocation2 + $0xb58] sm:$0xff]
    %v454 = vld [vmem:[#allocation2 + $0xb60] sm:$0xff]
    %v455 = vld [vmem:[#allocation2 + $0xb68] sm:$0xff]
    %v456 = vld [vmem:[#allocation2 + $0xb70] sm:$0xff]
    %v457 = vld [vmem:[#allocation2 + $0xb78] sm:$0xff]
    %v458 = vld [vmem:[#allocation2 + $0xb80] sm:$0xff]
    %v459 = vld [vmem:[#allocation2 + $0xb88] sm:$0xff]
    %v460 = vld [vmem:[#allocation2 + $0xb90] sm:$0xff]
    %v461 = vld [vmem:[#allocation2 + $0xb98] sm:$0xff]
    %v462 = vld [vmem:[#allocation2 + $0xba0] sm:$0xff]
    %v463 = vld [vmem:[#allocation2 + $0xba8] sm:$0xff]
    %v464 = vld [vmem:[#allocation2 + $0xbb0] sm:$0xff]
    %v465 = vld [vmem:[#allocation2 + $0xbb8] sm:$0xff]
    %v466 = vld [vmem:[#allocation2 + $0xbc0] sm:$0xff]
    %v467 = vld [vmem:[#allocation2 + $0xbc8] sm:$0xff]
    %v468 = vld [vmem:[#allocation2 + $0xbd0] sm:$0xff]
    %v469 = vld [vmem:[#allocation2 + $0xbd8] sm:$0xff]
    %v470 = vld [vmem:[#allocation2 + $0xbe0] sm:$0xff]
    %v471 = vld [vmem:[#allocation2 + $0xbe8] sm:$0xff]
    %v472 = vld [vmem:[#allocation2 + $0xbf0] sm:$0xff]
    %v473 = vld [vmem:[#allocation2 + $0xbf8] sm:$0xff]
    %v474 = vld [vmem:[#allocation2 + $0xc00] sm:$0xff]
    %v475 = vld [vmem:[#allocation2 + $0xc08] sm:$0xff]
    %v476 = vld [vmem:[#allocation2 + $0xc10] sm:$0xff]
    %v477 = vld [vmem:[#allocation2 + $0xc18] sm:$0xff]
    %v478 = vld [vmem:[#allocation2 + $0xc20] sm:$0xff]
    %v479 = vld [vmem:[#allocation2 + $0xc28] sm:$0xff]
    %v480 = vld [vmem:[#allocation2 + $0xc30] sm:$0xff]
    %v481 = vld [vmem:[#allocation2 + $0xc38] sm:$0xff]
    %v482 = vld [vmem:[#allocation2 + $0xc40] sm:$0xff]
    %v483 = vld [vmem:[#allocation2 + $0xc48] sm:$0xff]
    %v484 = vld [vmem:[#allocation2 + $0xc50] sm:$0xff]
    %v485 = vld [vmem:[#allocation2 + $0xc58] sm:$0xff]
    %v486 = vld [vmem:[#allocation2 + $0xc60] sm:$0xff]
    %v487 = vld [vmem:[#allocation2 + $0xc68] sm:$0xff]
    %v488 = vld [vmem:[#allocation2 + $0xc70] sm:$0xff]
    %v489 = vld [vmem:[#allocation2 + $0xc78] sm:$0xff]
    %v490 = vld [vmem:[#allocation2 + $0xc80] sm:$0xff]
    %v491 = vld [vmem:[#allocation2 + $0xc88] sm:$0xff]
    %v492 = vld [vmem:[#allocation2 + $0xc90] sm:$0xff]
    %v493 = vld [vmem:[#allocation2 + $0xc98] sm:$0xff]
    %v494 = vld [vmem:[#allocation2 + $0xca0] sm:$0xff]
    %v495 = vld [vmem:[#allocation2 + $0xca8] sm:$0xff]
    %v496 = vld [vmem:[#allocation2 + $0xcb0] sm:$0xff]
    %v497 = vld [vmem:[#allocation2 + $0xcb8] sm:$0xff]
    %v498 = vld [vmem:[#allocation2 + $0xcc0] sm:$0xff]
    %v499 = vld [vmem:[#allocation2 + $0xcc8] sm:$0xff]
    %v500 = vld [vmem:[#allocation2 + $0xcd0] sm:$0xff]
    %v501 = vld [vmem:[#allocation2 + $0xcd8] sm:$0xff]
    %v502 = vld [vmem:[#allocation2 + $0xce0] sm:$0xff]
    %v503 = vld [vmem:[#allocation2 + $0xce8] sm:$0xff]
    %v504 = vld [vmem:[#allocation2 + $0xcf0] sm:$0xff]
    %v505 = vld [vmem:[#allocation2 + $0xcf8] sm:$0xff]
    %v506 = vld [vmem:[#allocation2 + $0xd00] sm:$0xff]
    %v507 = vld [vmem:[#allocation2 + $0xd08] sm:$0xff]
    %v508 = vld [vmem:[#allocation2 + $0xd10] sm:$0xff]
    %v509 = vld [vmem:[#allocation2 + $0xd18] sm:$0xff]
    %v510 = vld [vmem:[#allocation2 + $0xd20] sm:$0xff]
    %v511 = vld [vmem:[#allocation2 + $0xd28] sm:$0xff]
    %v512 = vld [vmem:[#allocation2 + $0xd30] sm:$0xff]
    %v513 = vld [vmem:[#allocation2 + $0xd38] sm:$0xff]
    %v514 = vld [vmem:[#allocation2 + $0xd40] sm:$0xff]
    %v515 = vld [vmem:[#allocation2 + $0xd48] sm:$0xff]
    %v516 = vld [vmem:[#allocation2 + $0xd50] sm:$0xff]
    %v517 = vld [vmem:[#allocation2 + $0xd58] sm:$0xff]
    %v518 = vld [vmem:[#allocation2 + $0xd60] sm:$0xff]
    %v519 = vld [vmem:[#allocation2 + $0xd68] sm:$0xff]
    %v520 = vld [vmem:[#allocation2 + $0xd70] sm:$0xff]
    %v521 = vld [vmem:[#allocation2 + $0xd78] sm:$0xff]
    %v522 = vld [vmem:[#allocation2 + $0xd80] sm:$0xff]
    %v523 = vld [vmem:[#allocation2 + $0xd88] sm:$0xff]
    %v524 = vld [vmem:[#allocation2 + $0xd90] sm:$0xff]
    %v525 = vld [vmem:[#allocation2 + $0xd98] sm:$0xff]
    %v526 = vld [vmem:[#allocation2 + $0xda0] sm:$0xff]
    %v527 = vld [vmem:[#allocation2 + $0xda8] sm:$0xff]
    %v528 = vld [vmem:[#allocation2 + $0xdb0] sm:$0xff]
    %v529 = vld [vmem:[#allocation2 + $0xdb8] sm:$0xff]
    %v530 = vld [vmem:[#allocation2 + $0xdc0] sm:$0xff]
    %v531 = vld [vmem:[#allocation2 + $0xdc8] sm:$0xff]
    %v532 = vld [vmem:[#allocation2 + $0xdd0] sm:$0xff]
    %v533 = vld [vmem:[#allocation2 + $0xdd8] sm:$0xff]
    %v534 = vld [vmem:[#allocation2 + $0xde0] sm:$0xff]
    %v535 = vld [vmem:[#allocation2 + $0xde8] sm:$0xff]
    %v536 = vld [vmem:[#allocation2 + $0xdf0] sm:$0xff]
    %v537 = vld [vmem:[#allocation2 + $0xdf8] sm:$0xff]
    %v538 = vld [vmem:[#allocation2 + $0xe00] sm:$0xff]
    %v539 = vld [vmem:[#allocation2 + $0xe08] sm:$0xff]
    %v540 = vld [vmem:[#allocation2 + $0xe10] sm:$0xff]
    %v541 = vld [vmem:[#allocation2 + $0xe18] sm:$0xff]
    %v542 = vld [vmem:[#allocation2 + $0xe20] sm:$0xff]
    %v543 = vld [vmem:[#allocation2 + $0xe28] sm:$0xff]
    %v544 = vld [vmem:[#allocation2 + $0xe30] sm:$0xff]
    %v545 = vld [vmem:[#allocation2 + $0xe38] sm:$0xff]
    %v546 = vld [vmem:[#allocation2 + $0xe40] sm:$0xff]
    %v547 = vld [vmem:[#allocation2 + $0xe48] sm:$0xff]
    %v548 = vld [vmem:[#allocation2 + $0xe50] sm:$0xff]
    %v549 = vld [vmem:[#allocation2 + $0xe58] sm:$0xff]
    %v550 = vld [vmem:[#allocation2 + $0xe60] sm:$0xff]
    %v551 = vld [vmem:[#allocation2 + $0xe68] sm:$0xff]
    %v552 = vld [vmem:[#allocation2 + $0xe70] sm:$0xff]
    %v553 = vld [vmem:[#allocation2 + $0xe78] sm:$0xff]
    %v554 = vld [vmem:[#allocation2 + $0xe80] sm:$0xff]
    %v555 = vld [vmem:[#allocation2 + $0xe88] sm:$0xff]
    %v556 = vld [vmem:[#allocation2 + $0xe90] sm:$0xff]
    %v557 = vld [vmem:[#allocation2 + $0xe98] sm:$0xff]
    %v558 = vld [vmem:[#allocation2 + $0xea0] sm:$0xff]
    %v559 = vld [vmem:[#allocation2 + $0xea8] sm:$0xff]
    %v560 = vld [vmem:[#allocation2 + $0xeb0] sm:$0xff]
    %v561 = vld [vmem:[#allocation2 + $0xeb8] sm:$0xff]
    %v562 = vld [vmem:[#allocation2 + $0xec0] sm:$0xff]
    %v563 = vld [vmem:[#allocation2 + $0xec8] sm:$0xff]
    %v564 = vld [vmem:[#allocation2 + $0xed0] sm:$0xff]
    %v565 = vld [vmem:[#allocation2 + $0xed8] sm:$0xff]
    %v566 = vld [vmem:[#allocation2 + $0xee0] sm:$0xff]
    %v567 = vld [vmem:[#allocation2 + $0xee8] sm:$0xff]
    %v568 = vld [vmem:[#allocation2 + $0xef0] sm:$0xff]
    %v569 = vld [vmem:[#allocation2 + $0xef8] sm:$0xff]
    %v570 = vld [vmem:[#allocation2 + $0xf00] sm:$0xff]
    %v571 = vld [vmem:[#allocation2 + $0xf08] sm:$0xff]
    %v572 = vld [vmem:[#allocation2 + $0xf10] sm:$0xff]
    %v573 = vld [vmem:[#allocation2 + $0xf18] sm:$0xff]
    %v574 = vld [vmem:[#allocation2 + $0xf20] sm:$0xff]
    %v575 = vld [vmem:[#allocation2 + $0xf28] sm:$0xff]
    %v576 = vld [vmem:[#allocation2 + $0xf30] sm:$0xff]
    %v577 = vld [vmem:[#allocation2 + $0xf38] sm:$0xff]
    %v578 = vld [vmem:[#allocation2 + $0xf40] sm:$0xff]
    %v579 = vld [vmem:[#allocation2 + $0xf48] sm:$0xff]
    %v580 = vld [vmem:[#allocation2 + $0xf50] sm:$0xff]
    %v581 = vld [vmem:[#allocation2 + $0xf58] sm:$0xff]
    %v582 = vld [vmem:[#allocation2 + $0xf60] sm:$0xff]
    %v583 = vld [vmem:[#allocation2 + $0xf68] sm:$0xff]
    %v584 = vld [vmem:[#allocation2 + $0xf70] sm:$0xff]
    %v585 = vld [vmem:[#allocation2 + $0xf78] sm:$0xff]
    %v586 = vld [vmem:[#allocation2 + $0xf80] sm:$0xff]
    %v587 = vld [vmem:[#allocation2 + $0xf88] sm:$0xff]
    %v588 = vld [vmem:[#allocation2 + $0xf90] sm:$0xff]
    %v589 = vld [vmem:[#allocation2 + $0xf98] sm:$0xff]
    %v590 = vld [vmem:[#allocation2 + $0xfa0] sm:$0xff]
    %v591 = vld [vmem:[#allocation2 + $0xfa8] sm:$0xff]
    %v592 = vld [vmem:[#allocation2 + $0xfb0] sm:$0xff]
    %v593 = vld [vmem:[#allocation2 + $0xfb8] sm:$0xff]
    %v594 = vld [vmem:[#allocation2 + $0xfc0] sm:$0xff]
    %v595 = vld [vmem:[#allocation2 + $0xfc8] sm:$0xff]
    %v596 = vld [vmem:[#allocation2 + $0xfd0] sm:$0xff]
    %v597 = vld [vmem:[#allocation2 + $0xfd8] sm:$0xff]
    %v598 = vld [vmem:[#allocation2 + $0xfe0] sm:$0xff]
    %v599 = vld [vmem:[#allocation2 + $0xfe8] sm:$0xff]
    %v600 = vld [vmem:[#allocation2 + $0xff0] sm:$0xff]
    %v601 = vld [vmem:[#allocation2 + $0xff8] sm:$0xff]
    %v602 = vld [vmem:[#allocation2 + $0x1000] sm:$0xff]
    %v603 = vld [vmem:[#allocation2 + $0x1008] sm:$0xff]
    %v604 = vld [vmem:[#allocation2 + $0x1010] sm:$0xff]
    %v605 = vld [vmem:[#allocation2 + $0x1018] sm:$0xff]
    %v606 = vld [vmem:[#allocation2 + $0x1020] sm:$0xff]
    %v607 = vld [vmem:[#allocation2 + $0x1028] sm:$0xff]
    %v608 = vld [vmem:[#allocation2 + $0x1030] sm:$0xff]
    %v609 = vld [vmem:[#allocation2 + $0x1038] sm:$0xff]
    %v610 = vld [vmem:[#allocation2 + $0x1040] sm:$0xff]
    %v611 = vld [vmem:[#allocation2 + $0x1048] sm:$0xff]
    %v612 = vld [vmem:[#allocation2 + $0x1050] sm:$0xff]
    %v613 = vld [vmem:[#allocation2 + $0x1058] sm:$0xff]
    %v614 = vld [vmem:[#allocation2 + $0x1060] sm:$0xff]
    %v615 = vld [vmem:[#allocation2 + $0x1068] sm:$0xff]
    %v616 = vld [vmem:[#allocation2 + $0x1070] sm:$0xff]
    %v617 = vld [vmem:[#allocation2 + $0x1078] sm:$0xff]
    %v618 = vld [vmem:[#allocation2 + $0x1080] sm:$0xff]
    %v619 = vld [vmem:[#allocation2 + $0x1088] sm:$0xff]
    %v620 = vld [vmem:[#allocation2 + $0x1090] sm:$0xff]
    %v621 = vld [vmem:[#allocation2 + $0x1098] sm:$0xff]
    %v622 = vld [vmem:[#allocation2 + $0x10a0] sm:$0xff]
    %v623 = vld [vmem:[#allocation2 + $0x10a8] sm:$0xff]
    %v624 = vld [vmem:[#allocation2 + $0x10b0] sm:$0xff]
    %v625 = vld [vmem:[#allocation2 + $0x10b8] sm:$0xff]
    %v626 = vld [vmem:[#allocation2 + $0x10c0] sm:$0xff]
    %v627 = vld [vmem:[#allocation2 + $0x10c8] sm:$0xff]
    %v628 = vld [vmem:[#allocation2 + $0x10d0] sm:$0xff]
    %v629 = vld [vmem:[#allocation2 + $0x10d8] sm:$0xff]
    %v630 = vld [vmem:[#allocation2 + $0x10e0] sm:$0xff]
    %v631 = vld [vmem:[#allocation2 + $0x10e8] sm:$0xff]
    %v632 = vld [vmem:[#allocation2 + $0x10f0] sm:$0xff]
    %v633 = vld [vmem:[#allocation2 + $0x10f8] sm:$0xff]
    %v634 = vld [vmem:[#allocation2 + $0x1100] sm:$0xff]
    %v635 = vld [vmem:[#allocation2 + $0x1108] sm:$0xff]
    %v636 = vld [vmem:[#allocation2 + $0x1110] sm:$0xff]
    %v637 = vld [vmem:[#allocation2 + $0x1118] sm:$0xff]
    %v638 = vld [vmem:[#allocation2 + $0x1120] sm:$0xff]
    %v639 = vld [vmem:[#allocation2 + $0x1128] sm:$0xff]
    %v640 = vld [vmem:[#allocation2 + $0x1130] sm:$0xff]
    %v641 = vld [vmem:[#allocation2 + $0x1138] sm:$0xff]
    %v642 = vld [vmem:[#allocation2 + $0x1140] sm:$0xff]
    %v643 = vld [vmem:[#allocation2 + $0x1148] sm:$0xff]
    %v644 = vld [vmem:[#allocation2 + $0x1150] sm:$0xff]
    %v645 = vld [vmem:[#allocation2 + $0x1158] sm:$0xff]
    %v646 = vld [vmem:[#allocation2 + $0x1160] sm:$0xff]
    %v647 = vld [vmem:[#allocation2 + $0x1168] sm:$0xff]
    %v648 = vld [vmem:[#allocation2 + $0x1170] sm:$0xff]
    %v649 = vld [vmem:[#allocation2 + $0x1178] sm:$0xff]
    %v650 = vld [vmem:[#allocation2 + $0x1180] sm:$0xff]
    %v651 = vld [vmem:[#allocation2 + $0x1188] sm:$0xff]
    %v652 = vld [vmem:[#allocation2 + $0x1190] sm:$0xff]
    %v653 = vld [vmem:[#allocation2 + $0x1198] sm:$0xff]
    %v654 = vld [vmem:[#allocation2 + $0x11a0] sm:$0xff]
    %v655 = vld [vmem:[#allocation2 + $0x11a8] sm:$0xff]
    %v656 = vld [vmem:[#allocation2 + $0x11b0] sm:$0xff]
    %v657 = vld [vmem:[#allocation2 + $0x11b8] sm:$0xff]
    %v658 = vld [vmem:[#allocation2 + $0x11c0] sm:$0xff]
    %v659 = vld [vmem:[#allocation2 + $0x11c8] sm:$0xff]
    %v660 = vld [vmem:[#allocation2 + $0x11d0] sm:$0xff]
    %v661 = vld [vmem:[#allocation2 + $0x11d8] sm:$0xff]
    %v662 = vld [vmem:[#allocation2 + $0x11e0] sm:$0xff]
    %v663 = vld [vmem:[#allocation2 + $0x11e8] sm:$0xff]
    %v664 = vld [vmem:[#allocation2 + $0x11f0] sm:$0xff]
    %v665 = vld [vmem:[#allocation2 + $0x11f8] sm:$0xff]
    %v666 = vld [vmem:[#allocation2 + $0x1200] sm:$0xff]
    %v667 = vld [vmem:[#allocation2 + $0x1208] sm:$0xff]
    %v668 = vld [vmem:[#allocation2 + $0x1210] sm:$0xff]
    %v669 = vld [vmem:[#allocation2 + $0x1218] sm:$0xff]
    %v670 = vld [vmem:[#allocation2 + $0x1220] sm:$0xff]
    %v671 = vld [vmem:[#allocation2 + $0x1228] sm:$0xff]
    %v672 = vld [vmem:[#allocation2 + $0x1230] sm:$0xff]
    %v673 = vld [vmem:[#allocation2 + $0x1238] sm:$0xff]
    %v674 = vld [vmem:[#allocation2 + $0x1240] sm:$0xff]
    %v675 = vld [vmem:[#allocation2 + $0x1248] sm:$0xff]
    %v676 = vld [vmem:[#allocation2 + $0x1250] sm:$0xff]
    %v677 = vld [vmem:[#allocation2 + $0x1258] sm:$0xff]
    %v678 = vld [vmem:[#allocation2 + $0x1260] sm:$0xff]
    %v679 = vld [vmem:[#allocation2 + $0x1268] sm:$0xff]
    %v680 = vld [vmem:[#allocation2 + $0x1270] sm:$0xff]
    %v681 = vld [vmem:[#allocation2 + $0x1278] sm:$0xff]
    %v682 = vld [vmem:[#allocation2 + $0x1280] sm:$0xff]
    %v683 = vld [vmem:[#allocation2 + $0x1288] sm:$0xff]
    %v684 = vld [vmem:[#allocation2 + $0x1290] sm:$0xff]
    %v685 = vld [vmem:[#allocation2 + $0x1298] sm:$0xff]
    %v686 = vld [vmem:[#allocation2 + $0x12a0] sm:$0xff]
    %v687 = vld [vmem:[#allocation2 + $0x12a8] sm:$0xff]
    %v688 = vld [vmem:[#allocation2 + $0x12b0] sm:$0xff]
    %v689 = vld [vmem:[#allocation2 + $0x12b8] sm:$0xff]
    %v690 = vld [vmem:[#allocation2 + $0x12c0] sm:$0xff]
    %v691 = vld [vmem:[#allocation2 + $0x12c8] sm:$0xff]
    %v692 = vld [vmem:[#allocation2 + $0x12d0] sm:$0xff]
    %v693 = vld [vmem:[#allocation2 + $0x12d8] sm:$0xff]
    %v694 = vld [vmem:[#allocation2 + $0x12e0] sm:$0xff]
    %v695 = vld [vmem:[#allocation2 + $0x12e8] sm:$0xff]
    %v696 = vld [vmem:[#allocation2 + $0x12f0] sm:$0xff]
    %v697 = vld [vmem:[#allocation2 + $0x12f8] sm:$0xff]
    %v698 = vld [vmem:[#allocation2 + $0x1300] sm:$0xff]
    %v699 = vld [vmem:[#allocation2 + $0x1308] sm:$0xff]
    %v700 = vld [vmem:[#allocation2 + $0x1310] sm:$0xff]
    %v701 = vld [vmem:[#allocation2 + $0x1318] sm:$0xff]
    %v702 = vld [vmem:[#allocation2 + $0x1320] sm:$0xff]
    %v703 = vld [vmem:[#allocation2 + $0x1328] sm:$0xff]
    %v704 = vld [vmem:[#allocation2 + $0x1330] sm:$0xff]
    %v705 = vld [vmem:[#allocation2 + $0x1338] sm:$0xff]
    %v706 = vld [vmem:[#allocation2 + $0x1340] sm:$0xff]
    %v707 = vld [vmem:[#allocation2 + $0x1348] sm:$0xff]
    %v708 = vld [vmem:[#allocation2 + $0x1350] sm:$0xff]
    %v709 = vld [vmem:[#allocation2 + $0x1358] sm:$0xff]
    %v710 = vld [vmem:[#allocation2 + $0x1360] sm:$0xff]
    %v711 = vld [vmem:[#allocation2 + $0x1368] sm:$0xff]
    %v712 = vld [vmem:[#allocation2 + $0x1370] sm:$0xff]
    %v713 = vld [vmem:[#allocation2 + $0x1378] sm:$0xff]
    %v714 = vld [vmem:[#allocation2 + $0x1380] sm:$0xff]
    %v715 = vld [vmem:[#allocation2 + $0x1388] sm:$0xff]
    %v716 = vld [vmem:[#allocation2 + $0x1390] sm:$0xff]
    %v717 = vld [vmem:[#allocation2 + $0x1398] sm:$0xff]
    %v718 = vld [vmem:[#allocation2 + $0x13a0] sm:$0xff]
    %v719 = vld [vmem:[#allocation2 + $0x13a8] sm:$0xff]
    %v720 = vld [vmem:[#allocation2 + $0x13b0] sm:$0xff]
    %v721 = vld [vmem:[#allocation2 + $0x13b8] sm:$0xff]
    %v722 = vld [vmem:[#allocation2 + $0x13c0] sm:$0xff]
    %v723 = vld [vmem:[#allocation2 + $0x13c8] sm:$0xff]
    %v724 = vld [vmem:[#allocation2 + $0x13d0] sm:$0xff]
    %v725 = vld [vmem:[#allocation2 + $0x13d8] sm:$0xff]
    %v726 = vld [vmem:[#allocation2 + $0x13e0] sm:$0xff]
    %v727 = vld [vmem:[#allocation2 + $0x13e8] sm:$0xff]
    %v728 = vld [vmem:[#allocation2 + $0x13f0] sm:$0xff]
    %v729 = vld [vmem:[#allocation2 + $0x13f8] sm:$0xff]
    %v730 = vld [vmem:[#allocation2 + $0x1400] sm:$0xff]
    %v731 = vld [vmem:[#allocation2 + $0x1408] sm:$0xff]
    %v732 = vld [vmem:[#allocation2 + $0x1410] sm:$0xff]
    %v733 = vld [vmem:[#allocation2 + $0x1418] sm:$0xff]
    %v734 = vld [vmem:[#allocation2 + $0x1420] sm:$0xff]
    %v735 = vld [vmem:[#allocation2 + $0x1428] sm:$0xff]
    %v736 = vld [vmem:[#allocation2 + $0x1430] sm:$0xff]
    %v737 = vld [vmem:[#allocation2 + $0x1438] sm:$0xff]
    %v738 = vld [vmem:[#allocation2 + $0x1440] sm:$0xff]
    %v739 = vld [vmem:[#allocation2 + $0x1448] sm:$0xff]
    %v740 = vld [vmem:[#allocation2 + $0x1450] sm:$0xff]
    %v741 = vld [vmem:[#allocation2 + $0x1458] sm:$0xff]
    %v742 = vld [vmem:[#allocation2 + $0x1460] sm:$0xff]
    %v743 = vld [vmem:[#allocation2 + $0x1468] sm:$0xff]
    %v744 = vld [vmem:[#allocation2 + $0x1470] sm:$0xff]
    %v745 = vld [vmem:[#allocation2 + $0x1478] sm:$0xff]
    %v746 = vld [vmem:[#allocation2 + $0x1480] sm:$0xff]
    %v747 = vld [vmem:[#allocation2 + $0x1488] sm:$0xff]
    %v748 = vld [vmem:[#allocation2 + $0x1490] sm:$0xff]
    %v749 = vld [vmem:[#allocation2 + $0x1498] sm:$0xff]
    %v750 = vld [vmem:[#allocation2 + $0x14a0] sm:$0xff]
    %v751 = vld [vmem:[#allocation2 + $0x14a8] sm:$0xff]
    %v752 = vld [vmem:[#allocation2 + $0x14b0] sm:$0xff]
    %v753 = vld [vmem:[#allocation2 + $0x14b8] sm:$0xff]
    %v754 = vld [vmem:[#allocation2 + $0x14c0] sm:$0xff]
    %v755 = vld [vmem:[#allocation2 + $0x14c8] sm:$0xff]
    %v756 = vld [vmem:[#allocation2 + $0x14d0] sm:$0xff]
    %v757 = vld [vmem:[#allocation2 + $0x14d8] sm:$0xff]
    %v758 = vld [vmem:[#allocation2 + $0x14e0] sm:$0xff]
    %v759 = vld [vmem:[#allocation2 + $0x14e8] sm:$0xff]
    %v760 = vld [vmem:[#allocation2 + $0x14f0] sm:$0xff]
    %v761 = vld [vmem:[#allocation2 + $0x14f8] sm:$0xff]
    %v762 = vld [vmem:[#allocation2 + $0x1500] sm:$0xff]
    %v763 = vld [vmem:[#allocation2 + $0x1508] sm:$0xff]
    %v764 = vld [vmem:[#allocation2 + $0x1510] sm:$0xff]
    %v765 = vld [vmem:[#allocation2 + $0x1518] sm:$0xff]
    %v766 = vld [vmem:[#allocation2 + $0x1520] sm:$0xff]
    %v767 = vld [vmem:[#allocation2 + $0x1528] sm:$0xff]
    %v768 = vld [vmem:[#allocation2 + $0x1530] sm:$0xff]
    %v769 = vld [vmem:[#allocation2 + $0x1538] sm:$0xff]
    %v770 = vld [vmem:[#allocation2 + $0x1540] sm:$0xff]
    %v771 = vld [vmem:[#allocation2 + $0x1548] sm:$0xff]
    %v772 = vld [vmem:[#allocation2 + $0x1550] sm:$0xff]
    %v773 = vld [vmem:[#allocation2 + $0x1558] sm:$0xff]
    %v774 = vld [vmem:[#allocation2 + $0x1560] sm:$0xff]
    %v775 = vld [vmem:[#allocation2 + $0x1568] sm:$0xff]
    %v776 = vld [vmem:[#allocation2 + $0x1570] sm:$0xff]
    %v777 = vld [vmem:[#allocation2 + $0x1578] sm:$0xff]
    %v778 = vld [vmem:[#allocation2 + $0x1580] sm:$0xff]
    %v779 = vld [vmem:[#allocation2 + $0x1588] sm:$0xff]
    %v780 = vld [vmem:[#allocation2 + $0x1590] sm:$0xff]
    %v781 = vld [vmem:[#allocation2 + $0x1598] sm:$0xff]
    %v782 = vld [vmem:[#allocation2 + $0x15a0] sm:$0xff]
    %v783 = vld [vmem:[#allocation2 + $0x15a8] sm:$0xff]
    %v784 = vld [vmem:[#allocation2 + $0x15b0] sm:$0xff]
    %v785 = vld [vmem:[#allocation2 + $0x15b8] sm:$0xff]
    %v786 = vld [vmem:[#allocation2 + $0x15c0] sm:$0xff]
    %v787 = vld [vmem:[#allocation2 + $0x15c8] sm:$0xff]
    %v788 = vld [vmem:[#allocation2 + $0x15d0] sm:$0xff]
    %v789 = vld [vmem:[#allocation2 + $0x15d8] sm:$0xff]
    %v790 = vld [vmem:[#allocation2 + $0x15e0] sm:$0xff]
    %v791 = vld [vmem:[#allocation2 + $0x15e8] sm:$0xff]
    %v792 = vld [vmem:[#allocation2 + $0x15f0] sm:$0xff]
    %v793 = vld [vmem:[#allocation2 + $0x15f8] sm:$0xff]
    %v794 = vld [vmem:[#allocation2 + $0x1600] sm:$0xff]
    %v795 = vld [vmem:[#allocation2 + $0x1608] sm:$0xff]
    %v796 = vld [vmem:[#allocation2 + $0x1610] sm:$0xff]
    %v797 = vld [vmem:[#allocation2 + $0x1618] sm:$0xff]
    %v798 = vld [vmem:[#allocation2 + $0x1620] sm:$0xff]
    %v799 = vld [vmem:[#allocation2 + $0x1628] sm:$0xff]
    %v800 = vld [vmem:[#allocation2 + $0x1630] sm:$0xff]
    %v801 = vld [vmem:[#allocation2 + $0x1638] sm:$0xff]
    %v802 = vld [vmem:[#allocation2 + $0x1640] sm:$0xff]
    %v803 = vld [vmem:[#allocation2 + $0x1648] sm:$0xff]
    %v804 = vld [vmem:[#allocation2 + $0x1650] sm:$0xff]
    %v805 = vld [vmem:[#allocation2 + $0x1658] sm:$0xff]
    %v806 = vld [vmem:[#allocation2 + $0x1660] sm:$0xff]
    %v807 = vld [vmem:[#allocation2 + $0x1668] sm:$0xff]
    %v808 = vld [vmem:[#allocation2 + $0x1670] sm:$0xff]
    %v809 = vld [vmem:[#allocation2 + $0x1678] sm:$0xff]
    %v810 = vld [vmem:[#allocation2 + $0x1680] sm:$0xff]
    %v811 = vld [vmem:[#allocation2 + $0x1688] sm:$0xff]
    %v812 = vld [vmem:[#allocation2 + $0x1690] sm:$0xff]
    %v813 = vld [vmem:[#allocation2 + $0x1698] sm:$0xff]
    %v814 = vld [vmem:[#allocation2 + $0x16a0] sm:$0xff]
    %v815 = vld [vmem:[#allocation2 + $0x16a8] sm:$0xff]
    %v816 = vld [vmem:[#allocation2 + $0x16b0] sm:$0xff]
    %v817 = vld [vmem:[#allocation2 + $0x16b8] sm:$0xff]
    %v818 = vld [vmem:[#allocation2 + $0x16c0] sm:$0xff]
    %v819 = vld [vmem:[#allocation2 + $0x16c8] sm:$0xff]
    %v820 = vld [vmem:[#allocation2 + $0x16d0] sm:$0xff]
    %v821 = vld [vmem:[#allocation2 + $0x16d8] sm:$0xff]
    %v822 = vld [vmem:[#allocation2 + $0x16e0] sm:$0xff]
    %v823 = vld [vmem:[#allocation2 + $0x16e8] sm:$0xff]
    %v824 = vld [vmem:[#allocation2 + $0x16f0] sm:$0xff]
    %v825 = vld [vmem:[#allocation2 + $0x16f8] sm:$0xff]
    %v826 = vld [vmem:[#allocation2 + $0x1700] sm:$0xff]
    %v827 = vld [vmem:[#allocation2 + $0x1708] sm:$0xff]
    %v828 = vld [vmem:[#allocation2 + $0x1710] sm:$0xff]
    %v829 = vld [vmem:[#allocation2 + $0x1718] sm:$0xff]
    %v830 = vld [vmem:[#allocation2 + $0x1720] sm:$0xff]
    %v831 = vld [vmem:[#allocation2 + $0x1728] sm:$0xff]
    %v832 = vld [vmem:[#allocation2 + $0x1730] sm:$0xff]
    %v833 = vld [vmem:[#allocation2 + $0x1738] sm:$0xff]
    %v834 = vld [vmem:[#allocation2 + $0x1740] sm:$0xff]
    %v835 = vld [vmem:[#allocation2 + $0x1748] sm:$0xff]
    %v836 = vld [vmem:[#allocation2 + $0x1750] sm:$0xff]
    %v837 = vld [vmem:[#allocation2 + $0x1758] sm:$0xff]
    %v838 = vld [vmem:[#allocation2 + $0x1760] sm:$0xff]
    %v839 = vld [vmem:[#allocation2 + $0x1768] sm:$0xff]
    %v840 = vld [vmem:[#allocation2 + $0x1770] sm:$0xff]
    %v841 = vld [vmem:[#allocation2 + $0x1778] sm:$0xff]
    %v842 = vld [vmem:[#allocation2 + $0x1780] sm:$0xff]
    %v843 = vld [vmem:[#allocation2 + $0x1788] sm:$0xff]
    %v844 = vld [vmem:[#allocation2 + $0x1790] sm:$0xff]
    %v845 = vld [vmem:[#allocation2 + $0x1798] sm:$0xff]
    %v846 = vld [vmem:[#allocation2 + $0x17a0] sm:$0xff]
    %v847 = vld [vmem:[#allocation2 + $0x17a8] sm:$0xff]
    %v848 = vld [vmem:[#allocation2 + $0x17b0] sm:$0xff]
    %v849 = vld [vmem:[#allocation2 + $0x17b8] sm:$0xff]
    %v850 = vld [vmem:[#allocation2 + $0x17c0] sm:$0xff]
    %v851 = vld [vmem:[#allocation2 + $0x17c8] sm:$0xff]
    %v852 = vld [vmem:[#allocation2 + $0x17d0] sm:$0xff]
    %v853 = vld [vmem:[#allocation2 + $0x17d8] sm:$0xff]
    %v854 = vld [vmem:[#allocation2 + $0x17e0] sm:$0xff]
    %v855 = vld [vmem:[#allocation2 + $0x17e8] sm:$0xff]
    %v856 = vld [vmem:[#allocation2 + $0x17f0] sm:$0xff]
    %v857 = vld [vmem:[#allocation2 + $0x17f8] sm:$0xff]
    %v858 = vld [vmem:[#allocation2 + $0x1800] sm:$0xff]
    %v859 = vld [vmem:[#allocation2 + $0x1808] sm:$0xff]
    %v860 = vld [vmem:[#allocation2 + $0x1810] sm:$0xff]
    %v861 = vld [vmem:[#allocation2 + $0x1818] sm:$0xff]
    %v862 = vld [vmem:[#allocation2 + $0x1820] sm:$0xff]
    %v863 = vld [vmem:[#allocation2 + $0x1828] sm:$0xff]
    %v864 = vld [vmem:[#allocation2 + $0x1830] sm:$0xff]
    %v865 = vld [vmem:[#allocation2 + $0x1838] sm:$0xff]
    %v866 = vld [vmem:[#allocation2 + $0x1840] sm:$0xff]
    %v867 = vld [vmem:[#allocation2 + $0x1848] sm:$0xff]
    %v868 = vld [vmem:[#allocation2 + $0x1850] sm:$0xff]
    %v869 = vld [vmem:[#allocation2 + $0x1858] sm:$0xff]
    %v870 = vld [vmem:[#allocation2 + $0x1860] sm:$0xff]
    %v871 = vld [vmem:[#allocation2 + $0x1868] sm:$0xff]
    %v872 = vld [vmem:[#allocation2 + $0x1870] sm:$0xff]
    %v873 = vld [vmem:[#allocation2 + $0x1878] sm:$0xff]
    %v874 = vld [vmem:[#allocation2 + $0x1880] sm:$0xff]
    %v875 = vld [vmem:[#allocation2 + $0x1888] sm:$0xff]
    %v876 = vld [vmem:[#allocation2 + $0x1890] sm:$0xff]
    %v877 = vld [vmem:[#allocation2 + $0x1898] sm:$0xff]
    %v878 = vld [vmem:[#allocation2 + $0x18a0] sm:$0xff]
    %v879 = vld [vmem:[#allocation2 + $0x18a8] sm:$0xff]
    %v880 = vld [vmem:[#allocation2 + $0x18b0] sm:$0xff]
    %v881 = vld [vmem:[#allocation2 + $0x18b8] sm:$0xff]
    %v882 = vld [vmem:[#allocation2 + $0x18c0] sm:$0xff]
    %v883 = vld [vmem:[#allocation2 + $0x18c8] sm:$0xff]
    %v884 = vld [vmem:[#allocation2 + $0x18d0] sm:$0xff]
    %v885 = vld [vmem:[#allocation2 + $0x18d8] sm:$0xff]
    %v886 = vld [vmem:[#allocation2 + $0x18e0] sm:$0xff]
    %v887 = vld [vmem:[#allocation2 + $0x18e8] sm:$0xff]
    %v888 = vld [vmem:[#allocation2 + $0x18f0] sm:$0xff]
    %v889 = vld [vmem:[#allocation2 + $0x18f8] sm:$0xff]
    %v890 = vld [vmem:[#allocation4] sm:$0x3]
    %v892 = vlaneseq
    %v893 = vshrl.u32 %v892, 7
    %v894 = vsub.s32 0, %v893
    %v895 = vrot.slane %v890, %v894
    %v896 = vlaneseq
    %v897 = vshrl.u32 %v896, 7
    %v898 = vsub.s32 1, %v897
    %v899 = vrot.slane %v890, %v898
    %v952 = vunpack.c.l.b16 %v40
    %v953 = vunpack.c.h.b16 %v40
    %v954 = vunpack.c.l.b16 %v41
    %v955 = vunpack.c.h.b16 %v41
    %v956 = vunpack.c.l.b16 %v42
    %v957 = vunpack.c.h.b16 %v42
    %v958 = vunpack.c.l.b16 %v43
    %v959 = vunpack.c.h.b16 %v43
    %v960 = vunpack.c.l.b16 %v44
    %v961 = vunpack.c.h.b16 %v44
    %v962 = vunpack.c.l.b16 %v45
    %v963 = vunpack.c.h.b16 %v45
    %v964 = vunpack.c.l.b16 %v46
    %v965 = vunpack.c.h.b16 %v46
    %v966 = vunpack.c.l.b16 %v47
    %v967 = vunpack.c.h.b16 %v47
    %v968 = vunpack.c.l.b16 %v48
    %v969 = vunpack.c.h.b16 %v48
    %v970 = vunpack.c.l.b16 %v49
    %v971 = vunpack.c.h.b16 %v49
    %v972 = vunpack.c.l.b16 %v50
    %v973 = vunpack.c.h.b16 %v50
    %v974 = vunpack.c.l.b16 %v51
    %v975 = vunpack.c.h.b16 %v51
    %v976 = vunpack.c.l.b16 %v52
    %v977 = vunpack.c.h.b16 %v52
    %v978 = vunpack.c.l.b16 %v53
    %v979 = vunpack.c.h.b16 %v53
    %v980 = vunpack.c.l.b16 %v54
    %v981 = vunpack.c.h.b16 %v54
    %v982 = vunpack.c.l.b16 %v55
    %v983 = vunpack.c.h.b16 %v55
    %v984 = vunpack.c.l.b16 %v56
    %v985 = vunpack.c.h.b16 %v56
    %v986 = vunpack.c.l.b16 %v57
    %v987 = vunpack.c.h.b16 %v57
    %v988 = vunpack.c.l.b16 %v58
    %v989 = vunpack.c.h.b16 %v58
    %v990 = vunpack.c.l.b16 %v59
    %v991 = vunpack.c.h.b16 %v59
    %v992 = vunpack.c.l.b16 %v60
    %v993 = vunpack.c.h.b16 %v60
    %v994 = vunpack.c.l.b16 %v61
    %v995 = vunpack.c.h.b16 %v61
    %v996 = vunpack.c.l.b16 %v62
    %v997 = vunpack.c.h.b16 %v62
    %v998 = vunpack.c.l.b16 %v63
    %v999 = vunpack.c.h.b16 %v63
    %v1000 = vunpack.c.l.b16 %v64
    %v1001 = vunpack.c.h.b16 %v64
    %v1002 = vunpack.c.l.b16 %v65
    %v1003 = vunpack.c.h.b16 %v65
    %v1004 = vunpack.c.l.b16 %v66
    %v1005 = vunpack.c.h.b16 %v66
    %v1006 = vunpack.c.l.b16 %v67
    %v1007 = vunpack.c.h.b16 %v67
    %v1008 = vunpack.c.l.b16 %v68
    %v1009 = vunpack.c.h.b16 %v68
    %v1010 = vunpack.c.l.b16 %v69
    %v1011 = vunpack.c.h.b16 %v69
    %v1012 = vunpack.c.l.b16 %v70
    %v1013 = vunpack.c.h.b16 %v70
    %v1014 = vunpack.c.l.b16 %v71
    %v1015 = vunpack.c.h.b16 %v71
    %v1016 = vunpack.c.l.b16 %v72
    %v1017 = vunpack.c.h.b16 %v72
    %v1018 = vunpack.c.l.b16 %v73
    %v1019 = vunpack.c.h.b16 %v73
    %v1020 = vunpack.c.l.b16 %v74
    %v1021 = vunpack.c.h.b16 %v74
    %v1022 = vunpack.c.l.b16 %v75
    %v1023 = vunpack.c.h.b16 %v75
    %v1024 = vunpack.c.l.b16 %v76
    %v1025 = vunpack.c.h.b16 %v76
    %v1026 = vunpack.c.l.b16 %v77
    %v1027 = vunpack.c.h.b16 %v77
    %v1028 = vunpack.c.l.b16 %v78
    %v1029 = vunpack.c.h.b16 %v78
    %v1030 = vunpack.c.l.b16 %v79
    %v1031 = vunpack.c.h.b16 %v79
    %v1032 = vunpack.c.l.b16 %v80
    %v1033 = vunpack.c.h.b16 %v80
    %v1034 = vunpack.c.l.b16 %v81
    %v1035 = vunpack.c.h.b16 %v81
    %v1036 = vunpack.c.l.b16 %v82
    %v1037 = vunpack.c.h.b16 %v82
    %v1038 = vunpack.c.l.b16 %v83
    %v1039 = vunpack.c.h.b16 %v83
    %v1040 = vunpack.c.l.b16 %v84
    %v1041 = vunpack.c.h.b16 %v84
    %v1042 = vunpack.c.l.b16 %v85
    %v1043 = vunpack.c.h.b16 %v85
    %v1044 = vunpack.c.l.b16 %v86
    %v1045 = vunpack.c.h.b16 %v86
    %v1046 = vunpack.c.l.b16 %v87
    %v1047 = vunpack.c.h.b16 %v87
    %v1048 = vunpack.c.l.b16 %v88
    %v1049 = vunpack.c.h.b16 %v88
    %v1050 = vunpack.c.l.b16 %v89
    %v1051 = vunpack.c.h.b16 %v89
    %v1052 = vpack.c.b16 %v1002, %v952
    %v1053 = vpack.c.b16 %v1003, %v953
    %v1054 = vpack.c.b16 %v1004, %v954
    %v1055 = vpack.c.b16 %v1005, %v955
    %v1056 = vpack.c.b16 %v1006, %v956
    %v1057 = vpack.c.b16 %v1007, %v957
    %v1058 = vpack.c.b16 %v1008, %v958
    %v1059 = vpack.c.b16 %v1009, %v959
    %v1060 = vpack.c.b16 %v1010, %v960
    %v1061 = vpack.c.b16 %v1011, %v961
    %v1062 = vpack.c.b16 %v1012, %v962
    %v1063 = vpack.c.b16 %v1013, %v963
    %v1064 = vpack.c.b16 %v1014, %v964
    %v1065 = vpack.c.b16 %v1015, %v965
    %v1066 = vpack.c.b16 %v1016, %v966
    %v1067 = vpack.c.b16 %v1017, %v967
    %v1068 = vpack.c.b16 %v1018, %v968
    %v1069 = vpack.c.b16 %v1019, %v969
    %v1070 = vpack.c.b16 %v1020, %v970
    %v1071 = vpack.c.b16 %v1021, %v971
    %v1072 = vpack.c.b16 %v1022, %v972
    %v1073 = vpack.c.b16 %v1023, %v973
    %v1074 = vpack.c.b16 %v1024, %v974
    %v1075 = vpack.c.b16 %v1025, %v975
    %v1076 = vpack.c.b16 %v1026, %v976
    %v1077 = vpack.c.b16 %v1027, %v977
    %v1078 = vpack.c.b16 %v1028, %v978
    %v1079 = vpack.c.b16 %v1029, %v979
    %v1080 = vpack.c.b16 %v1030, %v980
    %v1081 = vpack.c.b16 %v1031, %v981
    %v1082 = vpack.c.b16 %v1032, %v982
    %v1083 = vpack.c.b16 %v1033, %v983
    %v1084 = vpack.c.b16 %v1034, %v984
    %v1085 = vpack.c.b16 %v1035, %v985
    %v1086 = vpack.c.b16 %v1036, %v986
    %v1087 = vpack.c.b16 %v1037, %v987
    %v1088 = vpack.c.b16 %v1038, %v988
    %v1089 = vpack.c.b16 %v1039, %v989
    %v1090 = vpack.c.b16 %v1040, %v990
    %v1091 = vpack.c.b16 %v1041, %v991
    %v1092 = vpack.c.b16 %v1042, %v992
    %v1093 = vpack.c.b16 %v1043, %v993
    %v1094 = vpack.c.b16 %v1044, %v994
    %v1095 = vpack.c.b16 %v1045, %v995
    %v1096 = vpack.c.b16 %v1046, %v996
    %v1097 = vpack.c.b16 %v1047, %v997
    %v1098 = vpack.c.b16 %v1048, %v998
    %v1099 = vpack.c.b16 %v1049, %v999
    %v1100 = vpack.c.b16 %v1050, %v1000
    %v1101 = vpack.c.b16 %v1051, %v1001
    %v1952 = vunpack.c.l.b16 %v90
    %v1953 = vunpack.c.h.b16 %v90
    %v1954 = vunpack.c.l.b16 %v91
    %v1955 = vunpack.c.h.b16 %v91
    %v1956 = vunpack.c.l.b16 %v92
    %v1957 = vunpack.c.h.b16 %v92
    %v1958 = vunpack.c.l.b16 %v93
    %v1959 = vunpack.c.h.b16 %v93
    %v1960 = vunpack.c.l.b16 %v94
    %v1961 = vunpack.c.h.b16 %v94
    %v1962 = vunpack.c.l.b16 %v95
    %v1963 = vunpack.c.h.b16 %v95
    %v1964 = vunpack.c.l.b16 %v96
    %v1965 = vunpack.c.h.b16 %v96
    %v1966 = vunpack.c.l.b16 %v97
    %v1967 = vunpack.c.h.b16 %v97
    %v1968 = vunpack.c.l.b16 %v98
    %v1969 = vunpack.c.h.b16 %v98
    %v1970 = vunpack.c.l.b16 %v99
    %v1971 = vunpack.c.h.b16 %v99
    %v1972 = vunpack.c.l.b16 %v100
    %v1973 = vunpack.c.h.b16 %v100
    %v1974 = vunpack.c.l.b16 %v101
    %v1975 = vunpack.c.h.b16 %v101
    %v1976 = vunpack.c.l.b16 %v102
    %v1977 = vunpack.c.h.b16 %v102
    %v1978 = vunpack.c.l.b16 %v103
    %v1979 = vunpack.c.h.b16 %v103
    %v1980 = vunpack.c.l.b16 %v104
    %v1981 = vunpack.c.h.b16 %v104
    %v1982 = vunpack.c.l.b16 %v105
    %v1983 = vunpack.c.h.b16 %v105
    %v1984 = vunpack.c.l.b16 %v106
    %v1985 = vunpack.c.h.b16 %v106
    %v1986 = vunpack.c.l.b16 %v107
    %v1987 = vunpack.c.h.b16 %v107
    %v1988 = vunpack.c.l.b16 %v108
    %v1989 = vunpack.c.h.b16 %v108
    %v1990 = vunpack.c.l.b16 %v109
    %v1991 = vunpack.c.h.b16 %v109
    %v1992 = vunpack.c.l.b16 %v110
    %v1993 = vunpack.c.h.b16 %v110
    %v1994 = vunpack.c.l.b16 %v111
    %v1995 = vunpack.c.h.b16 %v111
    %v1996 = vunpack.c.l.b16 %v112
    %v1997 = vunpack.c.h.b16 %v112
    %v1998 = vunpack.c.l.b16 %v113
    %v1999 = vunpack.c.h.b16 %v113
    %v2000 = vunpack.c.l.b16 %v114
    %v2001 = vunpack.c.h.b16 %v114
    %v2002 = vunpack.c.l.b16 %v115
    %v2003 = vunpack.c.h.b16 %v115
    %v2004 = vunpack.c.l.b16 %v116
    %v2005 = vunpack.c.h.b16 %v116
    %v2006 = vunpack.c.l.b16 %v117
    %v2007 = vunpack.c.h.b16 %v117
    %v2008 = vunpack.c.l.b16 %v118
    %v2009 = vunpack.c.h.b16 %v118
    %v2010 = vunpack.c.l.b16 %v119
    %v2011 = vunpack.c.h.b16 %v119
    %v2012 = vunpack.c.l.b16 %v120
    %v2013 = vunpack.c.h.b16 %v120
    %v2014 = vunpack.c.l.b16 %v121
    %v2015 = vunpack.c.h.b16 %v121
    %v2016 = vunpack.c.l.b16 %v122
    %v2017 = vunpack.c.h.b16 %v122
    %v2018 = vunpack.c.l.b16 %v123
    %v2019 = vunpack.c.h.b16 %v123
    %v2020 = vunpack.c.l.b16 %v124
    %v2021 = vunpack.c.h.b16 %v124
    %v2022 = vunpack.c.l.b16 %v125
    %v2023 = vunpack.c.h.b16 %v125
    %v2024 = vunpack.c.l.b16 %v126
    %v2025 = vunpack.c.h.b16 %v126
    %v2026 = vunpack.c.l.b16 %v127
    %v2027 = vunpack.c.h.b16 %v127
    %v2028 = vunpack.c.l.b16 %v128
    %v2029 = vunpack.c.h.b16 %v128
    %v2030 = vunpack.c.l.b16 %v129
    %v2031 = vunpack.c.h.b16 %v129
    %v2032 = vunpack.c.l.b16 %v130
    %v2033 = vunpack.c.h.b16 %v130
    %v2034 = vunpack.c.l.b16 %v131
    %v2035 = vunpack.c.h.b16 %v131
    %v2036 = vunpack.c.l.b16 %v132
    %v2037 = vunpack.c.h.b16 %v132
    %v2038 = vunpack.c.l.b16 %v133
    %v2039 = vunpack.c.h.b16 %v133
    %v2040 = vunpack.c.l.b16 %v134
    %v2041 = vunpack.c.h.b16 %v134
    %v2042 = vunpack.c.l.b16 %v135
    %v2043 = vunpack.c.h.b16 %v135
    %v2044 = vunpack.c.l.b16 %v136
    %v2045 = vunpack.c.h.b16 %v136
    %v2046 = vunpack.c.l.b16 %v137
    %v2047 = vunpack.c.h.b16 %v137
    %v2048 = vunpack.c.l.b16 %v138
    %v2049 = vunpack.c.h.b16 %v138
    %v2050 = vunpack.c.l.b16 %v139
    %v2051 = vunpack.c.h.b16 %v139
    %v2052 = vunpack.c.l.b16 %v140
    %v2053 = vunpack.c.h.b16 %v140
    %v2054 = vunpack.c.l.b16 %v141
    %v2055 = vunpack.c.h.b16 %v141
    %v2056 = vunpack.c.l.b16 %v142
    %v2057 = vunpack.c.h.b16 %v142
    %v2058 = vunpack.c.l.b16 %v143
    %v2059 = vunpack.c.h.b16 %v143
    %v2060 = vunpack.c.l.b16 %v144
    %v2061 = vunpack.c.h.b16 %v144
    %v2062 = vunpack.c.l.b16 %v145
    %v2063 = vunpack.c.h.b16 %v145
    %v2064 = vunpack.c.l.b16 %v146
    %v2065 = vunpack.c.h.b16 %v146
    %v2066 = vunpack.c.l.b16 %v147
    %v2067 = vunpack.c.h.b16 %v147
    %v2068 = vunpack.c.l.b16 %v148
    %v2069 = vunpack.c.h.b16 %v148
    %v2070 = vunpack.c.l.b16 %v149
    %v2071 = vunpack.c.h.b16 %v149
    %v2072 = vunpack.c.l.b16 %v150
    %v2073 = vunpack.c.h.b16 %v150
    %v2074 = vunpack.c.l.b16 %v151
    %v2075 = vunpack.c.h.b16 %v151
    %v2076 = vunpack.c.l.b16 %v152
    %v2077 = vunpack.c.h.b16 %v152
    %v2078 = vunpack.c.l.b16 %v153
    %v2079 = vunpack.c.h.b16 %v153
    %v2080 = vunpack.c.l.b16 %v154
    %v2081 = vunpack.c.h.b16 %v154
    %v2082 = vunpack.c.l.b16 %v155
    %v2083 = vunpack.c.h.b16 %v155
    %v2084 = vunpack.c.l.b16 %v156
    %v2085 = vunpack.c.h.b16 %v156
    %v2086 = vunpack.c.l.b16 %v157
    %v2087 = vunpack.c.h.b16 %v157
    %v2088 = vunpack.c.l.b16 %v158
    %v2089 = vunpack.c.h.b16 %v158
    %v2090 = vunpack.c.l.b16 %v159
    %v2091 = vunpack.c.h.b16 %v159
    %v2092 = vunpack.c.l.b16 %v160
    %v2093 = vunpack.c.h.b16 %v160
    %v2094 = vunpack.c.l.b16 %v161
    %v2095 = vunpack.c.h.b16 %v161
    %v2096 = vunpack.c.l.b16 %v162
    %v2097 = vunpack.c.h.b16 %v162
    %v2098 = vunpack.c.l.b16 %v163
    %v2099 = vunpack.c.h.b16 %v163
    %v2100 = vunpack.c.l.b16 %v164
    %v2101 = vunpack.c.h.b16 %v164
    %v2102 = vunpack.c.l.b16 %v165
    %v2103 = vunpack.c.h.b16 %v165
    %v2104 = vunpack.c.l.b16 %v166
    %v2105 = vunpack.c.h.b16 %v166
    %v2106 = vunpack.c.l.b16 %v167
    %v2107 = vunpack.c.h.b16 %v167
    %v2108 = vunpack.c.l.b16 %v168
    %v2109 = vunpack.c.h.b16 %v168
    %v2110 = vunpack.c.l.b16 %v169
    %v2111 = vunpack.c.h.b16 %v169
    %v2112 = vunpack.c.l.b16 %v170
    %v2113 = vunpack.c.h.b16 %v170
    %v2114 = vunpack.c.l.b16 %v171
    %v2115 = vunpack.c.h.b16 %v171
    %v2116 = vunpack.c.l.b16 %v172
    %v2117 = vunpack.c.h.b16 %v172
    %v2118 = vunpack.c.l.b16 %v173
    %v2119 = vunpack.c.h.b16 %v173
    %v2120 = vunpack.c.l.b16 %v174
    %v2121 = vunpack.c.h.b16 %v174
    %v2122 = vunpack.c.l.b16 %v175
    %v2123 = vunpack.c.h.b16 %v175
    %v2124 = vunpack.c.l.b16 %v176
    %v2125 = vunpack.c.h.b16 %v176
    %v2126 = vunpack.c.l.b16 %v177
    %v2127 = vunpack.c.h.b16 %v177
    %v2128 = vunpack.c.l.b16 %v178
    %v2129 = vunpack.c.h.b16 %v178
    %v2130 = vunpack.c.l.b16 %v179
    %v2131 = vunpack.c.h.b16 %v179
    %v2132 = vunpack.c.l.b16 %v180
    %v2133 = vunpack.c.h.b16 %v180
    %v2134 = vunpack.c.l.b16 %v181
    %v2135 = vunpack.c.h.b16 %v181
    %v2136 = vunpack.c.l.b16 %v182
    %v2137 = vunpack.c.h.b16 %v182
    %v2138 = vunpack.c.l.b16 %v183
    %v2139 = vunpack.c.h.b16 %v183
    %v2140 = vunpack.c.l.b16 %v184
    %v2141 = vunpack.c.h.b16 %v184
    %v2142 = vunpack.c.l.b16 %v185
    %v2143 = vunpack.c.h.b16 %v185
    %v2144 = vunpack.c.l.b16 %v186
    %v2145 = vunpack.c.h.b16 %v186
    %v2146 = vunpack.c.l.b16 %v187
    %v2147 = vunpack.c.h.b16 %v187
    %v2148 = vunpack.c.l.b16 %v188
    %v2149 = vunpack.c.h.b16 %v188
    %v2150 = vunpack.c.l.b16 %v189
    %v2151 = vunpack.c.h.b16 %v189
    %v2152 = vunpack.c.l.b16 %v190
    %v2153 = vunpack.c.h.b16 %v190
    %v2154 = vunpack.c.l.b16 %v191
    %v2155 = vunpack.c.h.b16 %v191
    %v2156 = vunpack.c.l.b16 %v192
    %v2157 = vunpack.c.h.b16 %v192
    %v2158 = vunpack.c.l.b16 %v193
    %v2159 = vunpack.c.h.b16 %v193
    %v2160 = vunpack.c.l.b16 %v194
    %v2161 = vunpack.c.h.b16 %v194
    %v2162 = vunpack.c.l.b16 %v195
    %v2163 = vunpack.c.h.b16 %v195
    %v2164 = vunpack.c.l.b16 %v196
    %v2165 = vunpack.c.h.b16 %v196
    %v2166 = vunpack.c.l.b16 %v197
    %v2167 = vunpack.c.h.b16 %v197
    %v2168 = vunpack.c.l.b16 %v198
    %v2169 = vunpack.c.h.b16 %v198
    %v2170 = vunpack.c.l.b16 %v199
    %v2171 = vunpack.c.h.b16 %v199
    %v2172 = vunpack.c.l.b16 %v200
    %v2173 = vunpack.c.h.b16 %v200
    %v2174 = vunpack.c.l.b16 %v201
    %v2175 = vunpack.c.h.b16 %v201
    %v2176 = vunpack.c.l.b16 %v202
    %v2177 = vunpack.c.h.b16 %v202
    %v2178 = vunpack.c.l.b16 %v203
    %v2179 = vunpack.c.h.b16 %v203
    %v2180 = vunpack.c.l.b16 %v204
    %v2181 = vunpack.c.h.b16 %v204
    %v2182 = vunpack.c.l.b16 %v205
    %v2183 = vunpack.c.h.b16 %v205
    %v2184 = vunpack.c.l.b16 %v206
    %v2185 = vunpack.c.h.b16 %v206
    %v2186 = vunpack.c.l.b16 %v207
    %v2187 = vunpack.c.h.b16 %v207
    %v2188 = vunpack.c.l.b16 %v208
    %v2189 = vunpack.c.h.b16 %v208
    %v2190 = vunpack.c.l.b16 %v209
    %v2191 = vunpack.c.h.b16 %v209
    %v2192 = vunpack.c.l.b16 %v210
    %v2193 = vunpack.c.h.b16 %v210
    %v2194 = vunpack.c.l.b16 %v211
    %v2195 = vunpack.c.h.b16 %v211
    %v2196 = vunpack.c.l.b16 %v212
    %v2197 = vunpack.c.h.b16 %v212
    %v2198 = vunpack.c.l.b16 %v213
    %v2199 = vunpack.c.h.b16 %v213
    %v2200 = vunpack.c.l.b16 %v214
    %v2201 = vunpack.c.h.b16 %v214
    %v2202 = vunpack.c.l.b16 %v215
    %v2203 = vunpack.c.h.b16 %v215
    %v2204 = vunpack.c.l.b16 %v216
    %v2205 = vunpack.c.h.b16 %v216
    %v2206 = vunpack.c.l.b16 %v217
    %v2207 = vunpack.c.h.b16 %v217
    %v2208 = vunpack.c.l.b16 %v218
    %v2209 = vunpack.c.h.b16 %v218
    %v2210 = vunpack.c.l.b16 %v219
    %v2211 = vunpack.c.h.b16 %v219
    %v2212 = vunpack.c.l.b16 %v220
    %v2213 = vunpack.c.h.b16 %v220
    %v2214 = vunpack.c.l.b16 %v221
    %v2215 = vunpack.c.h.b16 %v221
    %v2216 = vunpack.c.l.b16 %v222
    %v2217 = vunpack.c.h.b16 %v222
    %v2218 = vunpack.c.l.b16 %v223
    %v2219 = vunpack.c.h.b16 %v223
    %v2220 = vunpack.c.l.b16 %v224
    %v2221 = vunpack.c.h.b16 %v224
    %v2222 = vunpack.c.l.b16 %v225
    %v2223 = vunpack.c.h.b16 %v225
    %v2224 = vunpack.c.l.b16 %v226
    %v2225 = vunpack.c.h.b16 %v226
    %v2226 = vunpack.c.l.b16 %v227
    %v2227 = vunpack.c.h.b16 %v227
    %v2228 = vunpack.c.l.b16 %v228
    %v2229 = vunpack.c.h.b16 %v228
    %v2230 = vunpack.c.l.b16 %v229
    %v2231 = vunpack.c.h.b16 %v229
    %v2232 = vunpack.c.l.b16 %v230
    %v2233 = vunpack.c.h.b16 %v230
    %v2234 = vunpack.c.l.b16 %v231
    %v2235 = vunpack.c.h.b16 %v231
    %v2236 = vunpack.c.l.b16 %v232
    %v2237 = vunpack.c.h.b16 %v232
    %v2238 = vunpack.c.l.b16 %v233
    %v2239 = vunpack.c.h.b16 %v233
    %v2240 = vunpack.c.l.b16 %v234
    %v2241 = vunpack.c.h.b16 %v234
    %v2242 = vunpack.c.l.b16 %v235
    %v2243 = vunpack.c.h.b16 %v235
    %v2244 = vunpack.c.l.b16 %v236
    %v2245 = vunpack.c.h.b16 %v236
    %v2246 = vunpack.c.l.b16 %v237
    %v2247 = vunpack.c.h.b16 %v237
    %v2248 = vunpack.c.l.b16 %v238
    %v2249 = vunpack.c.h.b16 %v238
    %v2250 = vunpack.c.l.b16 %v239
    %v2251 = vunpack.c.h.b16 %v239
    %v2252 = vunpack.c.l.b16 %v240
    %v2253 = vunpack.c.h.b16 %v240
    %v2254 = vunpack.c.l.b16 %v241
    %v2255 = vunpack.c.h.b16 %v241
    %v2256 = vunpack.c.l.b16 %v242
    %v2257 = vunpack.c.h.b16 %v242
    %v2258 = vunpack.c.l.b16 %v243
    %v2259 = vunpack.c.h.b16 %v243
    %v2260 = vunpack.c.l.b16 %v244
    %v2261 = vunpack.c.h.b16 %v244
    %v2262 = vunpack.c.l.b16 %v245
    %v2263 = vunpack.c.h.b16 %v245
    %v2264 = vunpack.c.l.b16 %v246
    %v2265 = vunpack.c.h.b16 %v246
    %v2266 = vunpack.c.l.b16 %v247
    %v2267 = vunpack.c.h.b16 %v247
    %v2268 = vunpack.c.l.b16 %v248
    %v2269 = vunpack.c.h.b16 %v248
    %v2270 = vunpack.c.l.b16 %v249
    %v2271 = vunpack.c.h.b16 %v249
    %v2272 = vunpack.c.l.b16 %v250
    %v2273 = vunpack.c.h.b16 %v250
    %v2274 = vunpack.c.l.b16 %v251
    %v2275 = vunpack.c.h.b16 %v251
    %v2276 = vunpack.c.l.b16 %v252
    %v2277 = vunpack.c.h.b16 %v252
    %v2278 = vunpack.c.l.b16 %v253
    %v2279 = vunpack.c.h.b16 %v253
    %v2280 = vunpack.c.l.b16 %v254
    %v2281 = vunpack.c.h.b16 %v254
    %v2282 = vunpack.c.l.b16 %v255
    %v2283 = vunpack.c.h.b16 %v255
    %v2284 = vunpack.c.l.b16 %v256
    %v2285 = vunpack.c.h.b16 %v256
    %v2286 = vunpack.c.l.b16 %v257
    %v2287 = vunpack.c.h.b16 %v257
    %v2288 = vunpack.c.l.b16 %v258
    %v2289 = vunpack.c.h.b16 %v258
    %v2290 = vunpack.c.l.b16 %v259
    %v2291 = vunpack.c.h.b16 %v259
    %v2292 = vunpack.c.l.b16 %v260
    %v2293 = vunpack.c.h.b16 %v260
    %v2294 = vunpack.c.l.b16 %v261
    %v2295 = vunpack.c.h.b16 %v261
    %v2296 = vunpack.c.l.b16 %v262
    %v2297 = vunpack.c.h.b16 %v262
    %v2298 = vunpack.c.l.b16 %v263
    %v2299 = vunpack.c.h.b16 %v263
    %v2300 = vunpack.c.l.b16 %v264
    %v2301 = vunpack.c.h.b16 %v264
    %v2302 = vunpack.c.l.b16 %v265
    %v2303 = vunpack.c.h.b16 %v265
    %v2304 = vunpack.c.l.b16 %v266
    %v2305 = vunpack.c.h.b16 %v266
    %v2306 = vunpack.c.l.b16 %v267
    %v2307 = vunpack.c.h.b16 %v267
    %v2308 = vunpack.c.l.b16 %v268
    %v2309 = vunpack.c.h.b16 %v268
    %v2310 = vunpack.c.l.b16 %v269
    %v2311 = vunpack.c.h.b16 %v269
    %v2312 = vunpack.c.l.b16 %v270
    %v2313 = vunpack.c.h.b16 %v270
    %v2314 = vunpack.c.l.b16 %v271
    %v2315 = vunpack.c.h.b16 %v271
    %v2316 = vunpack.c.l.b16 %v272
    %v2317 = vunpack.c.h.b16 %v272
    %v2318 = vunpack.c.l.b16 %v273
    %v2319 = vunpack.c.h.b16 %v273
    %v2320 = vunpack.c.l.b16 %v274
    %v2321 = vunpack.c.h.b16 %v274
    %v2322 = vunpack.c.l.b16 %v275
    %v2323 = vunpack.c.h.b16 %v275
    %v2324 = vunpack.c.l.b16 %v276
    %v2325 = vunpack.c.h.b16 %v276
    %v2326 = vunpack.c.l.b16 %v277
    %v2327 = vunpack.c.h.b16 %v277
    %v2328 = vunpack.c.l.b16 %v278
    %v2329 = vunpack.c.h.b16 %v278
    %v2330 = vunpack.c.l.b16 %v279
    %v2331 = vunpack.c.h.b16 %v279
    %v2332 = vunpack.c.l.b16 %v280
    %v2333 = vunpack.c.h.b16 %v280
    %v2334 = vunpack.c.l.b16 %v281
    %v2335 = vunpack.c.h.b16 %v281
    %v2336 = vunpack.c.l.b16 %v282
    %v2337 = vunpack.c.h.b16 %v282
    %v2338 = vunpack.c.l.b16 %v283
    %v2339 = vunpack.c.h.b16 %v283
    %v2340 = vunpack.c.l.b16 %v284
    %v2341 = vunpack.c.h.b16 %v284
    %v2342 = vunpack.c.l.b16 %v285
    %v2343 = vunpack.c.h.b16 %v285
    %v2344 = vunpack.c.l.b16 %v286
    %v2345 = vunpack.c.h.b16 %v286
    %v2346 = vunpack.c.l.b16 %v287
    %v2347 = vunpack.c.h.b16 %v287
    %v2348 = vunpack.c.l.b16 %v288
    %v2349 = vunpack.c.h.b16 %v288
    %v2350 = vunpack.c.l.b16 %v289
    %v2351 = vunpack.c.h.b16 %v289
    %v2352 = vunpack.c.l.b16 %v290
    %v2353 = vunpack.c.h.b16 %v290
    %v2354 = vunpack.c.l.b16 %v291
    %v2355 = vunpack.c.h.b16 %v291
    %v2356 = vunpack.c.l.b16 %v292
    %v2357 = vunpack.c.h.b16 %v292
    %v2358 = vunpack.c.l.b16 %v293
    %v2359 = vunpack.c.h.b16 %v293
    %v2360 = vunpack.c.l.b16 %v294
    %v2361 = vunpack.c.h.b16 %v294
    %v2362 = vunpack.c.l.b16 %v295
    %v2363 = vunpack.c.h.b16 %v295
    %v2364 = vunpack.c.l.b16 %v296
    %v2365 = vunpack.c.h.b16 %v296
    %v2366 = vunpack.c.l.b16 %v297
    %v2367 = vunpack.c.h.b16 %v297
    %v2368 = vunpack.c.l.b16 %v298
    %v2369 = vunpack.c.h.b16 %v298
    %v2370 = vunpack.c.l.b16 %v299
    %v2371 = vunpack.c.h.b16 %v299
    %v2372 = vunpack.c.l.b16 %v300
    %v2373 = vunpack.c.h.b16 %v300
    %v2374 = vunpack.c.l.b16 %v301
    %v2375 = vunpack.c.h.b16 %v301
    %v2376 = vunpack.c.l.b16 %v302
    %v2377 = vunpack.c.h.b16 %v302
    %v2378 = vunpack.c.l.b16 %v303
    %v2379 = vunpack.c.h.b16 %v303
    %v2380 = vunpack.c.l.b16 %v304
    %v2381 = vunpack.c.h.b16 %v304
    %v2382 = vunpack.c.l.b16 %v305
    %v2383 = vunpack.c.h.b16 %v305
    %v2384 = vunpack.c.l.b16 %v306
    %v2385 = vunpack.c.h.b16 %v306
    %v2386 = vunpack.c.l.b16 %v307
    %v2387 = vunpack.c.h.b16 %v307
    %v2388 = vunpack.c.l.b16 %v308
    %v2389 = vunpack.c.h.b16 %v308
    %v2390 = vunpack.c.l.b16 %v309
    %v2391 = vunpack.c.h.b16 %v309
    %v2392 = vunpack.c.l.b16 %v310
    %v2393 = vunpack.c.h.b16 %v310
    %v2394 = vunpack.c.l.b16 %v311
    %v2395 = vunpack.c.h.b16 %v311
    %v2396 = vunpack.c.l.b16 %v312
    %v2397 = vunpack.c.h.b16 %v312
    %v2398 = vunpack.c.l.b16 %v313
    %v2399 = vunpack.c.h.b16 %v313
    %v2400 = vunpack.c.l.b16 %v314
    %v2401 = vunpack.c.h.b16 %v314
    %v2402 = vunpack.c.l.b16 %v315
    %v2403 = vunpack.c.h.b16 %v315
    %v2404 = vunpack.c.l.b16 %v316
    %v2405 = vunpack.c.h.b16 %v316
    %v2406 = vunpack.c.l.b16 %v317
    %v2407 = vunpack.c.h.b16 %v317
    %v2408 = vunpack.c.l.b16 %v318
    %v2409 = vunpack.c.h.b16 %v318
    %v2410 = vunpack.c.l.b16 %v319
    %v2411 = vunpack.c.h.b16 %v319
    %v2412 = vunpack.c.l.b16 %v320
    %v2413 = vunpack.c.h.b16 %v320
    %v2414 = vunpack.c.l.b16 %v321
    %v2415 = vunpack.c.h.b16 %v321
    %v2416 = vunpack.c.l.b16 %v322
    %v2417 = vunpack.c.h.b16 %v322
    %v2418 = vunpack.c.l.b16 %v323
    %v2419 = vunpack.c.h.b16 %v323
    %v2420 = vunpack.c.l.b16 %v324
    %v2421 = vunpack.c.h.b16 %v324
    %v2422 = vunpack.c.l.b16 %v325
    %v2423 = vunpack.c.h.b16 %v325
    %v2424 = vunpack.c.l.b16 %v326
    %v2425 = vunpack.c.h.b16 %v326
    %v2426 = vunpack.c.l.b16 %v327
    %v2427 = vunpack.c.h.b16 %v327
    %v2428 = vunpack.c.l.b16 %v328
    %v2429 = vunpack.c.h.b16 %v328
    %v2430 = vunpack.c.l.b16 %v329
    %v2431 = vunpack.c.h.b16 %v329
    %v2432 = vunpack.c.l.b16 %v330
    %v2433 = vunpack.c.h.b16 %v330
    %v2434 = vunpack.c.l.b16 %v331
    %v2435 = vunpack.c.h.b16 %v331
    %v2436 = vunpack.c.l.b16 %v332
    %v2437 = vunpack.c.h.b16 %v332
    %v2438 = vunpack.c.l.b16 %v333
    %v2439 = vunpack.c.h.b16 %v333
    %v2440 = vunpack.c.l.b16 %v334
    %v2441 = vunpack.c.h.b16 %v334
    %v2442 = vunpack.c.l.b16 %v335
    %v2443 = vunpack.c.h.b16 %v335
    %v2444 = vunpack.c.l.b16 %v336
    %v2445 = vunpack.c.h.b16 %v336
    %v2446 = vunpack.c.l.b16 %v337
    %v2447 = vunpack.c.h.b16 %v337
    %v2448 = vunpack.c.l.b16 %v338
    %v2449 = vunpack.c.h.b16 %v338
    %v2450 = vunpack.c.l.b16 %v339
    %v2451 = vunpack.c.h.b16 %v339
    %v2452 = vunpack.c.l.b16 %v340
    %v2453 = vunpack.c.h.b16 %v340
    %v2454 = vunpack.c.l.b16 %v341
    %v2455 = vunpack.c.h.b16 %v341
    %v2456 = vunpack.c.l.b16 %v342
    %v2457 = vunpack.c.h.b16 %v342
    %v2458 = vunpack.c.l.b16 %v343
    %v2459 = vunpack.c.h.b16 %v343
    %v2460 = vunpack.c.l.b16 %v344
    %v2461 = vunpack.c.h.b16 %v344
    %v2462 = vunpack.c.l.b16 %v345
    %v2463 = vunpack.c.h.b16 %v345
    %v2464 = vunpack.c.l.b16 %v346
    %v2465 = vunpack.c.h.b16 %v346
    %v2466 = vunpack.c.l.b16 %v347
    %v2467 = vunpack.c.h.b16 %v347
    %v2468 = vunpack.c.l.b16 %v348
    %v2469 = vunpack.c.h.b16 %v348
    %v2470 = vunpack.c.l.b16 %v349
    %v2471 = vunpack.c.h.b16 %v349
    %v2472 = vunpack.c.l.b16 %v350
    %v2473 = vunpack.c.h.b16 %v350
    %v2474 = vunpack.c.l.b16 %v351
    %v2475 = vunpack.c.h.b16 %v351
    %v2476 = vunpack.c.l.b16 %v352
    %v2477 = vunpack.c.h.b16 %v352
    %v2478 = vunpack.c.l.b16 %v353
    %v2479 = vunpack.c.h.b16 %v353
    %v2480 = vunpack.c.l.b16 %v354
    %v2481 = vunpack.c.h.b16 %v354
    %v2482 = vunpack.c.l.b16 %v355
    %v2483 = vunpack.c.h.b16 %v355
    %v2484 = vunpack.c.l.b16 %v356
    %v2485 = vunpack.c.h.b16 %v356
    %v2486 = vunpack.c.l.b16 %v357
    %v2487 = vunpack.c.h.b16 %v357
    %v2488 = vunpack.c.l.b16 %v358
    %v2489 = vunpack.c.h.b16 %v358
    %v2490 = vunpack.c.l.b16 %v359
    %v2491 = vunpack.c.h.b16 %v359
    %v2492 = vunpack.c.l.b16 %v360
    %v2493 = vunpack.c.h.b16 %v360
    %v2494 = vunpack.c.l.b16 %v361
    %v2495 = vunpack.c.h.b16 %v361
    %v2496 = vunpack.c.l.b16 %v362
    %v2497 = vunpack.c.h.b16 %v362
    %v2498 = vunpack.c.l.b16 %v363
    %v2499 = vunpack.c.h.b16 %v363
    %v2500 = vunpack.c.l.b16 %v364
    %v2501 = vunpack.c.h.b16 %v364
    %v2502 = vunpack.c.l.b16 %v365
    %v2503 = vunpack.c.h.b16 %v365
    %v2504 = vunpack.c.l.b16 %v366
    %v2505 = vunpack.c.h.b16 %v366
    %v2506 = vunpack.c.l.b16 %v367
    %v2507 = vunpack.c.h.b16 %v367
    %v2508 = vunpack.c.l.b16 %v368
    %v2509 = vunpack.c.h.b16 %v368
    %v2510 = vunpack.c.l.b16 %v369
    %v2511 = vunpack.c.h.b16 %v369
    %v2512 = vunpack.c.l.b16 %v370
    %v2513 = vunpack.c.h.b16 %v370
    %v2514 = vunpack.c.l.b16 %v371
    %v2515 = vunpack.c.h.b16 %v371
    %v2516 = vunpack.c.l.b16 %v372
    %v2517 = vunpack.c.h.b16 %v372
    %v2518 = vunpack.c.l.b16 %v373
    %v2519 = vunpack.c.h.b16 %v373
    %v2520 = vunpack.c.l.b16 %v374
    %v2521 = vunpack.c.h.b16 %v374
    %v2522 = vunpack.c.l.b16 %v375
    %v2523 = vunpack.c.h.b16 %v375
    %v2524 = vunpack.c.l.b16 %v376
    %v2525 = vunpack.c.h.b16 %v376
    %v2526 = vunpack.c.l.b16 %v377
    %v2527 = vunpack.c.h.b16 %v377
    %v2528 = vunpack.c.l.b16 %v378
    %v2529 = vunpack.c.h.b16 %v378
    %v2530 = vunpack.c.l.b16 %v379
    %v2531 = vunpack.c.h.b16 %v379
    %v2532 = vunpack.c.l.b16 %v380
    %v2533 = vunpack.c.h.b16 %v380
    %v2534 = vunpack.c.l.b16 %v381
    %v2535 = vunpack.c.h.b16 %v381
    %v2536 = vunpack.c.l.b16 %v382
    %v2537 = vunpack.c.h.b16 %v382
    %v2538 = vunpack.c.l.b16 %v383
    %v2539 = vunpack.c.h.b16 %v383
    %v2540 = vunpack.c.l.b16 %v384
    %v2541 = vunpack.c.h.b16 %v384
    %v2542 = vunpack.c.l.b16 %v385
    %v2543 = vunpack.c.h.b16 %v385
    %v2544 = vunpack.c.l.b16 %v386
    %v2545 = vunpack.c.h.b16 %v386
    %v2546 = vunpack.c.l.b16 %v387
    %v2547 = vunpack.c.h.b16 %v387
    %v2548 = vunpack.c.l.b16 %v388
    %v2549 = vunpack.c.h.b16 %v388
    %v2550 = vunpack.c.l.b16 %v389
    %v2551 = vunpack.c.h.b16 %v389
    %v2552 = vunpack.c.l.b16 %v390
    %v2553 = vunpack.c.h.b16 %v390
    %v2554 = vunpack.c.l.b16 %v391
    %v2555 = vunpack.c.h.b16 %v391
    %v2556 = vunpack.c.l.b16 %v392
    %v2557 = vunpack.c.h.b16 %v392
    %v2558 = vunpack.c.l.b16 %v393
    %v2559 = vunpack.c.h.b16 %v393
    %v2560 = vunpack.c.l.b16 %v394
    %v2561 = vunpack.c.h.b16 %v394
    %v2562 = vunpack.c.l.b16 %v395
    %v2563 = vunpack.c.h.b16 %v395
    %v2564 = vunpack.c.l.b16 %v396
    %v2565 = vunpack.c.h.b16 %v396
    %v2566 = vunpack.c.l.b16 %v397
    %v2567 = vunpack.c.h.b16 %v397
    %v2568 = vunpack.c.l.b16 %v398
    %v2569 = vunpack.c.h.b16 %v398
    %v2570 = vunpack.c.l.b16 %v399
    %v2571 = vunpack.c.h.b16 %v399
    %v2572 = vunpack.c.l.b16 %v400
    %v2573 = vunpack.c.h.b16 %v400
    %v2574 = vunpack.c.l.b16 %v401
    %v2575 = vunpack.c.h.b16 %v401
    %v2576 = vunpack.c.l.b16 %v402
    %v2577 = vunpack.c.h.b16 %v402
    %v2578 = vunpack.c.l.b16 %v403
    %v2579 = vunpack.c.h.b16 %v403
    %v2580 = vunpack.c.l.b16 %v404
    %v2581 = vunpack.c.h.b16 %v404
    %v2582 = vunpack.c.l.b16 %v405
    %v2583 = vunpack.c.h.b16 %v405
    %v2584 = vunpack.c.l.b16 %v406
    %v2585 = vunpack.c.h.b16 %v406
    %v2586 = vunpack.c.l.b16 %v407
    %v2587 = vunpack.c.h.b16 %v407
    %v2588 = vunpack.c.l.b16 %v408
    %v2589 = vunpack.c.h.b16 %v408
    %v2590 = vunpack.c.l.b16 %v409
    %v2591 = vunpack.c.h.b16 %v409
    %v2592 = vunpack.c.l.b16 %v410
    %v2593 = vunpack.c.h.b16 %v410
    %v2594 = vunpack.c.l.b16 %v411
    %v2595 = vunpack.c.h.b16 %v411
    %v2596 = vunpack.c.l.b16 %v412
    %v2597 = vunpack.c.h.b16 %v412
    %v2598 = vunpack.c.l.b16 %v413
    %v2599 = vunpack.c.h.b16 %v413
    %v2600 = vunpack.c.l.b16 %v414
    %v2601 = vunpack.c.h.b16 %v414
    %v2602 = vunpack.c.l.b16 %v415
    %v2603 = vunpack.c.h.b16 %v415
    %v2604 = vunpack.c.l.b16 %v416
    %v2605 = vunpack.c.h.b16 %v416
    %v2606 = vunpack.c.l.b16 %v417
    %v2607 = vunpack.c.h.b16 %v417
    %v2608 = vunpack.c.l.b16 %v418
    %v2609 = vunpack.c.h.b16 %v418
    %v2610 = vunpack.c.l.b16 %v419
    %v2611 = vunpack.c.h.b16 %v419
    %v2612 = vunpack.c.l.b16 %v420
    %v2613 = vunpack.c.h.b16 %v420
    %v2614 = vunpack.c.l.b16 %v421
    %v2615 = vunpack.c.h.b16 %v421
    %v2616 = vunpack.c.l.b16 %v422
    %v2617 = vunpack.c.h.b16 %v422
    %v2618 = vunpack.c.l.b16 %v423
    %v2619 = vunpack.c.h.b16 %v423
    %v2620 = vunpack.c.l.b16 %v424
    %v2621 = vunpack.c.h.b16 %v424
    %v2622 = vunpack.c.l.b16 %v425
    %v2623 = vunpack.c.h.b16 %v425
    %v2624 = vunpack.c.l.b16 %v426
    %v2625 = vunpack.c.h.b16 %v426
    %v2626 = vunpack.c.l.b16 %v427
    %v2627 = vunpack.c.h.b16 %v427
    %v2628 = vunpack.c.l.b16 %v428
    %v2629 = vunpack.c.h.b16 %v428
    %v2630 = vunpack.c.l.b16 %v429
    %v2631 = vunpack.c.h.b16 %v429
    %v2632 = vunpack.c.l.b16 %v430
    %v2633 = vunpack.c.h.b16 %v430
    %v2634 = vunpack.c.l.b16 %v431
    %v2635 = vunpack.c.h.b16 %v431
    %v2636 = vunpack.c.l.b16 %v432
    %v2637 = vunpack.c.h.b16 %v432
    %v2638 = vunpack.c.l.b16 %v433
    %v2639 = vunpack.c.h.b16 %v433
    %v2640 = vunpack.c.l.b16 %v434
    %v2641 = vunpack.c.h.b16 %v434
    %v2642 = vunpack.c.l.b16 %v435
    %v2643 = vunpack.c.h.b16 %v435
    %v2644 = vunpack.c.l.b16 %v436
    %v2645 = vunpack.c.h.b16 %v436
    %v2646 = vunpack.c.l.b16 %v437
    %v2647 = vunpack.c.h.b16 %v437
    %v2648 = vunpack.c.l.b16 %v438
    %v2649 = vunpack.c.h.b16 %v438
    %v2650 = vunpack.c.l.b16 %v439
    %v2651 = vunpack.c.h.b16 %v439
    %v2652 = vunpack.c.l.b16 %v440
    %v2653 = vunpack.c.h.b16 %v440
    %v2654 = vunpack.c.l.b16 %v441
    %v2655 = vunpack.c.h.b16 %v441
    %v2656 = vunpack.c.l.b16 %v442
    %v2657 = vunpack.c.h.b16 %v442
    %v2658 = vunpack.c.l.b16 %v443
    %v2659 = vunpack.c.h.b16 %v443
    %v2660 = vunpack.c.l.b16 %v444
    %v2661 = vunpack.c.h.b16 %v444
    %v2662 = vunpack.c.l.b16 %v445
    %v2663 = vunpack.c.h.b16 %v445
    %v2664 = vunpack.c.l.b16 %v446
    %v2665 = vunpack.c.h.b16 %v446
    %v2666 = vunpack.c.l.b16 %v447
    %v2667 = vunpack.c.h.b16 %v447
    %v2668 = vunpack.c.l.b16 %v448
    %v2669 = vunpack.c.h.b16 %v448
    %v2670 = vunpack.c.l.b16 %v449
    %v2671 = vunpack.c.h.b16 %v449
    %v2672 = vunpack.c.l.b16 %v450
    %v2673 = vunpack.c.h.b16 %v450
    %v2674 = vunpack.c.l.b16 %v451
    %v2675 = vunpack.c.h.b16 %v451
    %v2676 = vunpack.c.l.b16 %v452
    %v2677 = vunpack.c.h.b16 %v452
    %v2678 = vunpack.c.l.b16 %v453
    %v2679 = vunpack.c.h.b16 %v453
    %v2680 = vunpack.c.l.b16 %v454
    %v2681 = vunpack.c.h.b16 %v454
    %v2682 = vunpack.c.l.b16 %v455
    %v2683 = vunpack.c.h.b16 %v455
    %v2684 = vunpack.c.l.b16 %v456
    %v2685 = vunpack.c.h.b16 %v456
    %v2686 = vunpack.c.l.b16 %v457
    %v2687 = vunpack.c.h.b16 %v457
    %v2688 = vunpack.c.l.b16 %v458
    %v2689 = vunpack.c.h.b16 %v458
    %v2690 = vunpack.c.l.b16 %v459
    %v2691 = vunpack.c.h.b16 %v459
    %v2692 = vunpack.c.l.b16 %v460
    %v2693 = vunpack.c.h.b16 %v460
    %v2694 = vunpack.c.l.b16 %v461
    %v2695 = vunpack.c.h.b16 %v461
    %v2696 = vunpack.c.l.b16 %v462
    %v2697 = vunpack.c.h.b16 %v462
    %v2698 = vunpack.c.l.b16 %v463
    %v2699 = vunpack.c.h.b16 %v463
    %v2700 = vunpack.c.l.b16 %v464
    %v2701 = vunpack.c.h.b16 %v464
    %v2702 = vunpack.c.l.b16 %v465
    %v2703 = vunpack.c.h.b16 %v465
    %v2704 = vunpack.c.l.b16 %v466
    %v2705 = vunpack.c.h.b16 %v466
    %v2706 = vunpack.c.l.b16 %v467
    %v2707 = vunpack.c.h.b16 %v467
    %v2708 = vunpack.c.l.b16 %v468
    %v2709 = vunpack.c.h.b16 %v468
    %v2710 = vunpack.c.l.b16 %v469
    %v2711 = vunpack.c.h.b16 %v469
    %v2712 = vunpack.c.l.b16 %v470
    %v2713 = vunpack.c.h.b16 %v470
    %v2714 = vunpack.c.l.b16 %v471
    %v2715 = vunpack.c.h.b16 %v471
    %v2716 = vunpack.c.l.b16 %v472
    %v2717 = vunpack.c.h.b16 %v472
    %v2718 = vunpack.c.l.b16 %v473
    %v2719 = vunpack.c.h.b16 %v473
    %v2720 = vunpack.c.l.b16 %v474
    %v2721 = vunpack.c.h.b16 %v474
    %v2722 = vunpack.c.l.b16 %v475
    %v2723 = vunpack.c.h.b16 %v475
    %v2724 = vunpack.c.l.b16 %v476
    %v2725 = vunpack.c.h.b16 %v476
    %v2726 = vunpack.c.l.b16 %v477
    %v2727 = vunpack.c.h.b16 %v477
    %v2728 = vunpack.c.l.b16 %v478
    %v2729 = vunpack.c.h.b16 %v478
    %v2730 = vunpack.c.l.b16 %v479
    %v2731 = vunpack.c.h.b16 %v479
    %v2732 = vunpack.c.l.b16 %v480
    %v2733 = vunpack.c.h.b16 %v480
    %v2734 = vunpack.c.l.b16 %v481
    %v2735 = vunpack.c.h.b16 %v481
    %v2736 = vunpack.c.l.b16 %v482
    %v2737 = vunpack.c.h.b16 %v482
    %v2738 = vunpack.c.l.b16 %v483
    %v2739 = vunpack.c.h.b16 %v483
    %v2740 = vunpack.c.l.b16 %v484
    %v2741 = vunpack.c.h.b16 %v484
    %v2742 = vunpack.c.l.b16 %v485
    %v2743 = vunpack.c.h.b16 %v485
    %v2744 = vunpack.c.l.b16 %v486
    %v2745 = vunpack.c.h.b16 %v486
    %v2746 = vunpack.c.l.b16 %v487
    %v2747 = vunpack.c.h.b16 %v487
    %v2748 = vunpack.c.l.b16 %v488
    %v2749 = vunpack.c.h.b16 %v488
    %v2750 = vunpack.c.l.b16 %v489
    %v2751 = vunpack.c.h.b16 %v489
    %v2752 = vunpack.c.l.b16 %v490
    %v2753 = vunpack.c.h.b16 %v490
    %v2754 = vunpack.c.l.b16 %v491
    %v2755 = vunpack.c.h.b16 %v491
    %v2756 = vunpack.c.l.b16 %v492
    %v2757 = vunpack.c.h.b16 %v492
    %v2758 = vunpack.c.l.b16 %v493
    %v2759 = vunpack.c.h.b16 %v493
    %v2760 = vunpack.c.l.b16 %v494
    %v2761 = vunpack.c.h.b16 %v494
    %v2762 = vunpack.c.l.b16 %v495
    %v2763 = vunpack.c.h.b16 %v495
    %v2764 = vunpack.c.l.b16 %v496
    %v2765 = vunpack.c.h.b16 %v496
    %v2766 = vunpack.c.l.b16 %v497
    %v2767 = vunpack.c.h.b16 %v497
    %v2768 = vunpack.c.l.b16 %v498
    %v2769 = vunpack.c.h.b16 %v498
    %v2770 = vunpack.c.l.b16 %v499
    %v2771 = vunpack.c.h.b16 %v499
    %v2772 = vunpack.c.l.b16 %v500
    %v2773 = vunpack.c.h.b16 %v500
    %v2774 = vunpack.c.l.b16 %v501
    %v2775 = vunpack.c.h.b16 %v501
    %v2776 = vunpack.c.l.b16 %v502
    %v2777 = vunpack.c.h.b16 %v502
    %v2778 = vunpack.c.l.b16 %v503
    %v2779 = vunpack.c.h.b16 %v503
    %v2780 = vunpack.c.l.b16 %v504
    %v2781 = vunpack.c.h.b16 %v504
    %v2782 = vunpack.c.l.b16 %v505
    %v2783 = vunpack.c.h.b16 %v505
    %v2784 = vunpack.c.l.b16 %v506
    %v2785 = vunpack.c.h.b16 %v506
    %v2786 = vunpack.c.l.b16 %v507
    %v2787 = vunpack.c.h.b16 %v507
    %v2788 = vunpack.c.l.b16 %v508
    %v2789 = vunpack.c.h.b16 %v508
    %v2790 = vunpack.c.l.b16 %v509
    %v2791 = vunpack.c.h.b16 %v509
    %v2792 = vunpack.c.l.b16 %v510
    %v2793 = vunpack.c.h.b16 %v510
    %v2794 = vunpack.c.l.b16 %v511
    %v2795 = vunpack.c.h.b16 %v511
    %v2796 = vunpack.c.l.b16 %v512
    %v2797 = vunpack.c.h.b16 %v512
    %v2798 = vunpack.c.l.b16 %v513
    %v2799 = vunpack.c.h.b16 %v513
    %v2800 = vunpack.c.l.b16 %v514
    %v2801 = vunpack.c.h.b16 %v514
    %v2802 = vunpack.c.l.b16 %v515
    %v2803 = vunpack.c.h.b16 %v515
    %v2804 = vunpack.c.l.b16 %v516
    %v2805 = vunpack.c.h.b16 %v516
    %v2806 = vunpack.c.l.b16 %v517
    %v2807 = vunpack.c.h.b16 %v517
    %v2808 = vunpack.c.l.b16 %v518
    %v2809 = vunpack.c.h.b16 %v518
    %v2810 = vunpack.c.l.b16 %v519
    %v2811 = vunpack.c.h.b16 %v519
    %v2812 = vunpack.c.l.b16 %v520
    %v2813 = vunpack.c.h.b16 %v520
    %v2814 = vunpack.c.l.b16 %v521
    %v2815 = vunpack.c.h.b16 %v521
    %v2816 = vunpack.c.l.b16 %v522
    %v2817 = vunpack.c.h.b16 %v522
    %v2818 = vunpack.c.l.b16 %v523
    %v2819 = vunpack.c.h.b16 %v523
    %v2820 = vunpack.c.l.b16 %v524
    %v2821 = vunpack.c.h.b16 %v524
    %v2822 = vunpack.c.l.b16 %v525
    %v2823 = vunpack.c.h.b16 %v525
    %v2824 = vunpack.c.l.b16 %v526
    %v2825 = vunpack.c.h.b16 %v526
    %v2826 = vunpack.c.l.b16 %v527
    %v2827 = vunpack.c.h.b16 %v527
    %v2828 = vunpack.c.l.b16 %v528
    %v2829 = vunpack.c.h.b16 %v528
    %v2830 = vunpack.c.l.b16 %v529
    %v2831 = vunpack.c.h.b16 %v529
    %v2832 = vunpack.c.l.b16 %v530
    %v2833 = vunpack.c.h.b16 %v530
    %v2834 = vunpack.c.l.b16 %v531
    %v2835 = vunpack.c.h.b16 %v531
    %v2836 = vunpack.c.l.b16 %v532
    %v2837 = vunpack.c.h.b16 %v532
    %v2838 = vunpack.c.l.b16 %v533
    %v2839 = vunpack.c.h.b16 %v533
    %v2840 = vunpack.c.l.b16 %v534
    %v2841 = vunpack.c.h.b16 %v534
    %v2842 = vunpack.c.l.b16 %v535
    %v2843 = vunpack.c.h.b16 %v535
    %v2844 = vunpack.c.l.b16 %v536
    %v2845 = vunpack.c.h.b16 %v536
    %v2846 = vunpack.c.l.b16 %v537
    %v2847 = vunpack.c.h.b16 %v537
    %v2848 = vunpack.c.l.b16 %v538
    %v2849 = vunpack.c.h.b16 %v538
    %v2850 = vunpack.c.l.b16 %v539
    %v2851 = vunpack.c.h.b16 %v539
    %v2852 = vunpack.c.l.b16 %v540
    %v2853 = vunpack.c.h.b16 %v540
    %v2854 = vunpack.c.l.b16 %v541
    %v2855 = vunpack.c.h.b16 %v541
    %v2856 = vunpack.c.l.b16 %v542
    %v2857 = vunpack.c.h.b16 %v542
    %v2858 = vunpack.c.l.b16 %v543
    %v2859 = vunpack.c.h.b16 %v543
    %v2860 = vunpack.c.l.b16 %v544
    %v2861 = vunpack.c.h.b16 %v544
    %v2862 = vunpack.c.l.b16 %v545
    %v2863 = vunpack.c.h.b16 %v545
    %v2864 = vunpack.c.l.b16 %v546
    %v2865 = vunpack.c.h.b16 %v546
    %v2866 = vunpack.c.l.b16 %v547
    %v2867 = vunpack.c.h.b16 %v547
    %v2868 = vunpack.c.l.b16 %v548
    %v2869 = vunpack.c.h.b16 %v548
    %v2870 = vunpack.c.l.b16 %v549
    %v2871 = vunpack.c.h.b16 %v549
    %v2872 = vunpack.c.l.b16 %v550
    %v2873 = vunpack.c.h.b16 %v550
    %v2874 = vunpack.c.l.b16 %v551
    %v2875 = vunpack.c.h.b16 %v551
    %v2876 = vunpack.c.l.b16 %v552
    %v2877 = vunpack.c.h.b16 %v552
    %v2878 = vunpack.c.l.b16 %v553
    %v2879 = vunpack.c.h.b16 %v553
    %v2880 = vunpack.c.l.b16 %v554
    %v2881 = vunpack.c.h.b16 %v554
    %v2882 = vunpack.c.l.b16 %v555
    %v2883 = vunpack.c.h.b16 %v555
    %v2884 = vunpack.c.l.b16 %v556
    %v2885 = vunpack.c.h.b16 %v556
    %v2886 = vunpack.c.l.b16 %v557
    %v2887 = vunpack.c.h.b16 %v557
    %v2888 = vunpack.c.l.b16 %v558
    %v2889 = vunpack.c.h.b16 %v558
    %v2890 = vunpack.c.l.b16 %v559
    %v2891 = vunpack.c.h.b16 %v559
    %v2892 = vunpack.c.l.b16 %v560
    %v2893 = vunpack.c.h.b16 %v560
    %v2894 = vunpack.c.l.b16 %v561
    %v2895 = vunpack.c.h.b16 %v561
    %v2896 = vunpack.c.l.b16 %v562
    %v2897 = vunpack.c.h.b16 %v562
    %v2898 = vunpack.c.l.b16 %v563
    %v2899 = vunpack.c.h.b16 %v563
    %v2900 = vunpack.c.l.b16 %v564
    %v2901 = vunpack.c.h.b16 %v564
    %v2902 = vunpack.c.l.b16 %v565
    %v2903 = vunpack.c.h.b16 %v565
    %v2904 = vunpack.c.l.b16 %v566
    %v2905 = vunpack.c.h.b16 %v566
    %v2906 = vunpack.c.l.b16 %v567
    %v2907 = vunpack.c.h.b16 %v567
    %v2908 = vunpack.c.l.b16 %v568
    %v2909 = vunpack.c.h.b16 %v568
    %v2910 = vunpack.c.l.b16 %v569
    %v2911 = vunpack.c.h.b16 %v569
    %v2912 = vunpack.c.l.b16 %v570
    %v2913 = vunpack.c.h.b16 %v570
    %v2914 = vunpack.c.l.b16 %v571
    %v2915 = vunpack.c.h.b16 %v571
    %v2916 = vunpack.c.l.b16 %v572
    %v2917 = vunpack.c.h.b16 %v572
    %v2918 = vunpack.c.l.b16 %v573
    %v2919 = vunpack.c.h.b16 %v573
    %v2920 = vunpack.c.l.b16 %v574
    %v2921 = vunpack.c.h.b16 %v574
    %v2922 = vunpack.c.l.b16 %v575
    %v2923 = vunpack.c.h.b16 %v575
    %v2924 = vunpack.c.l.b16 %v576
    %v2925 = vunpack.c.h.b16 %v576
    %v2926 = vunpack.c.l.b16 %v577
    %v2927 = vunpack.c.h.b16 %v577
    %v2928 = vunpack.c.l.b16 %v578
    %v2929 = vunpack.c.h.b16 %v578
    %v2930 = vunpack.c.l.b16 %v579
    %v2931 = vunpack.c.h.b16 %v579
    %v2932 = vunpack.c.l.b16 %v580
    %v2933 = vunpack.c.h.b16 %v580
    %v2934 = vunpack.c.l.b16 %v581
    %v2935 = vunpack.c.h.b16 %v581
    %v2936 = vunpack.c.l.b16 %v582
    %v2937 = vunpack.c.h.b16 %v582
    %v2938 = vunpack.c.l.b16 %v583
    %v2939 = vunpack.c.h.b16 %v583
    %v2940 = vunpack.c.l.b16 %v584
    %v2941 = vunpack.c.h.b16 %v584
    %v2942 = vunpack.c.l.b16 %v585
    %v2943 = vunpack.c.h.b16 %v585
    %v2944 = vunpack.c.l.b16 %v586
    %v2945 = vunpack.c.h.b16 %v586
    %v2946 = vunpack.c.l.b16 %v587
    %v2947 = vunpack.c.h.b16 %v587
    %v2948 = vunpack.c.l.b16 %v588
    %v2949 = vunpack.c.h.b16 %v588
    %v2950 = vunpack.c.l.b16 %v589
    %v2951 = vunpack.c.h.b16 %v589
    %v2952 = vunpack.c.l.b16 %v590
    %v2953 = vunpack.c.h.b16 %v590
    %v2954 = vunpack.c.l.b16 %v591
    %v2955 = vunpack.c.h.b16 %v591
    %v2956 = vunpack.c.l.b16 %v592
    %v2957 = vunpack.c.h.b16 %v592
    %v2958 = vunpack.c.l.b16 %v593
    %v2959 = vunpack.c.h.b16 %v593
    %v2960 = vunpack.c.l.b16 %v594
    %v2961 = vunpack.c.h.b16 %v594
    %v2962 = vunpack.c.l.b16 %v595
    %v2963 = vunpack.c.h.b16 %v595
    %v2964 = vunpack.c.l.b16 %v596
    %v2965 = vunpack.c.h.b16 %v596
    %v2966 = vunpack.c.l.b16 %v597
    %v2967 = vunpack.c.h.b16 %v597
    %v2968 = vunpack.c.l.b16 %v598
    %v2969 = vunpack.c.h.b16 %v598
    %v2970 = vunpack.c.l.b16 %v599
    %v2971 = vunpack.c.h.b16 %v599
    %v2972 = vunpack.c.l.b16 %v600
    %v2973 = vunpack.c.h.b16 %v600
    %v2974 = vunpack.c.l.b16 %v601
    %v2975 = vunpack.c.h.b16 %v601
    %v2976 = vunpack.c.l.b16 %v602
    %v2977 = vunpack.c.h.b16 %v602
    %v2978 = vunpack.c.l.b16 %v603
    %v2979 = vunpack.c.h.b16 %v603
    %v2980 = vunpack.c.l.b16 %v604
    %v2981 = vunpack.c.h.b16 %v604
    %v2982 = vunpack.c.l.b16 %v605
    %v2983 = vunpack.c.h.b16 %v605
    %v2984 = vunpack.c.l.b16 %v606
    %v2985 = vunpack.c.h.b16 %v606
    %v2986 = vunpack.c.l.b16 %v607
    %v2987 = vunpack.c.h.b16 %v607
    %v2988 = vunpack.c.l.b16 %v608
    %v2989 = vunpack.c.h.b16 %v608
    %v2990 = vunpack.c.l.b16 %v609
    %v2991 = vunpack.c.h.b16 %v609
    %v2992 = vunpack.c.l.b16 %v610
    %v2993 = vunpack.c.h.b16 %v610
    %v2994 = vunpack.c.l.b16 %v611
    %v2995 = vunpack.c.h.b16 %v611
    %v2996 = vunpack.c.l.b16 %v612
    %v2997 = vunpack.c.h.b16 %v612
    %v2998 = vunpack.c.l.b16 %v613
    %v2999 = vunpack.c.h.b16 %v613
    %v3000 = vunpack.c.l.b16 %v614
    %v3001 = vunpack.c.h.b16 %v614
    %v3002 = vunpack.c.l.b16 %v615
    %v3003 = vunpack.c.h.b16 %v615
    %v3004 = vunpack.c.l.b16 %v616
    %v3005 = vunpack.c.h.b16 %v616
    %v3006 = vunpack.c.l.b16 %v617
    %v3007 = vunpack.c.h.b16 %v617
    %v3008 = vunpack.c.l.b16 %v618
    %v3009 = vunpack.c.h.b16 %v618
    %v3010 = vunpack.c.l.b16 %v619
    %v3011 = vunpack.c.h.b16 %v619
    %v3012 = vunpack.c.l.b16 %v620
    %v3013 = vunpack.c.h.b16 %v620
    %v3014 = vunpack.c.l.b16 %v621
    %v3015 = vunpack.c.h.b16 %v621
    %v3016 = vunpack.c.l.b16 %v622
    %v3017 = vunpack.c.h.b16 %v622
    %v3018 = vunpack.c.l.b16 %v623
    %v3019 = vunpack.c.h.b16 %v623
    %v3020 = vunpack.c.l.b16 %v624
    %v3021 = vunpack.c.h.b16 %v624
    %v3022 = vunpack.c.l.b16 %v625
    %v3023 = vunpack.c.h.b16 %v625
    %v3024 = vunpack.c.l.b16 %v626
    %v3025 = vunpack.c.h.b16 %v626
    %v3026 = vunpack.c.l.b16 %v627
    %v3027 = vunpack.c.h.b16 %v627
    %v3028 = vunpack.c.l.b16 %v628
    %v3029 = vunpack.c.h.b16 %v628
    %v3030 = vunpack.c.l.b16 %v629
    %v3031 = vunpack.c.h.b16 %v629
    %v3032 = vunpack.c.l.b16 %v630
    %v3033 = vunpack.c.h.b16 %v630
    %v3034 = vunpack.c.l.b16 %v631
    %v3035 = vunpack.c.h.b16 %v631
    %v3036 = vunpack.c.l.b16 %v632
    %v3037 = vunpack.c.h.b16 %v632
    %v3038 = vunpack.c.l.b16 %v633
    %v3039 = vunpack.c.h.b16 %v633
    %v3040 = vunpack.c.l.b16 %v634
    %v3041 = vunpack.c.h.b16 %v634
    %v3042 = vunpack.c.l.b16 %v635
    %v3043 = vunpack.c.h.b16 %v635
    %v3044 = vunpack.c.l.b16 %v636
    %v3045 = vunpack.c.h.b16 %v636
    %v3046 = vunpack.c.l.b16 %v637
    %v3047 = vunpack.c.h.b16 %v637
    %v3048 = vunpack.c.l.b16 %v638
    %v3049 = vunpack.c.h.b16 %v638
    %v3050 = vunpack.c.l.b16 %v639
    %v3051 = vunpack.c.h.b16 %v639
    %v3052 = vunpack.c.l.b16 %v640
    %v3053 = vunpack.c.h.b16 %v640
    %v3054 = vunpack.c.l.b16 %v641
    %v3055 = vunpack.c.h.b16 %v641
    %v3056 = vunpack.c.l.b16 %v642
    %v3057 = vunpack.c.h.b16 %v642
    %v3058 = vunpack.c.l.b16 %v643
    %v3059 = vunpack.c.h.b16 %v643
    %v3060 = vunpack.c.l.b16 %v644
    %v3061 = vunpack.c.h.b16 %v644
    %v3062 = vunpack.c.l.b16 %v645
    %v3063 = vunpack.c.h.b16 %v645
    %v3064 = vunpack.c.l.b16 %v646
    %v3065 = vunpack.c.h.b16 %v646
    %v3066 = vunpack.c.l.b16 %v647
    %v3067 = vunpack.c.h.b16 %v647
    %v3068 = vunpack.c.l.b16 %v648
    %v3069 = vunpack.c.h.b16 %v648
    %v3070 = vunpack.c.l.b16 %v649
    %v3071 = vunpack.c.h.b16 %v649
    %v3072 = vunpack.c.l.b16 %v650
    %v3073 = vunpack.c.h.b16 %v650
    %v3074 = vunpack.c.l.b16 %v651
    %v3075 = vunpack.c.h.b16 %v651
    %v3076 = vunpack.c.l.b16 %v652
    %v3077 = vunpack.c.h.b16 %v652
    %v3078 = vunpack.c.l.b16 %v653
    %v3079 = vunpack.c.h.b16 %v653
    %v3080 = vunpack.c.l.b16 %v654
    %v3081 = vunpack.c.h.b16 %v654
    %v3082 = vunpack.c.l.b16 %v655
    %v3083 = vunpack.c.h.b16 %v655
    %v3084 = vunpack.c.l.b16 %v656
    %v3085 = vunpack.c.h.b16 %v656
    %v3086 = vunpack.c.l.b16 %v657
    %v3087 = vunpack.c.h.b16 %v657
    %v3088 = vunpack.c.l.b16 %v658
    %v3089 = vunpack.c.h.b16 %v658
    %v3090 = vunpack.c.l.b16 %v659
    %v3091 = vunpack.c.h.b16 %v659
    %v3092 = vunpack.c.l.b16 %v660
    %v3093 = vunpack.c.h.b16 %v660
    %v3094 = vunpack.c.l.b16 %v661
    %v3095 = vunpack.c.h.b16 %v661
    %v3096 = vunpack.c.l.b16 %v662
    %v3097 = vunpack.c.h.b16 %v662
    %v3098 = vunpack.c.l.b16 %v663
    %v3099 = vunpack.c.h.b16 %v663
    %v3100 = vunpack.c.l.b16 %v664
    %v3101 = vunpack.c.h.b16 %v664
    %v3102 = vunpack.c.l.b16 %v665
    %v3103 = vunpack.c.h.b16 %v665
    %v3104 = vunpack.c.l.b16 %v666
    %v3105 = vunpack.c.h.b16 %v666
    %v3106 = vunpack.c.l.b16 %v667
    %v3107 = vunpack.c.h.b16 %v667
    %v3108 = vunpack.c.l.b16 %v668
    %v3109 = vunpack.c.h.b16 %v668
    %v3110 = vunpack.c.l.b16 %v669
    %v3111 = vunpack.c.h.b16 %v669
    %v3112 = vunpack.c.l.b16 %v670
    %v3113 = vunpack.c.h.b16 %v670
    %v3114 = vunpack.c.l.b16 %v671
    %v3115 = vunpack.c.h.b16 %v671
    %v3116 = vunpack.c.l.b16 %v672
    %v3117 = vunpack.c.h.b16 %v672
    %v3118 = vunpack.c.l.b16 %v673
    %v3119 = vunpack.c.h.b16 %v673
    %v3120 = vunpack.c.l.b16 %v674
    %v3121 = vunpack.c.h.b16 %v674
    %v3122 = vunpack.c.l.b16 %v675
    %v3123 = vunpack.c.h.b16 %v675
    %v3124 = vunpack.c.l.b16 %v676
    %v3125 = vunpack.c.h.b16 %v676
    %v3126 = vunpack.c.l.b16 %v677
    %v3127 = vunpack.c.h.b16 %v677
    %v3128 = vunpack.c.l.b16 %v678
    %v3129 = vunpack.c.h.b16 %v678
    %v3130 = vunpack.c.l.b16 %v679
    %v3131 = vunpack.c.h.b16 %v679
    %v3132 = vunpack.c.l.b16 %v680
    %v3133 = vunpack.c.h.b16 %v680
    %v3134 = vunpack.c.l.b16 %v681
    %v3135 = vunpack.c.h.b16 %v681
    %v3136 = vunpack.c.l.b16 %v682
    %v3137 = vunpack.c.h.b16 %v682
    %v3138 = vunpack.c.l.b16 %v683
    %v3139 = vunpack.c.h.b16 %v683
    %v3140 = vunpack.c.l.b16 %v684
    %v3141 = vunpack.c.h.b16 %v684
    %v3142 = vunpack.c.l.b16 %v685
    %v3143 = vunpack.c.h.b16 %v685
    %v3144 = vunpack.c.l.b16 %v686
    %v3145 = vunpack.c.h.b16 %v686
    %v3146 = vunpack.c.l.b16 %v687
    %v3147 = vunpack.c.h.b16 %v687
    %v3148 = vunpack.c.l.b16 %v688
    %v3149 = vunpack.c.h.b16 %v688
    %v3150 = vunpack.c.l.b16 %v689
    %v3151 = vunpack.c.h.b16 %v689
    %v3152 = vunpack.c.l.b16 %v690
    %v3153 = vunpack.c.h.b16 %v690
    %v3154 = vunpack.c.l.b16 %v691
    %v3155 = vunpack.c.h.b16 %v691
    %v3156 = vunpack.c.l.b16 %v692
    %v3157 = vunpack.c.h.b16 %v692
    %v3158 = vunpack.c.l.b16 %v693
    %v3159 = vunpack.c.h.b16 %v693
    %v3160 = vunpack.c.l.b16 %v694
    %v3161 = vunpack.c.h.b16 %v694
    %v3162 = vunpack.c.l.b16 %v695
    %v3163 = vunpack.c.h.b16 %v695
    %v3164 = vunpack.c.l.b16 %v696
    %v3165 = vunpack.c.h.b16 %v696
    %v3166 = vunpack.c.l.b16 %v697
    %v3167 = vunpack.c.h.b16 %v697
    %v3168 = vunpack.c.l.b16 %v698
    %v3169 = vunpack.c.h.b16 %v698
    %v3170 = vunpack.c.l.b16 %v699
    %v3171 = vunpack.c.h.b16 %v699
    %v3172 = vunpack.c.l.b16 %v700
    %v3173 = vunpack.c.h.b16 %v700
    %v3174 = vunpack.c.l.b16 %v701
    %v3175 = vunpack.c.h.b16 %v701
    %v3176 = vunpack.c.l.b16 %v702
    %v3177 = vunpack.c.h.b16 %v702
    %v3178 = vunpack.c.l.b16 %v703
    %v3179 = vunpack.c.h.b16 %v703
    %v3180 = vunpack.c.l.b16 %v704
    %v3181 = vunpack.c.h.b16 %v704
    %v3182 = vunpack.c.l.b16 %v705
    %v3183 = vunpack.c.h.b16 %v705
    %v3184 = vunpack.c.l.b16 %v706
    %v3185 = vunpack.c.h.b16 %v706
    %v3186 = vunpack.c.l.b16 %v707
    %v3187 = vunpack.c.h.b16 %v707
    %v3188 = vunpack.c.l.b16 %v708
    %v3189 = vunpack.c.h.b16 %v708
    %v3190 = vunpack.c.l.b16 %v709
    %v3191 = vunpack.c.h.b16 %v709
    %v3192 = vunpack.c.l.b16 %v710
    %v3193 = vunpack.c.h.b16 %v710
    %v3194 = vunpack.c.l.b16 %v711
    %v3195 = vunpack.c.h.b16 %v711
    %v3196 = vunpack.c.l.b16 %v712
    %v3197 = vunpack.c.h.b16 %v712
    %v3198 = vunpack.c.l.b16 %v713
    %v3199 = vunpack.c.h.b16 %v713
    %v3200 = vunpack.c.l.b16 %v714
    %v3201 = vunpack.c.h.b16 %v714
    %v3202 = vunpack.c.l.b16 %v715
    %v3203 = vunpack.c.h.b16 %v715
    %v3204 = vunpack.c.l.b16 %v716
    %v3205 = vunpack.c.h.b16 %v716
    %v3206 = vunpack.c.l.b16 %v717
    %v3207 = vunpack.c.h.b16 %v717
    %v3208 = vunpack.c.l.b16 %v718
    %v3209 = vunpack.c.h.b16 %v718
    %v3210 = vunpack.c.l.b16 %v719
    %v3211 = vunpack.c.h.b16 %v719
    %v3212 = vunpack.c.l.b16 %v720
    %v3213 = vunpack.c.h.b16 %v720
    %v3214 = vunpack.c.l.b16 %v721
    %v3215 = vunpack.c.h.b16 %v721
    %v3216 = vunpack.c.l.b16 %v722
    %v3217 = vunpack.c.h.b16 %v722
    %v3218 = vunpack.c.l.b16 %v723
    %v3219 = vunpack.c.h.b16 %v723
    %v3220 = vunpack.c.l.b16 %v724
    %v3221 = vunpack.c.h.b16 %v724
    %v3222 = vunpack.c.l.b16 %v725
    %v3223 = vunpack.c.h.b16 %v725
    %v3224 = vunpack.c.l.b16 %v726
    %v3225 = vunpack.c.h.b16 %v726
    %v3226 = vunpack.c.l.b16 %v727
    %v3227 = vunpack.c.h.b16 %v727
    %v3228 = vunpack.c.l.b16 %v728
    %v3229 = vunpack.c.h.b16 %v728
    %v3230 = vunpack.c.l.b16 %v729
    %v3231 = vunpack.c.h.b16 %v729
    %v3232 = vunpack.c.l.b16 %v730
    %v3233 = vunpack.c.h.b16 %v730
    %v3234 = vunpack.c.l.b16 %v731
    %v3235 = vunpack.c.h.b16 %v731
    %v3236 = vunpack.c.l.b16 %v732
    %v3237 = vunpack.c.h.b16 %v732
    %v3238 = vunpack.c.l.b16 %v733
    %v3239 = vunpack.c.h.b16 %v733
    %v3240 = vunpack.c.l.b16 %v734
    %v3241 = vunpack.c.h.b16 %v734
    %v3242 = vunpack.c.l.b16 %v735
    %v3243 = vunpack.c.h.b16 %v735
    %v3244 = vunpack.c.l.b16 %v736
    %v3245 = vunpack.c.h.b16 %v736
    %v3246 = vunpack.c.l.b16 %v737
    %v3247 = vunpack.c.h.b16 %v737
    %v3248 = vunpack.c.l.b16 %v738
    %v3249 = vunpack.c.h.b16 %v738
    %v3250 = vunpack.c.l.b16 %v739
    %v3251 = vunpack.c.h.b16 %v739
    %v3252 = vunpack.c.l.b16 %v740
    %v3253 = vunpack.c.h.b16 %v740
    %v3254 = vunpack.c.l.b16 %v741
    %v3255 = vunpack.c.h.b16 %v741
    %v3256 = vunpack.c.l.b16 %v742
    %v3257 = vunpack.c.h.b16 %v742
    %v3258 = vunpack.c.l.b16 %v743
    %v3259 = vunpack.c.h.b16 %v743
    %v3260 = vunpack.c.l.b16 %v744
    %v3261 = vunpack.c.h.b16 %v744
    %v3262 = vunpack.c.l.b16 %v745
    %v3263 = vunpack.c.h.b16 %v745
    %v3264 = vunpack.c.l.b16 %v746
    %v3265 = vunpack.c.h.b16 %v746
    %v3266 = vunpack.c.l.b16 %v747
    %v3267 = vunpack.c.h.b16 %v747
    %v3268 = vunpack.c.l.b16 %v748
    %v3269 = vunpack.c.h.b16 %v748
    %v3270 = vunpack.c.l.b16 %v749
    %v3271 = vunpack.c.h.b16 %v749
    %v3272 = vunpack.c.l.b16 %v750
    %v3273 = vunpack.c.h.b16 %v750
    %v3274 = vunpack.c.l.b16 %v751
    %v3275 = vunpack.c.h.b16 %v751
    %v3276 = vunpack.c.l.b16 %v752
    %v3277 = vunpack.c.h.b16 %v752
    %v3278 = vunpack.c.l.b16 %v753
    %v3279 = vunpack.c.h.b16 %v753
    %v3280 = vunpack.c.l.b16 %v754
    %v3281 = vunpack.c.h.b16 %v754
    %v3282 = vunpack.c.l.b16 %v755
    %v3283 = vunpack.c.h.b16 %v755
    %v3284 = vunpack.c.l.b16 %v756
    %v3285 = vunpack.c.h.b16 %v756
    %v3286 = vunpack.c.l.b16 %v757
    %v3287 = vunpack.c.h.b16 %v757
    %v3288 = vunpack.c.l.b16 %v758
    %v3289 = vunpack.c.h.b16 %v758
    %v3290 = vunpack.c.l.b16 %v759
    %v3291 = vunpack.c.h.b16 %v759
    %v3292 = vunpack.c.l.b16 %v760
    %v3293 = vunpack.c.h.b16 %v760
    %v3294 = vunpack.c.l.b16 %v761
    %v3295 = vunpack.c.h.b16 %v761
    %v3296 = vunpack.c.l.b16 %v762
    %v3297 = vunpack.c.h.b16 %v762
    %v3298 = vunpack.c.l.b16 %v763
    %v3299 = vunpack.c.h.b16 %v763
    %v3300 = vunpack.c.l.b16 %v764
    %v3301 = vunpack.c.h.b16 %v764
    %v3302 = vunpack.c.l.b16 %v765
    %v3303 = vunpack.c.h.b16 %v765
    %v3304 = vunpack.c.l.b16 %v766
    %v3305 = vunpack.c.h.b16 %v766
    %v3306 = vunpack.c.l.b16 %v767
    %v3307 = vunpack.c.h.b16 %v767
    %v3308 = vunpack.c.l.b16 %v768
    %v3309 = vunpack.c.h.b16 %v768
    %v3310 = vunpack.c.l.b16 %v769
    %v3311 = vunpack.c.h.b16 %v769
    %v3312 = vunpack.c.l.b16 %v770
    %v3313 = vunpack.c.h.b16 %v770
    %v3314 = vunpack.c.l.b16 %v771
    %v3315 = vunpack.c.h.b16 %v771
    %v3316 = vunpack.c.l.b16 %v772
    %v3317 = vunpack.c.h.b16 %v772
    %v3318 = vunpack.c.l.b16 %v773
    %v3319 = vunpack.c.h.b16 %v773
    %v3320 = vunpack.c.l.b16 %v774
    %v3321 = vunpack.c.h.b16 %v774
    %v3322 = vunpack.c.l.b16 %v775
    %v3323 = vunpack.c.h.b16 %v775
    %v3324 = vunpack.c.l.b16 %v776
    %v3325 = vunpack.c.h.b16 %v776
    %v3326 = vunpack.c.l.b16 %v777
    %v3327 = vunpack.c.h.b16 %v777
    %v3328 = vunpack.c.l.b16 %v778
    %v3329 = vunpack.c.h.b16 %v778
    %v3330 = vunpack.c.l.b16 %v779
    %v3331 = vunpack.c.h.b16 %v779
    %v3332 = vunpack.c.l.b16 %v780
    %v3333 = vunpack.c.h.b16 %v780
    %v3334 = vunpack.c.l.b16 %v781
    %v3335 = vunpack.c.h.b16 %v781
    %v3336 = vunpack.c.l.b16 %v782
    %v3337 = vunpack.c.h.b16 %v782
    %v3338 = vunpack.c.l.b16 %v783
    %v3339 = vunpack.c.h.b16 %v783
    %v3340 = vunpack.c.l.b16 %v784
    %v3341 = vunpack.c.h.b16 %v784
    %v3342 = vunpack.c.l.b16 %v785
    %v3343 = vunpack.c.h.b16 %v785
    %v3344 = vunpack.c.l.b16 %v786
    %v3345 = vunpack.c.h.b16 %v786
    %v3346 = vunpack.c.l.b16 %v787
    %v3347 = vunpack.c.h.b16 %v787
    %v3348 = vunpack.c.l.b16 %v788
    %v3349 = vunpack.c.h.b16 %v788
    %v3350 = vunpack.c.l.b16 %v789
    %v3351 = vunpack.c.h.b16 %v789
    %v3352 = vunpack.c.l.b16 %v790
    %v3353 = vunpack.c.h.b16 %v790
    %v3354 = vunpack.c.l.b16 %v791
    %v3355 = vunpack.c.h.b16 %v791
    %v3356 = vunpack.c.l.b16 %v792
    %v3357 = vunpack.c.h.b16 %v792
    %v3358 = vunpack.c.l.b16 %v793
    %v3359 = vunpack.c.h.b16 %v793
    %v3360 = vunpack.c.l.b16 %v794
    %v3361 = vunpack.c.h.b16 %v794
    %v3362 = vunpack.c.l.b16 %v795
    %v3363 = vunpack.c.h.b16 %v795
    %v3364 = vunpack.c.l.b16 %v796
    %v3365 = vunpack.c.h.b16 %v796
    %v3366 = vunpack.c.l.b16 %v797
    %v3367 = vunpack.c.h.b16 %v797
    %v3368 = vunpack.c.l.b16 %v798
    %v3369 = vunpack.c.h.b16 %v798
    %v3370 = vunpack.c.l.b16 %v799
    %v3371 = vunpack.c.h.b16 %v799
    %v3372 = vunpack.c.l.b16 %v800
    %v3373 = vunpack.c.h.b16 %v800
    %v3374 = vunpack.c.l.b16 %v801
    %v3375 = vunpack.c.h.b16 %v801
    %v3376 = vunpack.c.l.b16 %v802
    %v3377 = vunpack.c.h.b16 %v802
    %v3378 = vunpack.c.l.b16 %v803
    %v3379 = vunpack.c.h.b16 %v803
    %v3380 = vunpack.c.l.b16 %v804
    %v3381 = vunpack.c.h.b16 %v804
    %v3382 = vunpack.c.l.b16 %v805
    %v3383 = vunpack.c.h.b16 %v805
    %v3384 = vunpack.c.l.b16 %v806
    %v3385 = vunpack.c.h.b16 %v806
    %v3386 = vunpack.c.l.b16 %v807
    %v3387 = vunpack.c.h.b16 %v807
    %v3388 = vunpack.c.l.b16 %v808
    %v3389 = vunpack.c.h.b16 %v808
    %v3390 = vunpack.c.l.b16 %v809
    %v3391 = vunpack.c.h.b16 %v809
    %v3392 = vunpack.c.l.b16 %v810
    %v3393 = vunpack.c.h.b16 %v810
    %v3394 = vunpack.c.l.b16 %v811
    %v3395 = vunpack.c.h.b16 %v811
    %v3396 = vunpack.c.l.b16 %v812
    %v3397 = vunpack.c.h.b16 %v812
    %v3398 = vunpack.c.l.b16 %v813
    %v3399 = vunpack.c.h.b16 %v813
    %v3400 = vunpack.c.l.b16 %v814
    %v3401 = vunpack.c.h.b16 %v814
    %v3402 = vunpack.c.l.b16 %v815
    %v3403 = vunpack.c.h.b16 %v815
    %v3404 = vunpack.c.l.b16 %v816
    %v3405 = vunpack.c.h.b16 %v816
    %v3406 = vunpack.c.l.b16 %v817
    %v3407 = vunpack.c.h.b16 %v817
    %v3408 = vunpack.c.l.b16 %v818
    %v3409 = vunpack.c.h.b16 %v818
    %v3410 = vunpack.c.l.b16 %v819
    %v3411 = vunpack.c.h.b16 %v819
    %v3412 = vunpack.c.l.b16 %v820
    %v3413 = vunpack.c.h.b16 %v820
    %v3414 = vunpack.c.l.b16 %v821
    %v3415 = vunpack.c.h.b16 %v821
    %v3416 = vunpack.c.l.b16 %v822
    %v3417 = vunpack.c.h.b16 %v822
    %v3418 = vunpack.c.l.b16 %v823
    %v3419 = vunpack.c.h.b16 %v823
    %v3420 = vunpack.c.l.b16 %v824
    %v3421 = vunpack.c.h.b16 %v824
    %v3422 = vunpack.c.l.b16 %v825
    %v3423 = vunpack.c.h.b16 %v825
    %v3424 = vunpack.c.l.b16 %v826
    %v3425 = vunpack.c.h.b16 %v826
    %v3426 = vunpack.c.l.b16 %v827
    %v3427 = vunpack.c.h.b16 %v827
    %v3428 = vunpack.c.l.b16 %v828
    %v3429 = vunpack.c.h.b16 %v828
    %v3430 = vunpack.c.l.b16 %v829
    %v3431 = vunpack.c.h.b16 %v829
    %v3432 = vunpack.c.l.b16 %v830
    %v3433 = vunpack.c.h.b16 %v830
    %v3434 = vunpack.c.l.b16 %v831
    %v3435 = vunpack.c.h.b16 %v831
    %v3436 = vunpack.c.l.b16 %v832
    %v3437 = vunpack.c.h.b16 %v832
    %v3438 = vunpack.c.l.b16 %v833
    %v3439 = vunpack.c.h.b16 %v833
    %v3440 = vunpack.c.l.b16 %v834
    %v3441 = vunpack.c.h.b16 %v834
    %v3442 = vunpack.c.l.b16 %v835
    %v3443 = vunpack.c.h.b16 %v835
    %v3444 = vunpack.c.l.b16 %v836
    %v3445 = vunpack.c.h.b16 %v836
    %v3446 = vunpack.c.l.b16 %v837
    %v3447 = vunpack.c.h.b16 %v837
    %v3448 = vunpack.c.l.b16 %v838
    %v3449 = vunpack.c.h.b16 %v838
    %v3450 = vunpack.c.l.b16 %v839
    %v3451 = vunpack.c.h.b16 %v839
    %v3452 = vunpack.c.l.b16 %v840
    %v3453 = vunpack.c.h.b16 %v840
    %v3454 = vunpack.c.l.b16 %v841
    %v3455 = vunpack.c.h.b16 %v841
    %v3456 = vunpack.c.l.b16 %v842
    %v3457 = vunpack.c.h.b16 %v842
    %v3458 = vunpack.c.l.b16 %v843
    %v3459 = vunpack.c.h.b16 %v843
    %v3460 = vunpack.c.l.b16 %v844
    %v3461 = vunpack.c.h.b16 %v844
    %v3462 = vunpack.c.l.b16 %v845
    %v3463 = vunpack.c.h.b16 %v845
    %v3464 = vunpack.c.l.b16 %v846
    %v3465 = vunpack.c.h.b16 %v846
    %v3466 = vunpack.c.l.b16 %v847
    %v3467 = vunpack.c.h.b16 %v847
    %v3468 = vunpack.c.l.b16 %v848
    %v3469 = vunpack.c.h.b16 %v848
    %v3470 = vunpack.c.l.b16 %v849
    %v3471 = vunpack.c.h.b16 %v849
    %v3472 = vunpack.c.l.b16 %v850
    %v3473 = vunpack.c.h.b16 %v850
    %v3474 = vunpack.c.l.b16 %v851
    %v3475 = vunpack.c.h.b16 %v851
    %v3476 = vunpack.c.l.b16 %v852
    %v3477 = vunpack.c.h.b16 %v852
    %v3478 = vunpack.c.l.b16 %v853
    %v3479 = vunpack.c.h.b16 %v853
    %v3480 = vunpack.c.l.b16 %v854
    %v3481 = vunpack.c.h.b16 %v854
    %v3482 = vunpack.c.l.b16 %v855
    %v3483 = vunpack.c.h.b16 %v855
    %v3484 = vunpack.c.l.b16 %v856
    %v3485 = vunpack.c.h.b16 %v856
    %v3486 = vunpack.c.l.b16 %v857
    %v3487 = vunpack.c.h.b16 %v857
    %v3488 = vunpack.c.l.b16 %v858
    %v3489 = vunpack.c.h.b16 %v858
    %v3490 = vunpack.c.l.b16 %v859
    %v3491 = vunpack.c.h.b16 %v859
    %v3492 = vunpack.c.l.b16 %v860
    %v3493 = vunpack.c.h.b16 %v860
    %v3494 = vunpack.c.l.b16 %v861
    %v3495 = vunpack.c.h.b16 %v861
    %v3496 = vunpack.c.l.b16 %v862
    %v3497 = vunpack.c.h.b16 %v862
    %v3498 = vunpack.c.l.b16 %v863
    %v3499 = vunpack.c.h.b16 %v863
    %v3500 = vunpack.c.l.b16 %v864
    %v3501 = vunpack.c.h.b16 %v864
    %v3502 = vunpack.c.l.b16 %v865
    %v3503 = vunpack.c.h.b16 %v865
    %v3504 = vunpack.c.l.b16 %v866
    %v3505 = vunpack.c.h.b16 %v866
    %v3506 = vunpack.c.l.b16 %v867
    %v3507 = vunpack.c.h.b16 %v867
    %v3508 = vunpack.c.l.b16 %v868
    %v3509 = vunpack.c.h.b16 %v868
    %v3510 = vunpack.c.l.b16 %v869
    %v3511 = vunpack.c.h.b16 %v869
    %v3512 = vunpack.c.l.b16 %v870
    %v3513 = vunpack.c.h.b16 %v870
    %v3514 = vunpack.c.l.b16 %v871
    %v3515 = vunpack.c.h.b16 %v871
    %v3516 = vunpack.c.l.b16 %v872
    %v3517 = vunpack.c.h.b16 %v872
    %v3518 = vunpack.c.l.b16 %v873
    %v3519 = vunpack.c.h.b16 %v873
    %v3520 = vunpack.c.l.b16 %v874
    %v3521 = vunpack.c.h.b16 %v874
    %v3522 = vunpack.c.l.b16 %v875
    %v3523 = vunpack.c.h.b16 %v875
    %v3524 = vunpack.c.l.b16 %v876
    %v3525 = vunpack.c.h.b16 %v876
    %v3526 = vunpack.c.l.b16 %v877
    %v3527 = vunpack.c.h.b16 %v877
    %v3528 = vunpack.c.l.b16 %v878
    %v3529 = vunpack.c.h.b16 %v878
    %v3530 = vunpack.c.l.b16 %v879
    %v3531 = vunpack.c.h.b16 %v879
    %v3532 = vunpack.c.l.b16 %v880
    %v3533 = vunpack.c.h.b16 %v880
    %v3534 = vunpack.c.l.b16 %v881
    %v3535 = vunpack.c.h.b16 %v881
    %v3536 = vunpack.c.l.b16 %v882
    %v3537 = vunpack.c.h.b16 %v882
    %v3538 = vunpack.c.l.b16 %v883
    %v3539 = vunpack.c.h.b16 %v883
    %v3540 = vunpack.c.l.b16 %v884
    %v3541 = vunpack.c.h.b16 %v884
    %v3542 = vunpack.c.l.b16 %v885
    %v3543 = vunpack.c.h.b16 %v885
    %v3544 = vunpack.c.l.b16 %v886
    %v3545 = vunpack.c.h.b16 %v886
    %v3546 = vunpack.c.l.b16 %v887
    %v3547 = vunpack.c.h.b16 %v887
    %v3548 = vunpack.c.l.b16 %v888
    %v3549 = vunpack.c.h.b16 %v888
    %v3550 = vunpack.c.l.b16 %v889
    %v3551 = vunpack.c.h.b16 %v889
    %v3552 = vpack.c.b16 %v1954, %v1952
    %v3553 = vpack.c.b16 %v1955, %v1953
    %v3554 = vpack.c.b16 %v1958, %v1956
    %v3555 = vpack.c.b16 %v1959, %v1957
    %v3556 = vpack.c.b16 %v1962, %v1960
    %v3557 = vpack.c.b16 %v1963, %v1961
    %v3558 = vpack.c.b16 %v1966, %v1964
    %v3559 = vpack.c.b16 %v1967, %v1965
    %v3560 = vpack.c.b16 %v1970, %v1968
    %v3561 = vpack.c.b16 %v1971, %v1969
    %v3562 = vpack.c.b16 %v1974, %v1972
    %v3563 = vpack.c.b16 %v1975, %v1973
    %v3564 = vpack.c.b16 %v1978, %v1976
    %v3565 = vpack.c.b16 %v1979, %v1977
    %v3566 = vpack.c.b16 %v1982, %v1980
    %v3567 = vpack.c.b16 %v1983, %v1981
    %v3568 = vpack.c.b16 %v1986, %v1984
    %v3569 = vpack.c.b16 %v1987, %v1985
    %v3570 = vpack.c.b16 %v1990, %v1988
    %v3571 = vpack.c.b16 %v1991, %v1989
    %v3572 = vpack.c.b16 %v1994, %v1992
    %v3573 = vpack.c.b16 %v1995, %v1993
    %v3574 = vpack.c.b16 %v1998, %v1996
    %v3575 = vpack.c.b16 %v1999, %v1997
    %v3576 = vpack.c.b16 %v2002, %v2000
    %v3577 = vpack.c.b16 %v2003, %v2001
    %v3578 = vpack.c.b16 %v2006, %v2004
    %v3579 = vpack.c.b16 %v2007, %v2005
    %v3580 = vpack.c.b16 %v2010, %v2008
    %v3581 = vpack.c.b16 %v2011, %v2009
    %v3582 = vpack.c.b16 %v2014, %v2012
    %v3583 = vpack.c.b16 %v2015, %v2013
    %v3584 = vpack.c.b16 %v2018, %v2016
    %v3585 = vpack.c.b16 %v2019, %v2017
    %v3586 = vpack.c.b16 %v2022, %v2020
    %v3587 = vpack.c.b16 %v2023, %v2021
    %v3588 = vpack.c.b16 %v2026, %v2024
    %v3589 = vpack.c.b16 %v2027, %v2025
    %v3590 = vpack.c.b16 %v2030, %v2028
    %v3591 = vpack.c.b16 %v2031, %v2029
    %v3592 = vpack.c.b16 %v2034, %v2032
    %v3593 = vpack.c.b16 %v2035, %v2033
    %v3594 = vpack.c.b16 %v2038, %v2036
    %v3595 = vpack.c.b16 %v2039, %v2037
    %v3596 = vpack.c.b16 %v2042, %v2040
    %v3597 = vpack.c.b16 %v2043, %v2041
    %v3598 = vpack.c.b16 %v2046, %v2044
    %v3599 = vpack.c.b16 %v2047, %v2045
    %v3600 = vpack.c.b16 %v2050, %v2048
    %v3601 = vpack.c.b16 %v2051, %v2049
    %v3602 = vpack.c.b16 %v2054, %v2052
    %v3603 = vpack.c.b16 %v2055, %v2053
    %v3604 = vpack.c.b16 %v2058, %v2056
    %v3605 = vpack.c.b16 %v2059, %v2057
    %v3606 = vpack.c.b16 %v2062, %v2060
    %v3607 = vpack.c.b16 %v2063, %v2061
    %v3608 = vpack.c.b16 %v2066, %v2064
    %v3609 = vpack.c.b16 %v2067, %v2065
    %v3610 = vpack.c.b16 %v2070, %v2068
    %v3611 = vpack.c.b16 %v2071, %v2069
    %v3612 = vpack.c.b16 %v2074, %v2072
    %v3613 = vpack.c.b16 %v2075, %v2073
    %v3614 = vpack.c.b16 %v2078, %v2076
    %v3615 = vpack.c.b16 %v2079, %v2077
    %v3616 = vpack.c.b16 %v2082, %v2080
    %v3617 = vpack.c.b16 %v2083, %v2081
    %v3618 = vpack.c.b16 %v2086, %v2084
    %v3619 = vpack.c.b16 %v2087, %v2085
    %v3620 = vpack.c.b16 %v2090, %v2088
    %v3621 = vpack.c.b16 %v2091, %v2089
    %v3622 = vpack.c.b16 %v2094, %v2092
    %v3623 = vpack.c.b16 %v2095, %v2093
    %v3624 = vpack.c.b16 %v2098, %v2096
    %v3625 = vpack.c.b16 %v2099, %v2097
    %v3626 = vpack.c.b16 %v2102, %v2100
    %v3627 = vpack.c.b16 %v2103, %v2101
    %v3628 = vpack.c.b16 %v2106, %v2104
    %v3629 = vpack.c.b16 %v2107, %v2105
    %v3630 = vpack.c.b16 %v2110, %v2108
    %v3631 = vpack.c.b16 %v2111, %v2109
    %v3632 = vpack.c.b16 %v2114, %v2112
    %v3633 = vpack.c.b16 %v2115, %v2113
    %v3634 = vpack.c.b16 %v2118, %v2116
    %v3635 = vpack.c.b16 %v2119, %v2117
    %v3636 = vpack.c.b16 %v2122, %v2120
    %v3637 = vpack.c.b16 %v2123, %v2121
    %v3638 = vpack.c.b16 %v2126, %v2124
    %v3639 = vpack.c.b16 %v2127, %v2125
    %v3640 = vpack.c.b16 %v2130, %v2128
    %v3641 = vpack.c.b16 %v2131, %v2129
    %v3642 = vpack.c.b16 %v2134, %v2132
    %v3643 = vpack.c.b16 %v2135, %v2133
    %v3644 = vpack.c.b16 %v2138, %v2136
    %v3645 = vpack.c.b16 %v2139, %v2137
    %v3646 = vpack.c.b16 %v2142, %v2140
    %v3647 = vpack.c.b16 %v2143, %v2141
    %v3648 = vpack.c.b16 %v2146, %v2144
    %v3649 = vpack.c.b16 %v2147, %v2145
    %v3650 = vpack.c.b16 %v2150, %v2148
    %v3651 = vpack.c.b16 %v2151, %v2149
    %v3652 = vpack.c.b16 %v2154, %v2152
    %v3653 = vpack.c.b16 %v2155, %v2153
    %v3654 = vpack.c.b16 %v2158, %v2156
    %v3655 = vpack.c.b16 %v2159, %v2157
    %v3656 = vpack.c.b16 %v2162, %v2160
    %v3657 = vpack.c.b16 %v2163, %v2161
    %v3658 = vpack.c.b16 %v2166, %v2164
    %v3659 = vpack.c.b16 %v2167, %v2165
    %v3660 = vpack.c.b16 %v2170, %v2168
    %v3661 = vpack.c.b16 %v2171, %v2169
    %v3662 = vpack.c.b16 %v2174, %v2172
    %v3663 = vpack.c.b16 %v2175, %v2173
    %v3664 = vpack.c.b16 %v2178, %v2176
    %v3665 = vpack.c.b16 %v2179, %v2177
    %v3666 = vpack.c.b16 %v2182, %v2180
    %v3667 = vpack.c.b16 %v2183, %v2181
    %v3668 = vpack.c.b16 %v2186, %v2184
    %v3669 = vpack.c.b16 %v2187, %v2185
    %v3670 = vpack.c.b16 %v2190, %v2188
    %v3671 = vpack.c.b16 %v2191, %v2189
    %v3672 = vpack.c.b16 %v2194, %v2192
    %v3673 = vpack.c.b16 %v2195, %v2193
    %v3674 = vpack.c.b16 %v2198, %v2196
    %v3675 = vpack.c.b16 %v2199, %v2197
    %v3676 = vpack.c.b16 %v2202, %v2200
    %v3677 = vpack.c.b16 %v2203, %v2201
    %v3678 = vpack.c.b16 %v2206, %v2204
    %v3679 = vpack.c.b16 %v2207, %v2205
    %v3680 = vpack.c.b16 %v2210, %v2208
    %v3681 = vpack.c.b16 %v2211, %v2209
    %v3682 = vpack.c.b16 %v2214, %v2212
    %v3683 = vpack.c.b16 %v2215, %v2213
    %v3684 = vpack.c.b16 %v2218, %v2216
    %v3685 = vpack.c.b16 %v2219, %v2217
    %v3686 = vpack.c.b16 %v2222, %v2220
    %v3687 = vpack.c.b16 %v2223, %v2221
    %v3688 = vpack.c.b16 %v2226, %v2224
    %v3689 = vpack.c.b16 %v2227, %v2225
    %v3690 = vpack.c.b16 %v2230, %v2228
    %v3691 = vpack.c.b16 %v2231, %v2229
    %v3692 = vpack.c.b16 %v2234, %v2232
    %v3693 = vpack.c.b16 %v2235, %v2233
    %v3694 = vpack.c.b16 %v2238, %v2236
    %v3695 = vpack.c.b16 %v2239, %v2237
    %v3696 = vpack.c.b16 %v2242, %v2240
    %v3697 = vpack.c.b16 %v2243, %v2241
    %v3698 = vpack.c.b16 %v2246, %v2244
    %v3699 = vpack.c.b16 %v2247, %v2245
    %v3700 = vpack.c.b16 %v2250, %v2248
    %v3701 = vpack.c.b16 %v2251, %v2249
    %v3702 = vpack.c.b16 %v2254, %v2252
    %v3703 = vpack.c.b16 %v2255, %v2253
    %v3704 = vpack.c.b16 %v2258, %v2256
    %v3705 = vpack.c.b16 %v2259, %v2257
    %v3706 = vpack.c.b16 %v2262, %v2260
    %v3707 = vpack.c.b16 %v2263, %v2261
    %v3708 = vpack.c.b16 %v2266, %v2264
    %v3709 = vpack.c.b16 %v2267, %v2265
    %v3710 = vpack.c.b16 %v2270, %v2268
    %v3711 = vpack.c.b16 %v2271, %v2269
    %v3712 = vpack.c.b16 %v2274, %v2272
    %v3713 = vpack.c.b16 %v2275, %v2273
    %v3714 = vpack.c.b16 %v2278, %v2276
    %v3715 = vpack.c.b16 %v2279, %v2277
    %v3716 = vpack.c.b16 %v2282, %v2280
    %v3717 = vpack.c.b16 %v2283, %v2281
    %v3718 = vpack.c.b16 %v2286, %v2284
    %v3719 = vpack.c.b16 %v2287, %v2285
    %v3720 = vpack.c.b16 %v2290, %v2288
    %v3721 = vpack.c.b16 %v2291, %v2289
    %v3722 = vpack.c.b16 %v2294, %v2292
    %v3723 = vpack.c.b16 %v2295, %v2293
    %v3724 = vpack.c.b16 %v2298, %v2296
    %v3725 = vpack.c.b16 %v2299, %v2297
    %v3726 = vpack.c.b16 %v2302, %v2300
    %v3727 = vpack.c.b16 %v2303, %v2301
    %v3728 = vpack.c.b16 %v2306, %v2304
    %v3729 = vpack.c.b16 %v2307, %v2305
    %v3730 = vpack.c.b16 %v2310, %v2308
    %v3731 = vpack.c.b16 %v2311, %v2309
    %v3732 = vpack.c.b16 %v2314, %v2312
    %v3733 = vpack.c.b16 %v2315, %v2313
    %v3734 = vpack.c.b16 %v2318, %v2316
    %v3735 = vpack.c.b16 %v2319, %v2317
    %v3736 = vpack.c.b16 %v2322, %v2320
    %v3737 = vpack.c.b16 %v2323, %v2321
    %v3738 = vpack.c.b16 %v2326, %v2324
    %v3739 = vpack.c.b16 %v2327, %v2325
    %v3740 = vpack.c.b16 %v2330, %v2328
    %v3741 = vpack.c.b16 %v2331, %v2329
    %v3742 = vpack.c.b16 %v2334, %v2332
    %v3743 = vpack.c.b16 %v2335, %v2333
    %v3744 = vpack.c.b16 %v2338, %v2336
    %v3745 = vpack.c.b16 %v2339, %v2337
    %v3746 = vpack.c.b16 %v2342, %v2340
    %v3747 = vpack.c.b16 %v2343, %v2341
    %v3748 = vpack.c.b16 %v2346, %v2344
    %v3749 = vpack.c.b16 %v2347, %v2345
    %v3750 = vpack.c.b16 %v2350, %v2348
    %v3751 = vpack.c.b16 %v2351, %v2349
    %v3752 = vpack.c.b16 %v2354, %v2352
    %v3753 = vpack.c.b16 %v2355, %v2353
    %v3754 = vpack.c.b16 %v2358, %v2356
    %v3755 = vpack.c.b16 %v2359, %v2357
    %v3756 = vpack.c.b16 %v2362, %v2360
    %v3757 = vpack.c.b16 %v2363, %v2361
    %v3758 = vpack.c.b16 %v2366, %v2364
    %v3759 = vpack.c.b16 %v2367, %v2365
    %v3760 = vpack.c.b16 %v2370, %v2368
    %v3761 = vpack.c.b16 %v2371, %v2369
    %v3762 = vpack.c.b16 %v2374, %v2372
    %v3763 = vpack.c.b16 %v2375, %v2373
    %v3764 = vpack.c.b16 %v2378, %v2376
    %v3765 = vpack.c.b16 %v2379, %v2377
    %v3766 = vpack.c.b16 %v2382, %v2380
    %v3767 = vpack.c.b16 %v2383, %v2381
    %v3768 = vpack.c.b16 %v2386, %v2384
    %v3769 = vpack.c.b16 %v2387, %v2385
    %v3770 = vpack.c.b16 %v2390, %v2388
    %v3771 = vpack.c.b16 %v2391, %v2389
    %v3772 = vpack.c.b16 %v2394, %v2392
    %v3773 = vpack.c.b16 %v2395, %v2393
    %v3774 = vpack.c.b16 %v2398, %v2396
    %v3775 = vpack.c.b16 %v2399, %v2397
    %v3776 = vpack.c.b16 %v2402, %v2400
    %v3777 = vpack.c.b16 %v2403, %v2401
    %v3778 = vpack.c.b16 %v2406, %v2404
    %v3779 = vpack.c.b16 %v2407, %v2405
    %v3780 = vpack.c.b16 %v2410, %v2408
    %v3781 = vpack.c.b16 %v2411, %v2409
    %v3782 = vpack.c.b16 %v2414, %v2412
    %v3783 = vpack.c.b16 %v2415, %v2413
    %v3784 = vpack.c.b16 %v2418, %v2416
    %v3785 = vpack.c.b16 %v2419, %v2417
    %v3786 = vpack.c.b16 %v2422, %v2420
    %v3787 = vpack.c.b16 %v2423, %v2421
    %v3788 = vpack.c.b16 %v2426, %v2424
    %v3789 = vpack.c.b16 %v2427, %v2425
    %v3790 = vpack.c.b16 %v2430, %v2428
    %v3791 = vpack.c.b16 %v2431, %v2429
    %v3792 = vpack.c.b16 %v2434, %v2432
    %v3793 = vpack.c.b16 %v2435, %v2433
    %v3794 = vpack.c.b16 %v2438, %v2436
    %v3795 = vpack.c.b16 %v2439, %v2437
    %v3796 = vpack.c.b16 %v2442, %v2440
    %v3797 = vpack.c.b16 %v2443, %v2441
    %v3798 = vpack.c.b16 %v2446, %v2444
    %v3799 = vpack.c.b16 %v2447, %v2445
    %v3800 = vpack.c.b16 %v2450, %v2448
    %v3801 = vpack.c.b16 %v2451, %v2449
    %v3802 = vpack.c.b16 %v2454, %v2452
    %v3803 = vpack.c.b16 %v2455, %v2453
    %v3804 = vpack.c.b16 %v2458, %v2456
    %v3805 = vpack.c.b16 %v2459, %v2457
    %v3806 = vpack.c.b16 %v2462, %v2460
    %v3807 = vpack.c.b16 %v2463, %v2461
    %v3808 = vpack.c.b16 %v2466, %v2464
    %v3809 = vpack.c.b16 %v2467, %v2465
    %v3810 = vpack.c.b16 %v2470, %v2468
    %v3811 = vpack.c.b16 %v2471, %v2469
    %v3812 = vpack.c.b16 %v2474, %v2472
    %v3813 = vpack.c.b16 %v2475, %v2473
    %v3814 = vpack.c.b16 %v2478, %v2476
    %v3815 = vpack.c.b16 %v2479, %v2477
    %v3816 = vpack.c.b16 %v2482, %v2480
    %v3817 = vpack.c.b16 %v2483, %v2481
    %v3818 = vpack.c.b16 %v2486, %v2484
    %v3819 = vpack.c.b16 %v2487, %v2485
    %v3820 = vpack.c.b16 %v2490, %v2488
    %v3821 = vpack.c.b16 %v2491, %v2489
    %v3822 = vpack.c.b16 %v2494, %v2492
    %v3823 = vpack.c.b16 %v2495, %v2493
    %v3824 = vpack.c.b16 %v2498, %v2496
    %v3825 = vpack.c.b16 %v2499, %v2497
    %v3826 = vpack.c.b16 %v2502, %v2500
    %v3827 = vpack.c.b16 %v2503, %v2501
    %v3828 = vpack.c.b16 %v2506, %v2504
    %v3829 = vpack.c.b16 %v2507, %v2505
    %v3830 = vpack.c.b16 %v2510, %v2508
    %v3831 = vpack.c.b16 %v2511, %v2509
    %v3832 = vpack.c.b16 %v2514, %v2512
    %v3833 = vpack.c.b16 %v2515, %v2513
    %v3834 = vpack.c.b16 %v2518, %v2516
    %v3835 = vpack.c.b16 %v2519, %v2517
    %v3836 = vpack.c.b16 %v2522, %v2520
    %v3837 = vpack.c.b16 %v2523, %v2521
    %v3838 = vpack.c.b16 %v2526, %v2524
    %v3839 = vpack.c.b16 %v2527, %v2525
    %v3840 = vpack.c.b16 %v2530, %v2528
    %v3841 = vpack.c.b16 %v2531, %v2529
    %v3842 = vpack.c.b16 %v2534, %v2532
    %v3843 = vpack.c.b16 %v2535, %v2533
    %v3844 = vpack.c.b16 %v2538, %v2536
    %v3845 = vpack.c.b16 %v2539, %v2537
    %v3846 = vpack.c.b16 %v2542, %v2540
    %v3847 = vpack.c.b16 %v2543, %v2541
    %v3848 = vpack.c.b16 %v2546, %v2544
    %v3849 = vpack.c.b16 %v2547, %v2545
    %v3850 = vpack.c.b16 %v2550, %v2548
    %v3851 = vpack.c.b16 %v2551, %v2549
    %v3852 = vpack.c.b16 %v2554, %v2552
    %v3853 = vpack.c.b16 %v2555, %v2553
    %v3854 = vpack.c.b16 %v2558, %v2556
    %v3855 = vpack.c.b16 %v2559, %v2557
    %v3856 = vpack.c.b16 %v2562, %v2560
    %v3857 = vpack.c.b16 %v2563, %v2561
    %v3858 = vpack.c.b16 %v2566, %v2564
    %v3859 = vpack.c.b16 %v2567, %v2565
    %v3860 = vpack.c.b16 %v2570, %v2568
    %v3861 = vpack.c.b16 %v2571, %v2569
    %v3862 = vpack.c.b16 %v2574, %v2572
    %v3863 = vpack.c.b16 %v2575, %v2573
    %v3864 = vpack.c.b16 %v2578, %v2576
    %v3865 = vpack.c.b16 %v2579, %v2577
    %v3866 = vpack.c.b16 %v2582, %v2580
    %v3867 = vpack.c.b16 %v2583, %v2581
    %v3868 = vpack.c.b16 %v2586, %v2584
    %v3869 = vpack.c.b16 %v2587, %v2585
    %v3870 = vpack.c.b16 %v2590, %v2588
    %v3871 = vpack.c.b16 %v2591, %v2589
    %v3872 = vpack.c.b16 %v2594, %v2592
    %v3873 = vpack.c.b16 %v2595, %v2593
    %v3874 = vpack.c.b16 %v2598, %v2596
    %v3875 = vpack.c.b16 %v2599, %v2597
    %v3876 = vpack.c.b16 %v2602, %v2600
    %v3877 = vpack.c.b16 %v2603, %v2601
    %v3878 = vpack.c.b16 %v2606, %v2604
    %v3879 = vpack.c.b16 %v2607, %v2605
    %v3880 = vpack.c.b16 %v2610, %v2608
    %v3881 = vpack.c.b16 %v2611, %v2609
    %v3882 = vpack.c.b16 %v2614, %v2612
    %v3883 = vpack.c.b16 %v2615, %v2613
    %v3884 = vpack.c.b16 %v2618, %v2616
    %v3885 = vpack.c.b16 %v2619, %v2617
    %v3886 = vpack.c.b16 %v2622, %v2620
    %v3887 = vpack.c.b16 %v2623, %v2621
    %v3888 = vpack.c.b16 %v2626, %v2624
    %v3889 = vpack.c.b16 %v2627, %v2625
    %v3890 = vpack.c.b16 %v2630, %v2628
    %v3891 = vpack.c.b16 %v2631, %v2629
    %v3892 = vpack.c.b16 %v2634, %v2632
    %v3893 = vpack.c.b16 %v2635, %v2633
    %v3894 = vpack.c.b16 %v2638, %v2636
    %v3895 = vpack.c.b16 %v2639, %v2637
    %v3896 = vpack.c.b16 %v2642, %v2640
    %v3897 = vpack.c.b16 %v2643, %v2641
    %v3898 = vpack.c.b16 %v2646, %v2644
    %v3899 = vpack.c.b16 %v2647, %v2645
    %v3900 = vpack.c.b16 %v2650, %v2648
    %v3901 = vpack.c.b16 %v2651, %v2649
    %v3902 = vpack.c.b16 %v2654, %v2652
    %v3903 = vpack.c.b16 %v2655, %v2653
    %v3904 = vpack.c.b16 %v2658, %v2656
    %v3905 = vpack.c.b16 %v2659, %v2657
    %v3906 = vpack.c.b16 %v2662, %v2660
    %v3907 = vpack.c.b16 %v2663, %v2661
    %v3908 = vpack.c.b16 %v2666, %v2664
    %v3909 = vpack.c.b16 %v2667, %v2665
    %v3910 = vpack.c.b16 %v2670, %v2668
    %v3911 = vpack.c.b16 %v2671, %v2669
    %v3912 = vpack.c.b16 %v2674, %v2672
    %v3913 = vpack.c.b16 %v2675, %v2673
    %v3914 = vpack.c.b16 %v2678, %v2676
    %v3915 = vpack.c.b16 %v2679, %v2677
    %v3916 = vpack.c.b16 %v2682, %v2680
    %v3917 = vpack.c.b16 %v2683, %v2681
    %v3918 = vpack.c.b16 %v2686, %v2684
    %v3919 = vpack.c.b16 %v2687, %v2685
    %v3920 = vpack.c.b16 %v2690, %v2688
    %v3921 = vpack.c.b16 %v2691, %v2689
    %v3922 = vpack.c.b16 %v2694, %v2692
    %v3923 = vpack.c.b16 %v2695, %v2693
    %v3924 = vpack.c.b16 %v2698, %v2696
    %v3925 = vpack.c.b16 %v2699, %v2697
    %v3926 = vpack.c.b16 %v2702, %v2700
    %v3927 = vpack.c.b16 %v2703, %v2701
    %v3928 = vpack.c.b16 %v2706, %v2704
    %v3929 = vpack.c.b16 %v2707, %v2705
    %v3930 = vpack.c.b16 %v2710, %v2708
    %v3931 = vpack.c.b16 %v2711, %v2709
    %v3932 = vpack.c.b16 %v2714, %v2712
    %v3933 = vpack.c.b16 %v2715, %v2713
    %v3934 = vpack.c.b16 %v2718, %v2716
    %v3935 = vpack.c.b16 %v2719, %v2717
    %v3936 = vpack.c.b16 %v2722, %v2720
    %v3937 = vpack.c.b16 %v2723, %v2721
    %v3938 = vpack.c.b16 %v2726, %v2724
    %v3939 = vpack.c.b16 %v2727, %v2725
    %v3940 = vpack.c.b16 %v2730, %v2728
    %v3941 = vpack.c.b16 %v2731, %v2729
    %v3942 = vpack.c.b16 %v2734, %v2732
    %v3943 = vpack.c.b16 %v2735, %v2733
    %v3944 = vpack.c.b16 %v2738, %v2736
    %v3945 = vpack.c.b16 %v2739, %v2737
    %v3946 = vpack.c.b16 %v2742, %v2740
    %v3947 = vpack.c.b16 %v2743, %v2741
    %v3948 = vpack.c.b16 %v2746, %v2744
    %v3949 = vpack.c.b16 %v2747, %v2745
    %v3950 = vpack.c.b16 %v2750, %v2748
    %v3951 = vpack.c.b16 %v2751, %v2749
    %v3952 = vpack.c.b16 %v2754, %v2752
    %v3953 = vpack.c.b16 %v2755, %v2753
    %v3954 = vpack.c.b16 %v2758, %v2756
    %v3955 = vpack.c.b16 %v2759, %v2757
    %v3956 = vpack.c.b16 %v2762, %v2760
    %v3957 = vpack.c.b16 %v2763, %v2761
    %v3958 = vpack.c.b16 %v2766, %v2764
    %v3959 = vpack.c.b16 %v2767, %v2765
    %v3960 = vpack.c.b16 %v2770, %v2768
    %v3961 = vpack.c.b16 %v2771, %v2769
    %v3962 = vpack.c.b16 %v2774, %v2772
    %v3963 = vpack.c.b16 %v2775, %v2773
    %v3964 = vpack.c.b16 %v2778, %v2776
    %v3965 = vpack.c.b16 %v2779, %v2777
    %v3966 = vpack.c.b16 %v2782, %v2780
    %v3967 = vpack.c.b16 %v2783, %v2781
    %v3968 = vpack.c.b16 %v2786, %v2784
    %v3969 = vpack.c.b16 %v2787, %v2785
    %v3970 = vpack.c.b16 %v2790, %v2788
    %v3971 = vpack.c.b16 %v2791, %v2789
    %v3972 = vpack.c.b16 %v2794, %v2792
    %v3973 = vpack.c.b16 %v2795, %v2793
    %v3974 = vpack.c.b16 %v2798, %v2796
    %v3975 = vpack.c.b16 %v2799, %v2797
    %v3976 = vpack.c.b16 %v2802, %v2800
    %v3977 = vpack.c.b16 %v2803, %v2801
    %v3978 = vpack.c.b16 %v2806, %v2804
    %v3979 = vpack.c.b16 %v2807, %v2805
    %v3980 = vpack.c.b16 %v2810, %v2808
    %v3981 = vpack.c.b16 %v2811, %v2809
    %v3982 = vpack.c.b16 %v2814, %v2812
    %v3983 = vpack.c.b16 %v2815, %v2813
    %v3984 = vpack.c.b16 %v2818, %v2816
    %v3985 = vpack.c.b16 %v2819, %v2817
    %v3986 = vpack.c.b16 %v2822, %v2820
    %v3987 = vpack.c.b16 %v2823, %v2821
    %v3988 = vpack.c.b16 %v2826, %v2824
    %v3989 = vpack.c.b16 %v2827, %v2825
    %v3990 = vpack.c.b16 %v2830, %v2828
    %v3991 = vpack.c.b16 %v2831, %v2829
    %v3992 = vpack.c.b16 %v2834, %v2832
    %v3993 = vpack.c.b16 %v2835, %v2833
    %v3994 = vpack.c.b16 %v2838, %v2836
    %v3995 = vpack.c.b16 %v2839, %v2837
    %v3996 = vpack.c.b16 %v2842, %v2840
    %v3997 = vpack.c.b16 %v2843, %v2841
    %v3998 = vpack.c.b16 %v2846, %v2844
    %v3999 = vpack.c.b16 %v2847, %v2845
    %v4000 = vpack.c.b16 %v2850, %v2848
    %v4001 = vpack.c.b16 %v2851, %v2849
    %v4002 = vpack.c.b16 %v2854, %v2852
    %v4003 = vpack.c.b16 %v2855, %v2853
    %v4004 = vpack.c.b16 %v2858, %v2856
    %v4005 = vpack.c.b16 %v2859, %v2857
    %v4006 = vpack.c.b16 %v2862, %v2860
    %v4007 = vpack.c.b16 %v2863, %v2861
    %v4008 = vpack.c.b16 %v2866, %v2864
    %v4009 = vpack.c.b16 %v2867, %v2865
    %v4010 = vpack.c.b16 %v2870, %v2868
    %v4011 = vpack.c.b16 %v2871, %v2869
    %v4012 = vpack.c.b16 %v2874, %v2872
    %v4013 = vpack.c.b16 %v2875, %v2873
    %v4014 = vpack.c.b16 %v2878, %v2876
    %v4015 = vpack.c.b16 %v2879, %v2877
    %v4016 = vpack.c.b16 %v2882, %v2880
    %v4017 = vpack.c.b16 %v2883, %v2881
    %v4018 = vpack.c.b16 %v2886, %v2884
    %v4019 = vpack.c.b16 %v2887, %v2885
    %v4020 = vpack.c.b16 %v2890, %v2888
    %v4021 = vpack.c.b16 %v2891, %v2889
    %v4022 = vpack.c.b16 %v2894, %v2892
    %v4023 = vpack.c.b16 %v2895, %v2893
    %v4024 = vpack.c.b16 %v2898, %v2896
    %v4025 = vpack.c.b16 %v2899, %v2897
    %v4026 = vpack.c.b16 %v2902, %v2900
    %v4027 = vpack.c.b16 %v2903, %v2901
    %v4028 = vpack.c.b16 %v2906, %v2904
    %v4029 = vpack.c.b16 %v2907, %v2905
    %v4030 = vpack.c.b16 %v2910, %v2908
    %v4031 = vpack.c.b16 %v2911, %v2909
    %v4032 = vpack.c.b16 %v2914, %v2912
    %v4033 = vpack.c.b16 %v2915, %v2913
    %v4034 = vpack.c.b16 %v2918, %v2916
    %v4035 = vpack.c.b16 %v2919, %v2917
    %v4036 = vpack.c.b16 %v2922, %v2920
    %v4037 = vpack.c.b16 %v2923, %v2921
    %v4038 = vpack.c.b16 %v2926, %v2924
    %v4039 = vpack.c.b16 %v2927, %v2925
    %v4040 = vpack.c.b16 %v2930, %v2928
    %v4041 = vpack.c.b16 %v2931, %v2929
    %v4042 = vpack.c.b16 %v2934, %v2932
    %v4043 = vpack.c.b16 %v2935, %v2933
    %v4044 = vpack.c.b16 %v2938, %v2936
    %v4045 = vpack.c.b16 %v2939, %v2937
    %v4046 = vpack.c.b16 %v2942, %v2940
    %v4047 = vpack.c.b16 %v2943, %v2941
    %v4048 = vpack.c.b16 %v2946, %v2944
    %v4049 = vpack.c.b16 %v2947, %v2945
    %v4050 = vpack.c.b16 %v2950, %v2948
    %v4051 = vpack.c.b16 %v2951, %v2949
    %v4052 = vpack.c.b16 %v2954, %v2952
    %v4053 = vpack.c.b16 %v2955, %v2953
    %v4054 = vpack.c.b16 %v2958, %v2956
    %v4055 = vpack.c.b16 %v2959, %v2957
    %v4056 = vpack.c.b16 %v2962, %v2960
    %v4057 = vpack.c.b16 %v2963, %v2961
    %v4058 = vpack.c.b16 %v2966, %v2964
    %v4059 = vpack.c.b16 %v2967, %v2965
    %v4060 = vpack.c.b16 %v2970, %v2968
    %v4061 = vpack.c.b16 %v2971, %v2969
    %v4062 = vpack.c.b16 %v2974, %v2972
    %v4063 = vpack.c.b16 %v2975, %v2973
    %v4064 = vpack.c.b16 %v2978, %v2976
    %v4065 = vpack.c.b16 %v2979, %v2977
    %v4066 = vpack.c.b16 %v2982, %v2980
    %v4067 = vpack.c.b16 %v2983, %v2981
    %v4068 = vpack.c.b16 %v2986, %v2984
    %v4069 = vpack.c.b16 %v2987, %v2985
    %v4070 = vpack.c.b16 %v2990, %v2988
    %v4071 = vpack.c.b16 %v2991, %v2989
    %v4072 = vpack.c.b16 %v2994, %v2992
    %v4073 = vpack.c.b16 %v2995, %v2993
    %v4074 = vpack.c.b16 %v2998, %v2996
    %v4075 = vpack.c.b16 %v2999, %v2997
    %v4076 = vpack.c.b16 %v3002, %v3000
    %v4077 = vpack.c.b16 %v3003, %v3001
    %v4078 = vpack.c.b16 %v3006, %v3004
    %v4079 = vpack.c.b16 %v3007, %v3005
    %v4080 = vpack.c.b16 %v3010, %v3008
    %v4081 = vpack.c.b16 %v3011, %v3009
    %v4082 = vpack.c.b16 %v3014, %v3012
    %v4083 = vpack.c.b16 %v3015, %v3013
    %v4084 = vpack.c.b16 %v3018, %v3016
    %v4085 = vpack.c.b16 %v3019, %v3017
    %v4086 = vpack.c.b16 %v3022, %v3020
    %v4087 = vpack.c.b16 %v3023, %v3021
    %v4088 = vpack.c.b16 %v3026, %v3024
    %v4089 = vpack.c.b16 %v3027, %v3025
    %v4090 = vpack.c.b16 %v3030, %v3028
    %v4091 = vpack.c.b16 %v3031, %v3029
    %v4092 = vpack.c.b16 %v3034, %v3032
    %v4093 = vpack.c.b16 %v3035, %v3033
    %v4094 = vpack.c.b16 %v3038, %v3036
    %v4095 = vpack.c.b16 %v3039, %v3037
    %v4096 = vpack.c.b16 %v3042, %v3040
    %v4097 = vpack.c.b16 %v3043, %v3041
    %v4098 = vpack.c.b16 %v3046, %v3044
    %v4099 = vpack.c.b16 %v3047, %v3045
    %v4100 = vpack.c.b16 %v3050, %v3048
    %v4101 = vpack.c.b16 %v3051, %v3049
    %v4102 = vpack.c.b16 %v3054, %v3052
    %v4103 = vpack.c.b16 %v3055, %v3053
    %v4104 = vpack.c.b16 %v3058, %v3056
    %v4105 = vpack.c.b16 %v3059, %v3057
    %v4106 = vpack.c.b16 %v3062, %v3060
    %v4107 = vpack.c.b16 %v3063, %v3061
    %v4108 = vpack.c.b16 %v3066, %v3064
    %v4109 = vpack.c.b16 %v3067, %v3065
    %v4110 = vpack.c.b16 %v3070, %v3068
    %v4111 = vpack.c.b16 %v3071, %v3069
    %v4112 = vpack.c.b16 %v3074, %v3072
    %v4113 = vpack.c.b16 %v3075, %v3073
    %v4114 = vpack.c.b16 %v3078, %v3076
    %v4115 = vpack.c.b16 %v3079, %v3077
    %v4116 = vpack.c.b16 %v3082, %v3080
    %v4117 = vpack.c.b16 %v3083, %v3081
    %v4118 = vpack.c.b16 %v3086, %v3084
    %v4119 = vpack.c.b16 %v3087, %v3085
    %v4120 = vpack.c.b16 %v3090, %v3088
    %v4121 = vpack.c.b16 %v3091, %v3089
    %v4122 = vpack.c.b16 %v3094, %v3092
    %v4123 = vpack.c.b16 %v3095, %v3093
    %v4124 = vpack.c.b16 %v3098, %v3096
    %v4125 = vpack.c.b16 %v3099, %v3097
    %v4126 = vpack.c.b16 %v3102, %v3100
    %v4127 = vpack.c.b16 %v3103, %v3101
    %v4128 = vpack.c.b16 %v3106, %v3104
    %v4129 = vpack.c.b16 %v3107, %v3105
    %v4130 = vpack.c.b16 %v3110, %v3108
    %v4131 = vpack.c.b16 %v3111, %v3109
    %v4132 = vpack.c.b16 %v3114, %v3112
    %v4133 = vpack.c.b16 %v3115, %v3113
    %v4134 = vpack.c.b16 %v3118, %v3116
    %v4135 = vpack.c.b16 %v3119, %v3117
    %v4136 = vpack.c.b16 %v3122, %v3120
    %v4137 = vpack.c.b16 %v3123, %v3121
    %v4138 = vpack.c.b16 %v3126, %v3124
    %v4139 = vpack.c.b16 %v3127, %v3125
    %v4140 = vpack.c.b16 %v3130, %v3128
    %v4141 = vpack.c.b16 %v3131, %v3129
    %v4142 = vpack.c.b16 %v3134, %v3132
    %v4143 = vpack.c.b16 %v3135, %v3133
    %v4144 = vpack.c.b16 %v3138, %v3136
    %v4145 = vpack.c.b16 %v3139, %v3137
    %v4146 = vpack.c.b16 %v3142, %v3140
    %v4147 = vpack.c.b16 %v3143, %v3141
    %v4148 = vpack.c.b16 %v3146, %v3144
    %v4149 = vpack.c.b16 %v3147, %v3145
    %v4150 = vpack.c.b16 %v3150, %v3148
    %v4151 = vpack.c.b16 %v3151, %v3149
    %v4152 = vpack.c.b16 %v3154, %v3152
    %v4153 = vpack.c.b16 %v3155, %v3153
    %v4154 = vpack.c.b16 %v3158, %v3156
    %v4155 = vpack.c.b16 %v3159, %v3157
    %v4156 = vpack.c.b16 %v3162, %v3160
    %v4157 = vpack.c.b16 %v3163, %v3161
    %v4158 = vpack.c.b16 %v3166, %v3164
    %v4159 = vpack.c.b16 %v3167, %v3165
    %v4160 = vpack.c.b16 %v3170, %v3168
    %v4161 = vpack.c.b16 %v3171, %v3169
    %v4162 = vpack.c.b16 %v3174, %v3172
    %v4163 = vpack.c.b16 %v3175, %v3173
    %v4164 = vpack.c.b16 %v3178, %v3176
    %v4165 = vpack.c.b16 %v3179, %v3177
    %v4166 = vpack.c.b16 %v3182, %v3180
    %v4167 = vpack.c.b16 %v3183, %v3181
    %v4168 = vpack.c.b16 %v3186, %v3184
    %v4169 = vpack.c.b16 %v3187, %v3185
    %v4170 = vpack.c.b16 %v3190, %v3188
    %v4171 = vpack.c.b16 %v3191, %v3189
    %v4172 = vpack.c.b16 %v3194, %v3192
    %v4173 = vpack.c.b16 %v3195, %v3193
    %v4174 = vpack.c.b16 %v3198, %v3196
    %v4175 = vpack.c.b16 %v3199, %v3197
    %v4176 = vpack.c.b16 %v3202, %v3200
    %v4177 = vpack.c.b16 %v3203, %v3201
    %v4178 = vpack.c.b16 %v3206, %v3204
    %v4179 = vpack.c.b16 %v3207, %v3205
    %v4180 = vpack.c.b16 %v3210, %v3208
    %v4181 = vpack.c.b16 %v3211, %v3209
    %v4182 = vpack.c.b16 %v3214, %v3212
    %v4183 = vpack.c.b16 %v3215, %v3213
    %v4184 = vpack.c.b16 %v3218, %v3216
    %v4185 = vpack.c.b16 %v3219, %v3217
    %v4186 = vpack.c.b16 %v3222, %v3220
    %v4187 = vpack.c.b16 %v3223, %v3221
    %v4188 = vpack.c.b16 %v3226, %v3224
    %v4189 = vpack.c.b16 %v3227, %v3225
    %v4190 = vpack.c.b16 %v3230, %v3228
    %v4191 = vpack.c.b16 %v3231, %v3229
    %v4192 = vpack.c.b16 %v3234, %v3232
    %v4193 = vpack.c.b16 %v3235, %v3233
    %v4194 = vpack.c.b16 %v3238, %v3236
    %v4195 = vpack.c.b16 %v3239, %v3237
    %v4196 = vpack.c.b16 %v3242, %v3240
    %v4197 = vpack.c.b16 %v3243, %v3241
    %v4198 = vpack.c.b16 %v3246, %v3244
    %v4199 = vpack.c.b16 %v3247, %v3245
    %v4200 = vpack.c.b16 %v3250, %v3248
    %v4201 = vpack.c.b16 %v3251, %v3249
    %v4202 = vpack.c.b16 %v3254, %v3252
    %v4203 = vpack.c.b16 %v3255, %v3253
    %v4204 = vpack.c.b16 %v3258, %v3256
    %v4205 = vpack.c.b16 %v3259, %v3257
    %v4206 = vpack.c.b16 %v3262, %v3260
    %v4207 = vpack.c.b16 %v3263, %v3261
    %v4208 = vpack.c.b16 %v3266, %v3264
    %v4209 = vpack.c.b16 %v3267, %v3265
    %v4210 = vpack.c.b16 %v3270, %v3268
    %v4211 = vpack.c.b16 %v3271, %v3269
    %v4212 = vpack.c.b16 %v3274, %v3272
    %v4213 = vpack.c.b16 %v3275, %v3273
    %v4214 = vpack.c.b16 %v3278, %v3276
    %v4215 = vpack.c.b16 %v3279, %v3277
    %v4216 = vpack.c.b16 %v3282, %v3280
    %v4217 = vpack.c.b16 %v3283, %v3281
    %v4218 = vpack.c.b16 %v3286, %v3284
    %v4219 = vpack.c.b16 %v3287, %v3285
    %v4220 = vpack.c.b16 %v3290, %v3288
    %v4221 = vpack.c.b16 %v3291, %v3289
    %v4222 = vpack.c.b16 %v3294, %v3292
    %v4223 = vpack.c.b16 %v3295, %v3293
    %v4224 = vpack.c.b16 %v3298, %v3296
    %v4225 = vpack.c.b16 %v3299, %v3297
    %v4226 = vpack.c.b16 %v3302, %v3300
    %v4227 = vpack.c.b16 %v3303, %v3301
    %v4228 = vpack.c.b16 %v3306, %v3304
    %v4229 = vpack.c.b16 %v3307, %v3305
    %v4230 = vpack.c.b16 %v3310, %v3308
    %v4231 = vpack.c.b16 %v3311, %v3309
    %v4232 = vpack.c.b16 %v3314, %v3312
    %v4233 = vpack.c.b16 %v3315, %v3313
    %v4234 = vpack.c.b16 %v3318, %v3316
    %v4235 = vpack.c.b16 %v3319, %v3317
    %v4236 = vpack.c.b16 %v3322, %v3320
    %v4237 = vpack.c.b16 %v3323, %v3321
    %v4238 = vpack.c.b16 %v3326, %v3324
    %v4239 = vpack.c.b16 %v3327, %v3325
    %v4240 = vpack.c.b16 %v3330, %v3328
    %v4241 = vpack.c.b16 %v3331, %v3329
    %v4242 = vpack.c.b16 %v3334, %v3332
    %v4243 = vpack.c.b16 %v3335, %v3333
    %v4244 = vpack.c.b16 %v3338, %v3336
    %v4245 = vpack.c.b16 %v3339, %v3337
    %v4246 = vpack.c.b16 %v3342, %v3340
    %v4247 = vpack.c.b16 %v3343, %v3341
    %v4248 = vpack.c.b16 %v3346, %v3344
    %v4249 = vpack.c.b16 %v3347, %v3345
    %v4250 = vpack.c.b16 %v3350, %v3348
    %v4251 = vpack.c.b16 %v3351, %v3349
    %v4252 = vpack.c.b16 %v3354, %v3352
    %v4253 = vpack.c.b16 %v3355, %v3353
    %v4254 = vpack.c.b16 %v3358, %v3356
    %v4255 = vpack.c.b16 %v3359, %v3357
    %v4256 = vpack.c.b16 %v3362, %v3360
    %v4257 = vpack.c.b16 %v3363, %v3361
    %v4258 = vpack.c.b16 %v3366, %v3364
    %v4259 = vpack.c.b16 %v3367, %v3365
    %v4260 = vpack.c.b16 %v3370, %v3368
    %v4261 = vpack.c.b16 %v3371, %v3369
    %v4262 = vpack.c.b16 %v3374, %v3372
    %v4263 = vpack.c.b16 %v3375, %v3373
    %v4264 = vpack.c.b16 %v3378, %v3376
    %v4265 = vpack.c.b16 %v3379, %v3377
    %v4266 = vpack.c.b16 %v3382, %v3380
    %v4267 = vpack.c.b16 %v3383, %v3381
    %v4268 = vpack.c.b16 %v3386, %v3384
    %v4269 = vpack.c.b16 %v3387, %v3385
    %v4270 = vpack.c.b16 %v3390, %v3388
    %v4271 = vpack.c.b16 %v3391, %v3389
    %v4272 = vpack.c.b16 %v3394, %v3392
    %v4273 = vpack.c.b16 %v3395, %v3393
    %v4274 = vpack.c.b16 %v3398, %v3396
    %v4275 = vpack.c.b16 %v3399, %v3397
    %v4276 = vpack.c.b16 %v3402, %v3400
    %v4277 = vpack.c.b16 %v3403, %v3401
    %v4278 = vpack.c.b16 %v3406, %v3404
    %v4279 = vpack.c.b16 %v3407, %v3405
    %v4280 = vpack.c.b16 %v3410, %v3408
    %v4281 = vpack.c.b16 %v3411, %v3409
    %v4282 = vpack.c.b16 %v3414, %v3412
    %v4283 = vpack.c.b16 %v3415, %v3413
    %v4284 = vpack.c.b16 %v3418, %v3416
    %v4285 = vpack.c.b16 %v3419, %v3417
    %v4286 = vpack.c.b16 %v3422, %v3420
    %v4287 = vpack.c.b16 %v3423, %v3421
    %v4288 = vpack.c.b16 %v3426, %v3424
    %v4289 = vpack.c.b16 %v3427, %v3425
    %v4290 = vpack.c.b16 %v3430, %v3428
    %v4291 = vpack.c.b16 %v3431, %v3429
    %v4292 = vpack.c.b16 %v3434, %v3432
    %v4293 = vpack.c.b16 %v3435, %v3433
    %v4294 = vpack.c.b16 %v3438, %v3436
    %v4295 = vpack.c.b16 %v3439, %v3437
    %v4296 = vpack.c.b16 %v3442, %v3440
    %v4297 = vpack.c.b16 %v3443, %v3441
    %v4298 = vpack.c.b16 %v3446, %v3444
    %v4299 = vpack.c.b16 %v3447, %v3445
    %v4300 = vpack.c.b16 %v3450, %v3448
    %v4301 = vpack.c.b16 %v3451, %v3449
    %v4302 = vpack.c.b16 %v3454, %v3452
    %v4303 = vpack.c.b16 %v3455, %v3453
    %v4304 = vpack.c.b16 %v3458, %v3456
    %v4305 = vpack.c.b16 %v3459, %v3457
    %v4306 = vpack.c.b16 %v3462, %v3460
    %v4307 = vpack.c.b16 %v3463, %v3461
    %v4308 = vpack.c.b16 %v3466, %v3464
    %v4309 = vpack.c.b16 %v3467, %v3465
    %v4310 = vpack.c.b16 %v3470, %v3468
    %v4311 = vpack.c.b16 %v3471, %v3469
    %v4312 = vpack.c.b16 %v3474, %v3472
    %v4313 = vpack.c.b16 %v3475, %v3473
    %v4314 = vpack.c.b16 %v3478, %v3476
    %v4315 = vpack.c.b16 %v3479, %v3477
    %v4316 = vpack.c.b16 %v3482, %v3480
    %v4317 = vpack.c.b16 %v3483, %v3481
    %v4318 = vpack.c.b16 %v3486, %v3484
    %v4319 = vpack.c.b16 %v3487, %v3485
    %v4320 = vpack.c.b16 %v3490, %v3488
    %v4321 = vpack.c.b16 %v3491, %v3489
    %v4322 = vpack.c.b16 %v3494, %v3492
    %v4323 = vpack.c.b16 %v3495, %v3493
    %v4324 = vpack.c.b16 %v3498, %v3496
    %v4325 = vpack.c.b16 %v3499, %v3497
    %v4326 = vpack.c.b16 %v3502, %v3500
    %v4327 = vpack.c.b16 %v3503, %v3501
    %v4328 = vpack.c.b16 %v3506, %v3504
    %v4329 = vpack.c.b16 %v3507, %v3505
    %v4330 = vpack.c.b16 %v3510, %v3508
    %v4331 = vpack.c.b16 %v3511, %v3509
    %v4332 = vpack.c.b16 %v3514, %v3512
    %v4333 = vpack.c.b16 %v3515, %v3513
    %v4334 = vpack.c.b16 %v3518, %v3516
    %v4335 = vpack.c.b16 %v3519, %v3517
    %v4336 = vpack.c.b16 %v3522, %v3520
    %v4337 = vpack.c.b16 %v3523, %v3521
    %v4338 = vpack.c.b16 %v3526, %v3524
    %v4339 = vpack.c.b16 %v3527, %v3525
    %v4340 = vpack.c.b16 %v3530, %v3528
    %v4341 = vpack.c.b16 %v3531, %v3529
    %v4342 = vpack.c.b16 %v3534, %v3532
    %v4343 = vpack.c.b16 %v3535, %v3533
    %v4344 = vpack.c.b16 %v3538, %v3536
    %v4345 = vpack.c.b16 %v3539, %v3537
    %v4346 = vpack.c.b16 %v3542, %v3540
    %v4347 = vpack.c.b16 %v3543, %v3541
    %v4348 = vpack.c.b16 %v3546, %v3544
    %v4349 = vpack.c.b16 %v3547, %v3545
    %v4350 = vpack.c.b16 %v3550, %v3548
    %v4351 = vpack.c.b16 %v3551, %v3549
    %5152 = vmatprep.subr.bf16.mxu0 %v3567
    %5153 = vmatpush1.bf16.msra.mxu0 %v3566
    %5154 = vmatprep.subr.bf16.mxu0 %v3565
    %5155 = vmatpush1.bf16.msra.mxu0 %v3564
    %5156 = vmatprep.subr.bf16.mxu0 %v3563
    %5157 = vmatpush1.bf16.msra.mxu0 %v3562
    %5158 = vmatprep.subr.bf16.mxu0 %v3561
    %5159 = vmatpush1.bf16.msra.mxu0 %v3560
    %5160 = vmatprep.subr.bf16.mxu0 %v3559
    %5161 = vmatpush1.bf16.msra.mxu0 %v3558
    %5162 = vmatprep.subr.bf16.mxu0 %v3557
    %5163 = vmatpush1.bf16.msra.mxu0 %v3556
    %5164 = vmatprep.subr.bf16.mxu0 %v3555
    %5165 = vmatpush1.bf16.msra.mxu0 %v3554
    %5166 = vmatprep.subr.bf16.mxu0 %v3553
    %5167 = vmatpush1.bf16.msra.mxu0 %v3552
    %5168 = vmatprep.subr.bf16.mxu0 %v3583
    %5169 = vmatpush2.bf16.msra.mxu0 %v3582
    %5170 = vmatprep.subr.bf16.mxu0 %v3581
    %5171 = vmatpush2.bf16.msra.mxu0 %v3580
    %5172 = vmatprep.subr.bf16.mxu0 %v3579
    %5173 = vmatpush2.bf16.msra.mxu0 %v3578
    %5174 = vmatprep.subr.bf16.mxu0 %v3577
    %5175 = vmatpush2.bf16.msra.mxu0 %v3576
    %5176 = vmatprep.subr.bf16.mxu0 %v3575
    %5177 = vmatpush2.bf16.msra.mxu0 %v3574
    %5178 = vmatprep.subr.bf16.mxu0 %v3573
    %5179 = vmatpush2.bf16.msra.mxu0 %v3572
    %5180 = vmatprep.subr.bf16.mxu0 %v3571
    %5181 = vmatpush2.bf16.msra.mxu0 %v3570
    %5182 = vmatprep.subr.bf16.mxu0 %v3569
    %5183 = vmatpush2.bf16.msra.mxu0 %v3568
    %5184 = vmatprep.mubr.bf16.mxu0 %v1053
    %5185 = vmatmul.mubr.bf16.gmra.mxu0 %v1052
    %v5186 = vpop.f32.mrf.mxu0
    %v5187 = vadd.f32 %v895, %v5186
    %v5188 = vpop.f32.mrf.mxu0
    %v5189 = vadd.f32 %v899, %v5188
    %v5190 = vpop.f32.mrf.mxu0
    %v5191 = vadd.f32 %v895, %v5190
    %v5192 = vpop.f32.mrf.mxu0
    %v5193 = vadd.f32 %v899, %v5192
    %5194 = vdwg.mxu0
    %5195 = vmatprep.subr.bf16.mxu0 %v3599
    %5196 = vmatpush1.bf16.msra.mxu0 %v3598
    %5197 = vmatprep.subr.bf16.mxu0 %v3597
    %5198 = vmatpush1.bf16.msra.mxu0 %v3596
    %5199 = vmatprep.subr.bf16.mxu0 %v3595
    %5200 = vmatpush1.bf16.msra.mxu0 %v3594
    %5201 = vmatprep.subr.bf16.mxu0 %v3593
    %5202 = vmatpush1.bf16.msra.mxu0 %v3592
    %5203 = vmatprep.subr.bf16.mxu0 %v3591
    %5204 = vmatpush1.bf16.msra.mxu0 %v3590
    %5205 = vmatprep.subr.bf16.mxu0 %v3589
    %5206 = vmatpush1.bf16.msra.mxu0 %v3588
    %5207 = vmatprep.subr.bf16.mxu0 %v3587
    %5208 = vmatpush1.bf16.msra.mxu0 %v3586
    %5209 = vmatprep.subr.bf16.mxu0 %v3585
    %5210 = vmatpush1.bf16.msra.mxu0 %v3584
    %5211 = vmatprep.subr.bf16.mxu0 %v3615
    %5212 = vmatpush2.bf16.msra.mxu0 %v3614
    %5213 = vmatprep.subr.bf16.mxu0 %v3613
    %5214 = vmatpush2.bf16.msra.mxu0 %v3612
    %5215 = vmatprep.subr.bf16.mxu0 %v3611
    %5216 = vmatpush2.bf16.msra.mxu0 %v3610
    %5217 = vmatprep.subr.bf16.mxu0 %v3609
    %5218 = vmatpush2.bf16.msra.mxu0 %v3608
    %5219 = vmatprep.subr.bf16.mxu0 %v3607
    %5220 = vmatpush2.bf16.msra.mxu0 %v3606
    %5221 = vmatprep.subr.bf16.mxu0 %v3605
    %5222 = vmatpush2.bf16.msra.mxu0 %v3604
    %5223 = vmatprep.subr.bf16.mxu0 %v3603
    %5224 = vmatpush2.bf16.msra.mxu0 %v3602
    %5225 = vmatprep.subr.bf16.mxu0 %v3601
    %5226 = vmatpush2.bf16.msra.mxu0 %v3600
    %5227 = vmatprep.mubr.bf16.mxu0 %v1055
    %5228 = vmatmul.mubr.bf16.gmra.mxu0 %v1054
    %v5229 = vpop.f32.mrf.mxu0
    %v5230 = vadd.f32 %v5187, %v5229
    %v5231 = vpop.f32.mrf.mxu0
    %v5232 = vadd.f32 %v5189, %v5231
    %v5233 = vpop.f32.mrf.mxu0
    %v5234 = vadd.f32 %v5191, %v5233
    %v5235 = vpop.f32.mrf.mxu0
    %v5236 = vadd.f32 %v5193, %v5235
    %5237 = vdwg.mxu0
    %5238 = vmatprep.subr.bf16.mxu0 %v3631
    %5239 = vmatpush1.bf16.msra.mxu0 %v3630
    %5240 = vmatprep.subr.bf16.mxu0 %v3629
    %5241 = vmatpush1.bf16.msra.mxu0 %v3628
    %5242 = vmatprep.subr.bf16.mxu0 %v3627
    %5243 = vmatpush1.bf16.msra.mxu0 %v3626
    %5244 = vmatprep.subr.bf16.mxu0 %v3625
    %5245 = vmatpush1.bf16.msra.mxu0 %v3624
    %5246 = vmatprep.subr.bf16.mxu0 %v3623
    %5247 = vmatpush1.bf16.msra.mxu0 %v3622
    %5248 = vmatprep.subr.bf16.mxu0 %v3621
    %5249 = vmatpush1.bf16.msra.mxu0 %v3620
    %5250 = vmatprep.subr.bf16.mxu0 %v3619
    %5251 = vmatpush1.bf16.msra.mxu0 %v3618
    %5252 = vmatprep.subr.bf16.mxu0 %v3617
    %5253 = vmatpush1.bf16.msra.mxu0 %v3616
    %5254 = vmatprep.subr.bf16.mxu0 %v3647
    %5255 = vmatpush2.bf16.msra.mxu0 %v3646
    %5256 = vmatprep.subr.bf16.mxu0 %v3645
    %5257 = vmatpush2.bf16.msra.mxu0 %v3644
    %5258 = vmatprep.subr.bf16.mxu0 %v3643
    %5259 = vmatpush2.bf16.msra.mxu0 %v3642
    %5260 = vmatprep.subr.bf16.mxu0 %v3641
    %5261 = vmatpush2.bf16.msra.mxu0 %v3640
    %5262 = vmatprep.subr.bf16.mxu0 %v3639
    %5263 = vmatpush2.bf16.msra.mxu0 %v3638
    %5264 = vmatprep.subr.bf16.mxu0 %v3637
    %5265 = vmatpush2.bf16.msra.mxu0 %v3636
    %5266 = vmatprep.subr.bf16.mxu0 %v3635
    %5267 = vmatpush2.bf16.msra.mxu0 %v3634
    %5268 = vmatprep.subr.bf16.mxu0 %v3633
    %5269 = vmatpush2.bf16.msra.mxu0 %v3632
    %5270 = vmatprep.mubr.bf16.mxu0 %v1057
    %5271 = vmatmul.mubr.bf16.gmra.mxu0 %v1056
    %v5272 = vpop.f32.mrf.mxu0
    %v5273 = vadd.f32 %v5230, %v5272
    %v5274 = vpop.f32.mrf.mxu0
    %v5275 = vadd.f32 %v5232, %v5274
    %v5276 = vpop.f32.mrf.mxu0
    %v5277 = vadd.f32 %v5234, %v5276
    %v5278 = vpop.f32.mrf.mxu0
    %v5279 = vadd.f32 %v5236, %v5278
    %5280 = vdwg.mxu0
    %5281 = vmatprep.subr.bf16.mxu0 %v3663
    %5282 = vmatpush1.bf16.msra.mxu0 %v3662
    %5283 = vmatprep.subr.bf16.mxu0 %v3661
    %5284 = vmatpush1.bf16.msra.mxu0 %v3660
    %5285 = vmatprep.subr.bf16.mxu0 %v3659
    %5286 = vmatpush1.bf16.msra.mxu0 %v3658
    %5287 = vmatprep.subr.bf16.mxu0 %v3657
    %5288 = vmatpush1.bf16.msra.mxu0 %v3656
    %5289 = vmatprep.subr.bf16.mxu0 %v3655
    %5290 = vmatpush1.bf16.msra.mxu0 %v3654
    %5291 = vmatprep.subr.bf16.mxu0 %v3653
    %5292 = vmatpush1.bf16.msra.mxu0 %v3652
    %5293 = vmatprep.subr.bf16.mxu0 %v3651
    %5294 = vmatpush1.bf16.msra.mxu0 %v3650
    %5295 = vmatprep.subr.bf16.mxu0 %v3649
    %5296 = vmatpush1.bf16.msra.mxu0 %v3648
    %5297 = vmatprep.subr.bf16.mxu0 %v3679
    %5298 = vmatpush2.bf16.msra.mxu0 %v3678
    %5299 = vmatprep.subr.bf16.mxu0 %v3677
    %5300 = vmatpush2.bf16.msra.mxu0 %v3676
    %5301 = vmatprep.subr.bf16.mxu0 %v3675
    %5302 = vmatpush2.bf16.msra.mxu0 %v3674
    %5303 = vmatprep.subr.bf16.mxu0 %v3673
    %5304 = vmatpush2.bf16.msra.mxu0 %v3672
    %5305 = vmatprep.subr.bf16.mxu0 %v3671
    %5306 = vmatpush2.bf16.msra.mxu0 %v3670
    %5307 = vmatprep.subr.bf16.mxu0 %v3669
    %5308 = vmatpush2.bf16.msra.mxu0 %v3668
    %5309 = vmatprep.subr.bf16.mxu0 %v3667
    %5310 = vmatpush2.bf16.msra.mxu0 %v3666
    %5311 = vmatprep.subr.bf16.mxu0 %v3665
    %5312 = vmatpush2.bf16.msra.mxu0 %v3664
    %5313 = vmatprep.mubr.bf16.mxu0 %v1059
    %5314 = vmatmul.mubr.bf16.gmra.mxu0 %v1058
    %v5315 = vpop.f32.mrf.mxu0
    %v5316 = vadd.f32 %v5273, %v5315
    %v5317 = vpop.f32.mrf.mxu0
    %v5318 = vadd.f32 %v5275, %v5317
    %v5319 = vpop.f32.mrf.mxu0
    %v5320 = vadd.f32 %v5277, %v5319
    %v5321 = vpop.f32.mrf.mxu0
    %v5322 = vadd.f32 %v5279, %v5321
    %5323 = vdwg.mxu0
    %5324 = vmatprep.subr.bf16.mxu0 %v3695
    %5325 = vmatpush1.bf16.msra.mxu0 %v3694
    %5326 = vmatprep.subr.bf16.mxu0 %v3693
    %5327 = vmatpush1.bf16.msra.mxu0 %v3692
    %5328 = vmatprep.subr.bf16.mxu0 %v3691
    %5329 = vmatpush1.bf16.msra.mxu0 %v3690
    %5330 = vmatprep.subr.bf16.mxu0 %v3689
    %5331 = vmatpush1.bf16.msra.mxu0 %v3688
    %5332 = vmatprep.subr.bf16.mxu0 %v3687
    %5333 = vmatpush1.bf16.msra.mxu0 %v3686
    %5334 = vmatprep.subr.bf16.mxu0 %v3685
    %5335 = vmatpush1.bf16.msra.mxu0 %v3684
    %5336 = vmatprep.subr.bf16.mxu0 %v3683
    %5337 = vmatpush1.bf16.msra.mxu0 %v3682
    %5338 = vmatprep.subr.bf16.mxu0 %v3681
    %5339 = vmatpush1.bf16.msra.mxu0 %v3680
    %5340 = vmatprep.subr.bf16.mxu0 %v3711
    %5341 = vmatpush2.bf16.msra.mxu0 %v3710
    %5342 = vmatprep.subr.bf16.mxu0 %v3709
    %5343 = vmatpush2.bf16.msra.mxu0 %v3708
    %5344 = vmatprep.subr.bf16.mxu0 %v3707
    %5345 = vmatpush2.bf16.msra.mxu0 %v3706
    %5346 = vmatprep.subr.bf16.mxu0 %v3705
    %5347 = vmatpush2.bf16.msra.mxu0 %v3704
    %5348 = vmatprep.subr.bf16.mxu0 %v3703
    %5349 = vmatpush2.bf16.msra.mxu0 %v3702
    %5350 = vmatprep.subr.bf16.mxu0 %v3701
    %5351 = vmatpush2.bf16.msra.mxu0 %v3700
    %5352 = vmatprep.subr.bf16.mxu0 %v3699
    %5353 = vmatpush2.bf16.msra.mxu0 %v3698
    %5354 = vmatprep.subr.bf16.mxu0 %v3697
    %5355 = vmatpush2.bf16.msra.mxu0 %v3696
    %5356 = vmatprep.mubr.bf16.mxu0 %v1061
    %5357 = vmatmul.mubr.bf16.gmra.mxu0 %v1060
    %v5358 = vpop.f32.mrf.mxu0
    %v5359 = vadd.f32 %v5316, %v5358
    %v5360 = vpop.f32.mrf.mxu0
    %v5361 = vadd.f32 %v5318, %v5360
    %v5362 = vpop.f32.mrf.mxu0
    %v5363 = vadd.f32 %v5320, %v5362
    %v5364 = vpop.f32.mrf.mxu0
    %v5365 = vadd.f32 %v5322, %v5364
    %5366 = vdwg.mxu0
    %5367 = vmatprep.subr.bf16.mxu0 %v3727
    %5368 = vmatpush1.bf16.msra.mxu0 %v3726
    %5369 = vmatprep.subr.bf16.mxu0 %v3725
    %5370 = vmatpush1.bf16.msra.mxu0 %v3724
    %5371 = vmatprep.subr.bf16.mxu0 %v3723
    %5372 = vmatpush1.bf16.msra.mxu0 %v3722
    %5373 = vmatprep.subr.bf16.mxu0 %v3721
    %5374 = vmatpush1.bf16.msra.mxu0 %v3720
    %5375 = vmatprep.subr.bf16.mxu0 %v3719
    %5376 = vmatpush1.bf16.msra.mxu0 %v3718
    %5377 = vmatprep.subr.bf16.mxu0 %v3717
    %5378 = vmatpush1.bf16.msra.mxu0 %v3716
    %5379 = vmatprep.subr.bf16.mxu0 %v3715
    %5380 = vmatpush1.bf16.msra.mxu0 %v3714
    %5381 = vmatprep.subr.bf16.mxu0 %v3713
    %5382 = vmatpush1.bf16.msra.mxu0 %v3712
    %5383 = vmatprep.subr.bf16.mxu0 %v3743
    %5384 = vmatpush2.bf16.msra.mxu0 %v3742
    %5385 = vmatprep.subr.bf16.mxu0 %v3741
    %5386 = vmatpush2.bf16.msra.mxu0 %v3740
    %5387 = vmatprep.subr.bf16.mxu0 %v3739
    %5388 = vmatpush2.bf16.msra.mxu0 %v3738
    %5389 = vmatprep.subr.bf16.mxu0 %v3737
    %5390 = vmatpush2.bf16.msra.mxu0 %v3736
    %5391 = vmatprep.subr.bf16.mxu0 %v3735
    %5392 = vmatpush2.bf16.msra.mxu0 %v3734
    %5393 = vmatprep.subr.bf16.mxu0 %v3733
    %5394 = vmatpush2.bf16.msra.mxu0 %v3732
    %5395 = vmatprep.subr.bf16.mxu0 %v3731
    %5396 = vmatpush2.bf16.msra.mxu0 %v3730
    %5397 = vmatprep.subr.bf16.mxu0 %v3729
    %5398 = vmatpush2.bf16.msra.mxu0 %v3728
    %5399 = vmatprep.mubr.bf16.mxu0 %v1063
    %5400 = vmatmul.mubr.bf16.gmra.mxu0 %v1062
    %v5401 = vpop.f32.mrf.mxu0
    %v5402 = vadd.f32 %v5359, %v5401
    %v5403 = vpop.f32.mrf.mxu0
    %v5404 = vadd.f32 %v5361, %v5403
    %v5405 = vpop.f32.mrf.mxu0
    %v5406 = vadd.f32 %v5363, %v5405
    %v5407 = vpop.f32.mrf.mxu0
    %v5408 = vadd.f32 %v5365, %v5407
    %5409 = vdwg.mxu0
    %5410 = vmatprep.subr.bf16.mxu0 %v3759
    %5411 = vmatpush1.bf16.msra.mxu0 %v3758
    %5412 = vmatprep.subr.bf16.mxu0 %v3757
    %5413 = vmatpush1.bf16.msra.mxu0 %v3756
    %5414 = vmatprep.subr.bf16.mxu0 %v3755
    %5415 = vmatpush1.bf16.msra.mxu0 %v3754
    %5416 = vmatprep.subr.bf16.mxu0 %v3753
    %5417 = vmatpush1.bf16.msra.mxu0 %v3752
    %5418 = vmatprep.subr.bf16.mxu0 %v3751
    %5419 = vmatpush1.bf16.msra.mxu0 %v3750
    %5420 = vmatprep.subr.bf16.mxu0 %v3749
    %5421 = vmatpush1.bf16.msra.mxu0 %v3748
    %5422 = vmatprep.subr.bf16.mxu0 %v3747
    %5423 = vmatpush1.bf16.msra.mxu0 %v3746
    %5424 = vmatprep.subr.bf16.mxu0 %v3745
    %5425 = vmatpush1.bf16.msra.mxu0 %v3744
    %5426 = vmatprep.subr.bf16.mxu0 %v3775
    %5427 = vmatpush2.bf16.msra.mxu0 %v3774
    %5428 = vmatprep.subr.bf16.mxu0 %v3773
    %5429 = vmatpush2.bf16.msra.mxu0 %v3772
    %5430 = vmatprep.subr.bf16.mxu0 %v3771
    %5431 = vmatpush2.bf16.msra.mxu0 %v3770
    %5432 = vmatprep.subr.bf16.mxu0 %v3769
    %5433 = vmatpush2.bf16.msra.mxu0 %v3768
    %5434 = vmatprep.subr.bf16.mxu0 %v3767
    %5435 = vmatpush2.bf16.msra.mxu0 %v3766
    %5436 = vmatprep.subr.bf16.mxu0 %v3765
    %5437 = vmatpush2.bf16.msra.mxu0 %v3764
    %5438 = vmatprep.subr.bf16.mxu0 %v3763
    %5439 = vmatpush2.bf16.msra.mxu0 %v3762
    %5440 = vmatprep.subr.bf16.mxu0 %v3761
    %5441 = vmatpush2.bf16.msra.mxu0 %v3760
    %5442 = vmatprep.mubr.bf16.mxu0 %v1065
    %5443 = vmatmul.mubr.bf16.gmra.mxu0 %v1064
    %v5444 = vpop.f32.mrf.mxu0
    %v5445 = vadd.f32 %v5402, %v5444
    %v5446 = vpop.f32.mrf.mxu0
    %v5447 = vadd.f32 %v5404, %v5446
    %v5448 = vpop.f32.mrf.mxu0
    %v5449 = vadd.f32 %v5406, %v5448
    %v5450 = vpop.f32.mrf.mxu0
    %v5451 = vadd.f32 %v5408, %v5450
    %5452 = vdwg.mxu0
    %5453 = vmatprep.subr.bf16.mxu0 %v3791
    %5454 = vmatpush1.bf16.msra.mxu0 %v3790
    %5455 = vmatprep.subr.bf16.mxu0 %v3789
    %5456 = vmatpush1.bf16.msra.mxu0 %v3788
    %5457 = vmatprep.subr.bf16.mxu0 %v3787
    %5458 = vmatpush1.bf16.msra.mxu0 %v3786
    %5459 = vmatprep.subr.bf16.mxu0 %v3785
    %5460 = vmatpush1.bf16.msra.mxu0 %v3784
    %5461 = vmatprep.subr.bf16.mxu0 %v3783
    %5462 = vmatpush1.bf16.msra.mxu0 %v3782
    %5463 = vmatprep.subr.bf16.mxu0 %v3781
    %5464 = vmatpush1.bf16.msra.mxu0 %v3780
    %5465 = vmatprep.subr.bf16.mxu0 %v3779
    %5466 = vmatpush1.bf16.msra.mxu0 %v3778
    %5467 = vmatprep.subr.bf16.mxu0 %v3777
    %5468 = vmatpush1.bf16.msra.mxu0 %v3776
    %5469 = vmatprep.subr.bf16.mxu0 %v3807
    %5470 = vmatpush2.bf16.msra.mxu0 %v3806
    %5471 = vmatprep.subr.bf16.mxu0 %v3805
    %5472 = vmatpush2.bf16.msra.mxu0 %v3804
    %5473 = vmatprep.subr.bf16.mxu0 %v3803
    %5474 = vmatpush2.bf16.msra.mxu0 %v3802
    %5475 = vmatprep.subr.bf16.mxu0 %v3801
    %5476 = vmatpush2.bf16.msra.mxu0 %v3800
    %5477 = vmatprep.subr.bf16.mxu0 %v3799
    %5478 = vmatpush2.bf16.msra.mxu0 %v3798
    %5479 = vmatprep.subr.bf16.mxu0 %v3797
    %5480 = vmatpush2.bf16.msra.mxu0 %v3796
    %5481 = vmatprep.subr.bf16.mxu0 %v3795
    %5482 = vmatpush2.bf16.msra.mxu0 %v3794
    %5483 = vmatprep.subr.bf16.mxu0 %v3793
    %5484 = vmatpush2.bf16.msra.mxu0 %v3792
    %5485 = vmatprep.mubr.bf16.mxu0 %v1067
    %5486 = vmatmul.mubr.bf16.gmra.mxu0 %v1066
    %v5487 = vpop.f32.mrf.mxu0
    %v5488 = vadd.f32 %v5445, %v5487
    %v5489 = vpop.f32.mrf.mxu0
    %v5490 = vadd.f32 %v5447, %v5489
    %v5491 = vpop.f32.mrf.mxu0
    %v5492 = vadd.f32 %v5449, %v5491
    %v5493 = vpop.f32.mrf.mxu0
    %v5494 = vadd.f32 %v5451, %v5493
    %5495 = vdwg.mxu0
    %5496 = vmatprep.subr.bf16.mxu0 %v3823
    %5497 = vmatpush1.bf16.msra.mxu0 %v3822
    %5498 = vmatprep.subr.bf16.mxu0 %v3821
    %5499 = vmatpush1.bf16.msra.mxu0 %v3820
    %5500 = vmatprep.subr.bf16.mxu0 %v3819
    %5501 = vmatpush1.bf16.msra.mxu0 %v3818
    %5502 = vmatprep.subr.bf16.mxu0 %v3817
    %5503 = vmatpush1.bf16.msra.mxu0 %v3816
    %5504 = vmatprep.subr.bf16.mxu0 %v3815
    %5505 = vmatpush1.bf16.msra.mxu0 %v3814
    %5506 = vmatprep.subr.bf16.mxu0 %v3813
    %5507 = vmatpush1.bf16.msra.mxu0 %v3812
    %5508 = vmatprep.subr.bf16.mxu0 %v3811
    %5509 = vmatpush1.bf16.msra.mxu0 %v3810
    %5510 = vmatprep.subr.bf16.mxu0 %v3809
    %5511 = vmatpush1.bf16.msra.mxu0 %v3808
    %5512 = vmatprep.subr.bf16.mxu0 %v3839
    %5513 = vmatpush2.bf16.msra.mxu0 %v3838
    %5514 = vmatprep.subr.bf16.mxu0 %v3837
    %5515 = vmatpush2.bf16.msra.mxu0 %v3836
    %5516 = vmatprep.subr.bf16.mxu0 %v3835
    %5517 = vmatpush2.bf16.msra.mxu0 %v3834
    %5518 = vmatprep.subr.bf16.mxu0 %v3833
    %5519 = vmatpush2.bf16.msra.mxu0 %v3832
    %5520 = vmatprep.subr.bf16.mxu0 %v3831
    %5521 = vmatpush2.bf16.msra.mxu0 %v3830
    %5522 = vmatprep.subr.bf16.mxu0 %v3829
    %5523 = vmatpush2.bf16.msra.mxu0 %v3828
    %5524 = vmatprep.subr.bf16.mxu0 %v3827
    %5525 = vmatpush2.bf16.msra.mxu0 %v3826
    %5526 = vmatprep.subr.bf16.mxu0 %v3825
    %5527 = vmatpush2.bf16.msra.mxu0 %v3824
    %5528 = vmatprep.mubr.bf16.mxu0 %v1069
    %5529 = vmatmul.mubr.bf16.gmra.mxu0 %v1068
    %v5530 = vpop.f32.mrf.mxu0
    %v5531 = vadd.f32 %v5488, %v5530
    %v5532 = vpop.f32.mrf.mxu0
    %v5533 = vadd.f32 %v5490, %v5532
    %v5534 = vpop.f32.mrf.mxu0
    %v5535 = vadd.f32 %v5492, %v5534
    %v5536 = vpop.f32.mrf.mxu0
    %v5537 = vadd.f32 %v5494, %v5536
    %5538 = vdwg.mxu0
    %5539 = vmatprep.subr.bf16.mxu0 %v3855
    %5540 = vmatpush1.bf16.msra.mxu0 %v3854
    %5541 = vmatprep.subr.bf16.mxu0 %v3853
    %5542 = vmatpush1.bf16.msra.mxu0 %v3852
    %5543 = vmatprep.subr.bf16.mxu0 %v3851
    %5544 = vmatpush1.bf16.msra.mxu0 %v3850
    %5545 = vmatprep.subr.bf16.mxu0 %v3849
    %5546 = vmatpush1.bf16.msra.mxu0 %v3848
    %5547 = vmatprep.subr.bf16.mxu0 %v3847
    %5548 = vmatpush1.bf16.msra.mxu0 %v3846
    %5549 = vmatprep.subr.bf16.mxu0 %v3845
    %5550 = vmatpush1.bf16.msra.mxu0 %v3844
    %5551 = vmatprep.subr.bf16.mxu0 %v3843
    %5552 = vmatpush1.bf16.msra.mxu0 %v3842
    %5553 = vmatprep.subr.bf16.mxu0 %v3841
    %5554 = vmatpush1.bf16.msra.mxu0 %v3840
    %5555 = vmatprep.subr.bf16.mxu0 %v3871
    %5556 = vmatpush2.bf16.msra.mxu0 %v3870
    %5557 = vmatprep.subr.bf16.mxu0 %v3869
    %5558 = vmatpush2.bf16.msra.mxu0 %v3868
    %5559 = vmatprep.subr.bf16.mxu0 %v3867
    %5560 = vmatpush2.bf16.msra.mxu0 %v3866
    %5561 = vmatprep.subr.bf16.mxu0 %v3865
    %5562 = vmatpush2.bf16.msra.mxu0 %v3864
    %5563 = vmatprep.subr.bf16.mxu0 %v3863
    %5564 = vmatpush2.bf16.msra.mxu0 %v3862
    %5565 = vmatprep.subr.bf16.mxu0 %v3861
    %5566 = vmatpush2.bf16.msra.mxu0 %v3860
    %5567 = vmatprep.subr.bf16.mxu0 %v3859
    %5568 = vmatpush2.bf16.msra.mxu0 %v3858
    %5569 = vmatprep.subr.bf16.mxu0 %v3857
    %5570 = vmatpush2.bf16.msra.mxu0 %v3856
    %5571 = vmatprep.mubr.bf16.mxu0 %v1071
    %5572 = vmatmul.mubr.bf16.gmra.mxu0 %v1070
    %v5573 = vpop.f32.mrf.mxu0
    %v5574 = vadd.f32 %v5531, %v5573
    %v5575 = vpop.f32.mrf.mxu0
    %v5576 = vadd.f32 %v5533, %v5575
    %v5577 = vpop.f32.mrf.mxu0
    %v5578 = vadd.f32 %v5535, %v5577
    %v5579 = vpop.f32.mrf.mxu0
    %v5580 = vadd.f32 %v5537, %v5579
    %5581 = vdwg.mxu0
    %5582 = vmatprep.subr.bf16.mxu0 %v3887
    %5583 = vmatpush1.bf16.msra.mxu0 %v3886
    %5584 = vmatprep.subr.bf16.mxu0 %v3885
    %5585 = vmatpush1.bf16.msra.mxu0 %v3884
    %5586 = vmatprep.subr.bf16.mxu0 %v3883
    %5587 = vmatpush1.bf16.msra.mxu0 %v3882
    %5588 = vmatprep.subr.bf16.mxu0 %v3881
    %5589 = vmatpush1.bf16.msra.mxu0 %v3880
    %5590 = vmatprep.subr.bf16.mxu0 %v3879
    %5591 = vmatpush1.bf16.msra.mxu0 %v3878
    %5592 = vmatprep.subr.bf16.mxu0 %v3877
    %5593 = vmatpush1.bf16.msra.mxu0 %v3876
    %5594 = vmatprep.subr.bf16.mxu0 %v3875
    %5595 = vmatpush1.bf16.msra.mxu0 %v3874
    %5596 = vmatprep.subr.bf16.mxu0 %v3873
    %5597 = vmatpush1.bf16.msra.mxu0 %v3872
    %5598 = vmatprep.subr.bf16.mxu0 %v3903
    %5599 = vmatpush2.bf16.msra.mxu0 %v3902
    %5600 = vmatprep.subr.bf16.mxu0 %v3901
    %5601 = vmatpush2.bf16.msra.mxu0 %v3900
    %5602 = vmatprep.subr.bf16.mxu0 %v3899
    %5603 = vmatpush2.bf16.msra.mxu0 %v3898
    %5604 = vmatprep.subr.bf16.mxu0 %v3897
    %5605 = vmatpush2.bf16.msra.mxu0 %v3896
    %5606 = vmatprep.subr.bf16.mxu0 %v3895
    %5607 = vmatpush2.bf16.msra.mxu0 %v3894
    %5608 = vmatprep.subr.bf16.mxu0 %v3893
    %5609 = vmatpush2.bf16.msra.mxu0 %v3892
    %5610 = vmatprep.subr.bf16.mxu0 %v3891
    %5611 = vmatpush2.bf16.msra.mxu0 %v3890
    %5612 = vmatprep.subr.bf16.mxu0 %v3889
    %5613 = vmatpush2.bf16.msra.mxu0 %v3888
    %5614 = vmatprep.mubr.bf16.mxu0 %v1073
    %5615 = vmatmul.mubr.bf16.gmra.mxu0 %v1072
    %v5616 = vpop.f32.mrf.mxu0
    %v5617 = vadd.f32 %v5574, %v5616
    %v5618 = vpop.f32.mrf.mxu0
    %v5619 = vadd.f32 %v5576, %v5618
    %v5620 = vpop.f32.mrf.mxu0
    %v5621 = vadd.f32 %v5578, %v5620
    %v5622 = vpop.f32.mrf.mxu0
    %v5623 = vadd.f32 %v5580, %v5622
    %5624 = vdwg.mxu0
    %5625 = vmatprep.subr.bf16.mxu0 %v3919
    %5626 = vmatpush1.bf16.msra.mxu0 %v3918
    %5627 = vmatprep.subr.bf16.mxu0 %v3917
    %5628 = vmatpush1.bf16.msra.mxu0 %v3916
    %5629 = vmatprep.subr.bf16.mxu0 %v3915
    %5630 = vmatpush1.bf16.msra.mxu0 %v3914
    %5631 = vmatprep.subr.bf16.mxu0 %v3913
    %5632 = vmatpush1.bf16.msra.mxu0 %v3912
    %5633 = vmatprep.subr.bf16.mxu0 %v3911
    %5634 = vmatpush1.bf16.msra.mxu0 %v3910
    %5635 = vmatprep.subr.bf16.mxu0 %v3909
    %5636 = vmatpush1.bf16.msra.mxu0 %v3908
    %5637 = vmatprep.subr.bf16.mxu0 %v3907
    %5638 = vmatpush1.bf16.msra.mxu0 %v3906
    %5639 = vmatprep.subr.bf16.mxu0 %v3905
    %5640 = vmatpush1.bf16.msra.mxu0 %v3904
    %5641 = vmatprep.subr.bf16.mxu0 %v3935
    %5642 = vmatpush2.bf16.msra.mxu0 %v3934
    %5643 = vmatprep.subr.bf16.mxu0 %v3933
    %5644 = vmatpush2.bf16.msra.mxu0 %v3932
    %5645 = vmatprep.subr.bf16.mxu0 %v3931
    %5646 = vmatpush2.bf16.msra.mxu0 %v3930
    %5647 = vmatprep.subr.bf16.mxu0 %v3929
    %5648 = vmatpush2.bf16.msra.mxu0 %v3928
    %5649 = vmatprep.subr.bf16.mxu0 %v3927
    %5650 = vmatpush2.bf16.msra.mxu0 %v3926
    %5651 = vmatprep.subr.bf16.mxu0 %v3925
    %5652 = vmatpush2.bf16.msra.mxu0 %v3924
    %5653 = vmatprep.subr.bf16.mxu0 %v3923
    %5654 = vmatpush2.bf16.msra.mxu0 %v3922
    %5655 = vmatprep.subr.bf16.mxu0 %v3921
    %5656 = vmatpush2.bf16.msra.mxu0 %v3920
    %5657 = vmatprep.mubr.bf16.mxu0 %v1075
    %5658 = vmatmul.mubr.bf16.gmra.mxu0 %v1074
    %v5659 = vpop.f32.mrf.mxu0
    %v5660 = vadd.f32 %v5617, %v5659
    %v5661 = vpop.f32.mrf.mxu0
    %v5662 = vadd.f32 %v5619, %v5661
    %v5663 = vpop.f32.mrf.mxu0
    %v5664 = vadd.f32 %v5621, %v5663
    %v5665 = vpop.f32.mrf.mxu0
    %v5666 = vadd.f32 %v5623, %v5665
    %5667 = vdwg.mxu0
    %5668 = vmatprep.subr.bf16.mxu0 %v3951
    %5669 = vmatpush1.bf16.msra.mxu0 %v3950
    %5670 = vmatprep.subr.bf16.mxu0 %v3949
    %5671 = vmatpush1.bf16.msra.mxu0 %v3948
    %5672 = vmatprep.subr.bf16.mxu0 %v3947
    %5673 = vmatpush1.bf16.msra.mxu0 %v3946
    %5674 = vmatprep.subr.bf16.mxu0 %v3945
    %5675 = vmatpush1.bf16.msra.mxu0 %v3944
    %5676 = vmatprep.subr.bf16.mxu0 %v3943
    %5677 = vmatpush1.bf16.msra.mxu0 %v3942
    %5678 = vmatprep.subr.bf16.mxu0 %v3941
    %5679 = vmatpush1.bf16.msra.mxu0 %v3940
    %5680 = vmatprep.subr.bf16.mxu0 %v3939
    %5681 = vmatpush1.bf16.msra.mxu0 %v3938
    %5682 = vmatprep.subr.bf16.mxu0 %v3937
    %5683 = vmatpush1.bf16.msra.mxu0 %v3936
    %5684 = vmatprep.subr.bf16.mxu0 %v3967
    %5685 = vmatpush2.bf16.msra.mxu0 %v3966
    %5686 = vmatprep.subr.bf16.mxu0 %v3965
    %5687 = vmatpush2.bf16.msra.mxu0 %v3964
    %5688 = vmatprep.subr.bf16.mxu0 %v3963
    %5689 = vmatpush2.bf16.msra.mxu0 %v3962
    %5690 = vmatprep.subr.bf16.mxu0 %v3961
    %5691 = vmatpush2.bf16.msra.mxu0 %v3960
    %5692 = vmatprep.subr.bf16.mxu0 %v3959
    %5693 = vmatpush2.bf16.msra.mxu0 %v3958
    %5694 = vmatprep.subr.bf16.mxu0 %v3957
    %5695 = vmatpush2.bf16.msra.mxu0 %v3956
    %5696 = vmatprep.subr.bf16.mxu0 %v3955
    %5697 = vmatpush2.bf16.msra.mxu0 %v3954
    %5698 = vmatprep.subr.bf16.mxu0 %v3953
    %5699 = vmatpush2.bf16.msra.mxu0 %v3952
    %5700 = vmatprep.mubr.bf16.mxu0 %v1077
    %5701 = vmatmul.mubr.bf16.gmra.mxu0 %v1076
    %v5702 = vpop.f32.mrf.mxu0
    %v5703 = vadd.f32 %v5660, %v5702
    %v5704 = vpop.f32.mrf.mxu0
    %v5705 = vadd.f32 %v5662, %v5704
    %v5706 = vpop.f32.mrf.mxu0
    %v5707 = vadd.f32 %v5664, %v5706
    %v5708 = vpop.f32.mrf.mxu0
    %v5709 = vadd.f32 %v5666, %v5708
    %5710 = vdwg.mxu0
    %5711 = vmatprep.subr.bf16.mxu0 %v3983
    %5712 = vmatpush1.bf16.msra.mxu0 %v3982
    %5713 = vmatprep.subr.bf16.mxu0 %v3981
    %5714 = vmatpush1.bf16.msra.mxu0 %v3980
    %5715 = vmatprep.subr.bf16.mxu0 %v3979
    %5716 = vmatpush1.bf16.msra.mxu0 %v3978
    %5717 = vmatprep.subr.bf16.mxu0 %v3977
    %5718 = vmatpush1.bf16.msra.mxu0 %v3976
    %5719 = vmatprep.subr.bf16.mxu0 %v3975
    %5720 = vmatpush1.bf16.msra.mxu0 %v3974
    %5721 = vmatprep.subr.bf16.mxu0 %v3973
    %5722 = vmatpush1.bf16.msra.mxu0 %v3972
    %5723 = vmatprep.subr.bf16.mxu0 %v3971
    %5724 = vmatpush1.bf16.msra.mxu0 %v3970
    %5725 = vmatprep.subr.bf16.mxu0 %v3969
    %5726 = vmatpush1.bf16.msra.mxu0 %v3968
    %5727 = vmatprep.subr.bf16.mxu0 %v3999
    %5728 = vmatpush2.bf16.msra.mxu0 %v3998
    %5729 = vmatprep.subr.bf16.mxu0 %v3997
    %5730 = vmatpush2.bf16.msra.mxu0 %v3996
    %5731 = vmatprep.subr.bf16.mxu0 %v3995
    %5732 = vmatpush2.bf16.msra.mxu0 %v3994
    %5733 = vmatprep.subr.bf16.mxu0 %v3993
    %5734 = vmatpush2.bf16.msra.mxu0 %v3992
    %5735 = vmatprep.subr.bf16.mxu0 %v3991
    %5736 = vmatpush2.bf16.msra.mxu0 %v3990
    %5737 = vmatprep.subr.bf16.mxu0 %v3989
    %5738 = vmatpush2.bf16.msra.mxu0 %v3988
    %5739 = vmatprep.subr.bf16.mxu0 %v3987
    %5740 = vmatpush2.bf16.msra.mxu0 %v3986
    %5741 = vmatprep.subr.bf16.mxu0 %v3985
    %5742 = vmatpush2.bf16.msra.mxu0 %v3984
    %5743 = vmatprep.mubr.bf16.mxu0 %v1079
    %5744 = vmatmul.mubr.bf16.gmra.mxu0 %v1078
    %v5745 = vpop.f32.mrf.mxu0
    %v5746 = vadd.f32 %v5703, %v5745
    %v5747 = vpop.f32.mrf.mxu0
    %v5748 = vadd.f32 %v5705, %v5747
    %v5749 = vpop.f32.mrf.mxu0
    %v5750 = vadd.f32 %v5707, %v5749
    %v5751 = vpop.f32.mrf.mxu0
    %v5752 = vadd.f32 %v5709, %v5751
    %5753 = vdwg.mxu0
    %5754 = vmatprep.subr.bf16.mxu0 %v4015
    %5755 = vmatpush1.bf16.msra.mxu0 %v4014
    %5756 = vmatprep.subr.bf16.mxu0 %v4013
    %5757 = vmatpush1.bf16.msra.mxu0 %v4012
    %5758 = vmatprep.subr.bf16.mxu0 %v4011
    %5759 = vmatpush1.bf16.msra.mxu0 %v4010
    %5760 = vmatprep.subr.bf16.mxu0 %v4009
    %5761 = vmatpush1.bf16.msra.mxu0 %v4008
    %5762 = vmatprep.subr.bf16.mxu0 %v4007
    %5763 = vmatpush1.bf16.msra.mxu0 %v4006
    %5764 = vmatprep.subr.bf16.mxu0 %v4005
    %5765 = vmatpush1.bf16.msra.mxu0 %v4004
    %5766 = vmatprep.subr.bf16.mxu0 %v4003
    %5767 = vmatpush1.bf16.msra.mxu0 %v4002
    %5768 = vmatprep.subr.bf16.mxu0 %v4001
    %5769 = vmatpush1.bf16.msra.mxu0 %v4000
    %5770 = vmatprep.subr.bf16.mxu0 %v4031
    %5771 = vmatpush2.bf16.msra.mxu0 %v4030
    %5772 = vmatprep.subr.bf16.mxu0 %v4029
    %5773 = vmatpush2.bf16.msra.mxu0 %v4028
    %5774 = vmatprep.subr.bf16.mxu0 %v4027
    %5775 = vmatpush2.bf16.msra.mxu0 %v4026
    %5776 = vmatprep.subr.bf16.mxu0 %v4025
    %5777 = vmatpush2.bf16.msra.mxu0 %v4024
    %5778 = vmatprep.subr.bf16.mxu0 %v4023
    %5779 = vmatpush2.bf16.msra.mxu0 %v4022
    %5780 = vmatprep.subr.bf16.mxu0 %v4021
    %5781 = vmatpush2.bf16.msra.mxu0 %v4020
    %5782 = vmatprep.subr.bf16.mxu0 %v4019
    %5783 = vmatpush2.bf16.msra.mxu0 %v4018
    %5784 = vmatprep.subr.bf16.mxu0 %v4017
    %5785 = vmatpush2.bf16.msra.mxu0 %v4016
    %5786 = vmatprep.mubr.bf16.mxu0 %v1081
    %5787 = vmatmul.mubr.bf16.gmra.mxu0 %v1080
    %v5788 = vpop.f32.mrf.mxu0
    %v5789 = vadd.f32 %v5746, %v5788
    %v5790 = vpop.f32.mrf.mxu0
    %v5791 = vadd.f32 %v5748, %v5790
    %v5792 = vpop.f32.mrf.mxu0
    %v5793 = vadd.f32 %v5750, %v5792
    %v5794 = vpop.f32.mrf.mxu0
    %v5795 = vadd.f32 %v5752, %v5794
    %5796 = vdwg.mxu0
    %5797 = vmatprep.subr.bf16.mxu0 %v4047
    %5798 = vmatpush1.bf16.msra.mxu0 %v4046
    %5799 = vmatprep.subr.bf16.mxu0 %v4045
    %5800 = vmatpush1.bf16.msra.mxu0 %v4044
    %5801 = vmatprep.subr.bf16.mxu0 %v4043
    %5802 = vmatpush1.bf16.msra.mxu0 %v4042
    %5803 = vmatprep.subr.bf16.mxu0 %v4041
    %5804 = vmatpush1.bf16.msra.mxu0 %v4040
    %5805 = vmatprep.subr.bf16.mxu0 %v4039
    %5806 = vmatpush1.bf16.msra.mxu0 %v4038
    %5807 = vmatprep.subr.bf16.mxu0 %v4037
    %5808 = vmatpush1.bf16.msra.mxu0 %v4036
    %5809 = vmatprep.subr.bf16.mxu0 %v4035
    %5810 = vmatpush1.bf16.msra.mxu0 %v4034
    %5811 = vmatprep.subr.bf16.mxu0 %v4033
    %5812 = vmatpush1.bf16.msra.mxu0 %v4032
    %5813 = vmatprep.subr.bf16.mxu0 %v4063
    %5814 = vmatpush2.bf16.msra.mxu0 %v4062
    %5815 = vmatprep.subr.bf16.mxu0 %v4061
    %5816 = vmatpush2.bf16.msra.mxu0 %v4060
    %5817 = vmatprep.subr.bf16.mxu0 %v4059
    %5818 = vmatpush2.bf16.msra.mxu0 %v4058
    %5819 = vmatprep.subr.bf16.mxu0 %v4057
    %5820 = vmatpush2.bf16.msra.mxu0 %v4056
    %5821 = vmatprep.subr.bf16.mxu0 %v4055
    %5822 = vmatpush2.bf16.msra.mxu0 %v4054
    %5823 = vmatprep.subr.bf16.mxu0 %v4053
    %5824 = vmatpush2.bf16.msra.mxu0 %v4052
    %5825 = vmatprep.subr.bf16.mxu0 %v4051
    %5826 = vmatpush2.bf16.msra.mxu0 %v4050
    %5827 = vmatprep.subr.bf16.mxu0 %v4049
    %5828 = vmatpush2.bf16.msra.mxu0 %v4048
    %5829 = vmatprep.mubr.bf16.mxu0 %v1083
    %5830 = vmatmul.mubr.bf16.gmra.mxu0 %v1082
    %v5831 = vpop.f32.mrf.mxu0
    %v5832 = vadd.f32 %v5789, %v5831
    %v5833 = vpop.f32.mrf.mxu0
    %v5834 = vadd.f32 %v5791, %v5833
    %v5835 = vpop.f32.mrf.mxu0
    %v5836 = vadd.f32 %v5793, %v5835
    %v5837 = vpop.f32.mrf.mxu0
    %v5838 = vadd.f32 %v5795, %v5837
    %5839 = vdwg.mxu0
    %5840 = vmatprep.subr.bf16.mxu0 %v4079
    %5841 = vmatpush1.bf16.msra.mxu0 %v4078
    %5842 = vmatprep.subr.bf16.mxu0 %v4077
    %5843 = vmatpush1.bf16.msra.mxu0 %v4076
    %5844 = vmatprep.subr.bf16.mxu0 %v4075
    %5845 = vmatpush1.bf16.msra.mxu0 %v4074
    %5846 = vmatprep.subr.bf16.mxu0 %v4073
    %5847 = vmatpush1.bf16.msra.mxu0 %v4072
    %5848 = vmatprep.subr.bf16.mxu0 %v4071
    %5849 = vmatpush1.bf16.msra.mxu0 %v4070
    %5850 = vmatprep.subr.bf16.mxu0 %v4069
    %5851 = vmatpush1.bf16.msra.mxu0 %v4068
    %5852 = vmatprep.subr.bf16.mxu0 %v4067
    %5853 = vmatpush1.bf16.msra.mxu0 %v4066
    %5854 = vmatprep.subr.bf16.mxu0 %v4065
    %5855 = vmatpush1.bf16.msra.mxu0 %v4064
    %5856 = vmatprep.subr.bf16.mxu0 %v4095
    %5857 = vmatpush2.bf16.msra.mxu0 %v4094
    %5858 = vmatprep.subr.bf16.mxu0 %v4093
    %5859 = vmatpush2.bf16.msra.mxu0 %v4092
    %5860 = vmatprep.subr.bf16.mxu0 %v4091
    %5861 = vmatpush2.bf16.msra.mxu0 %v4090
    %5862 = vmatprep.subr.bf16.mxu0 %v4089
    %5863 = vmatpush2.bf16.msra.mxu0 %v4088
    %5864 = vmatprep.subr.bf16.mxu0 %v4087
    %5865 = vmatpush2.bf16.msra.mxu0 %v4086
    %5866 = vmatprep.subr.bf16.mxu0 %v4085
    %5867 = vmatpush2.bf16.msra.mxu0 %v4084
    %5868 = vmatprep.subr.bf16.mxu0 %v4083
    %5869 = vmatpush2.bf16.msra.mxu0 %v4082
    %5870 = vmatprep.subr.bf16.mxu0 %v4081
    %5871 = vmatpush2.bf16.msra.mxu0 %v4080
    %5872 = vmatprep.mubr.bf16.mxu0 %v1085
    %5873 = vmatmul.mubr.bf16.gmra.mxu0 %v1084
    %v5874 = vpop.f32.mrf.mxu0
    %v5875 = vadd.f32 %v5832, %v5874
    %v5876 = vpop.f32.mrf.mxu0
    %v5877 = vadd.f32 %v5834, %v5876
    %v5878 = vpop.f32.mrf.mxu0
    %v5879 = vadd.f32 %v5836, %v5878
    %v5880 = vpop.f32.mrf.mxu0
    %v5881 = vadd.f32 %v5838, %v5880
    %5882 = vdwg.mxu0
    %5883 = vmatprep.subr.bf16.mxu0 %v4111
    %5884 = vmatpush1.bf16.msra.mxu0 %v4110
    %5885 = vmatprep.subr.bf16.mxu0 %v4109
    %5886 = vmatpush1.bf16.msra.mxu0 %v4108
    %5887 = vmatprep.subr.bf16.mxu0 %v4107
    %5888 = vmatpush1.bf16.msra.mxu0 %v4106
    %5889 = vmatprep.subr.bf16.mxu0 %v4105
    %5890 = vmatpush1.bf16.msra.mxu0 %v4104
    %5891 = vmatprep.subr.bf16.mxu0 %v4103
    %5892 = vmatpush1.bf16.msra.mxu0 %v4102
    %5893 = vmatprep.subr.bf16.mxu0 %v4101
    %5894 = vmatpush1.bf16.msra.mxu0 %v4100
    %5895 = vmatprep.subr.bf16.mxu0 %v4099
    %5896 = vmatpush1.bf16.msra.mxu0 %v4098
    %5897 = vmatprep.subr.bf16.mxu0 %v4097
    %5898 = vmatpush1.bf16.msra.mxu0 %v4096
    %5899 = vmatprep.subr.bf16.mxu0 %v4127
    %5900 = vmatpush2.bf16.msra.mxu0 %v4126
    %5901 = vmatprep.subr.bf16.mxu0 %v4125
    %5902 = vmatpush2.bf16.msra.mxu0 %v4124
    %5903 = vmatprep.subr.bf16.mxu0 %v4123
    %5904 = vmatpush2.bf16.msra.mxu0 %v4122
    %5905 = vmatprep.subr.bf16.mxu0 %v4121
    %5906 = vmatpush2.bf16.msra.mxu0 %v4120
    %5907 = vmatprep.subr.bf16.mxu0 %v4119
    %5908 = vmatpush2.bf16.msra.mxu0 %v4118
    %5909 = vmatprep.subr.bf16.mxu0 %v4117
    %5910 = vmatpush2.bf16.msra.mxu0 %v4116
    %5911 = vmatprep.subr.bf16.mxu0 %v4115
    %5912 = vmatpush2.bf16.msra.mxu0 %v4114
    %5913 = vmatprep.subr.bf16.mxu0 %v4113
    %5914 = vmatpush2.bf16.msra.mxu0 %v4112
    %5915 = vmatprep.mubr.bf16.mxu0 %v1087
    %5916 = vmatmul.mubr.bf16.gmra.mxu0 %v1086
    %v5917 = vpop.f32.mrf.mxu0
    %v5918 = vadd.f32 %v5875, %v5917
    %v5919 = vpop.f32.mrf.mxu0
    %v5920 = vadd.f32 %v5877, %v5919
    %v5921 = vpop.f32.mrf.mxu0
    %v5922 = vadd.f32 %v5879, %v5921
    %v5923 = vpop.f32.mrf.mxu0
    %v5924 = vadd.f32 %v5881, %v5923
    %5925 = vdwg.mxu0
    %5926 = vmatprep.subr.bf16.mxu0 %v4143
    %5927 = vmatpush1.bf16.msra.mxu0 %v4142
    %5928 = vmatprep.subr.bf16.mxu0 %v4141
    %5929 = vmatpush1.bf16.msra.mxu0 %v4140
    %5930 = vmatprep.subr.bf16.mxu0 %v4139
    %5931 = vmatpush1.bf16.msra.mxu0 %v4138
    %5932 = vmatprep.subr.bf16.mxu0 %v4137
    %5933 = vmatpush1.bf16.msra.mxu0 %v4136
    %5934 = vmatprep.subr.bf16.mxu0 %v4135
    %5935 = vmatpush1.bf16.msra.mxu0 %v4134
    %5936 = vmatprep.subr.bf16.mxu0 %v4133
    %5937 = vmatpush1.bf16.msra.mxu0 %v4132
    %5938 = vmatprep.subr.bf16.mxu0 %v4131
    %5939 = vmatpush1.bf16.msra.mxu0 %v4130
    %5940 = vmatprep.subr.bf16.mxu0 %v4129
    %5941 = vmatpush1.bf16.msra.mxu0 %v4128
    %5942 = vmatprep.subr.bf16.mxu0 %v4159
    %5943 = vmatpush2.bf16.msra.mxu0 %v4158
    %5944 = vmatprep.subr.bf16.mxu0 %v4157
    %5945 = vmatpush2.bf16.msra.mxu0 %v4156
    %5946 = vmatprep.subr.bf16.mxu0 %v4155
    %5947 = vmatpush2.bf16.msra.mxu0 %v4154
    %5948 = vmatprep.subr.bf16.mxu0 %v4153
    %5949 = vmatpush2.bf16.msra.mxu0 %v4152
    %5950 = vmatprep.subr.bf16.mxu0 %v4151
    %5951 = vmatpush2.bf16.msra.mxu0 %v4150
    %5952 = vmatprep.subr.bf16.mxu0 %v4149
    %5953 = vmatpush2.bf16.msra.mxu0 %v4148
    %5954 = vmatprep.subr.bf16.mxu0 %v4147
    %5955 = vmatpush2.bf16.msra.mxu0 %v4146
    %5956 = vmatprep.subr.bf16.mxu0 %v4145
    %5957 = vmatpush2.bf16.msra.mxu0 %v4144
    %5958 = vmatprep.mubr.bf16.mxu0 %v1089
    %5959 = vmatmul.mubr.bf16.gmra.mxu0 %v1088
    %v5960 = vpop.f32.mrf.mxu0
    %v5961 = vadd.f32 %v5918, %v5960
    %v5962 = vpop.f32.mrf.mxu0
    %v5963 = vadd.f32 %v5920, %v5962
    %v5964 = vpop.f32.mrf.mxu0
    %v5965 = vadd.f32 %v5922, %v5964
    %v5966 = vpop.f32.mrf.mxu0
    %v5967 = vadd.f32 %v5924, %v5966
    %5968 = vdwg.mxu0
    %5969 = vmatprep.subr.bf16.mxu0 %v4175
    %5970 = vmatpush1.bf16.msra.mxu0 %v4174
    %5971 = vmatprep.subr.bf16.mxu0 %v4173
    %5972 = vmatpush1.bf16.msra.mxu0 %v4172
    %5973 = vmatprep.subr.bf16.mxu0 %v4171
    %5974 = vmatpush1.bf16.msra.mxu0 %v4170
    %5975 = vmatprep.subr.bf16.mxu0 %v4169
    %5976 = vmatpush1.bf16.msra.mxu0 %v4168
    %5977 = vmatprep.subr.bf16.mxu0 %v4167
    %5978 = vmatpush1.bf16.msra.mxu0 %v4166
    %5979 = vmatprep.subr.bf16.mxu0 %v4165
    %5980 = vmatpush1.bf16.msra.mxu0 %v4164
    %5981 = vmatprep.subr.bf16.mxu0 %v4163
    %5982 = vmatpush1.bf16.msra.mxu0 %v4162
    %5983 = vmatprep.subr.bf16.mxu0 %v4161
    %5984 = vmatpush1.bf16.msra.mxu0 %v4160
    %5985 = vmatprep.subr.bf16.mxu0 %v4191
    %5986 = vmatpush2.bf16.msra.mxu0 %v4190
    %5987 = vmatprep.subr.bf16.mxu0 %v4189
    %5988 = vmatpush2.bf16.msra.mxu0 %v4188
    %5989 = vmatprep.subr.bf16.mxu0 %v4187
    %5990 = vmatpush2.bf16.msra.mxu0 %v4186
    %5991 = vmatprep.subr.bf16.mxu0 %v4185
    %5992 = vmatpush2.bf16.msra.mxu0 %v4184
    %5993 = vmatprep.subr.bf16.mxu0 %v4183
    %5994 = vmatpush2.bf16.msra.mxu0 %v4182
    %5995 = vmatprep.subr.bf16.mxu0 %v4181
    %5996 = vmatpush2.bf16.msra.mxu0 %v4180
    %5997 = vmatprep.subr.bf16.mxu0 %v4179
    %5998 = vmatpush2.bf16.msra.mxu0 %v4178
    %5999 = vmatprep.subr.bf16.mxu0 %v4177
    %6000 = vmatpush2.bf16.msra.mxu0 %v4176
    %6001 = vmatprep.mubr.bf16.mxu0 %v1091
    %6002 = vmatmul.mubr.bf16.gmra.mxu0 %v1090
    %v6003 = vpop.f32.mrf.mxu0
    %v6004 = vadd.f32 %v5961, %v6003
    %v6005 = vpop.f32.mrf.mxu0
    %v6006 = vadd.f32 %v5963, %v6005
    %v6007 = vpop.f32.mrf.mxu0
    %v6008 = vadd.f32 %v5965, %v6007
    %v6009 = vpop.f32.mrf.mxu0
    %v6010 = vadd.f32 %v5967, %v6009
    %6011 = vdwg.mxu0
    %6012 = vmatprep.subr.bf16.mxu0 %v4207
    %6013 = vmatpush1.bf16.msra.mxu0 %v4206
    %6014 = vmatprep.subr.bf16.mxu0 %v4205
    %6015 = vmatpush1.bf16.msra.mxu0 %v4204
    %6016 = vmatprep.subr.bf16.mxu0 %v4203
    %6017 = vmatpush1.bf16.msra.mxu0 %v4202
    %6018 = vmatprep.subr.bf16.mxu0 %v4201
    %6019 = vmatpush1.bf16.msra.mxu0 %v4200
    %6020 = vmatprep.subr.bf16.mxu0 %v4199
    %6021 = vmatpush1.bf16.msra.mxu0 %v4198
    %6022 = vmatprep.subr.bf16.mxu0 %v4197
    %6023 = vmatpush1.bf16.msra.mxu0 %v4196
    %6024 = vmatprep.subr.bf16.mxu0 %v4195
    %6025 = vmatpush1.bf16.msra.mxu0 %v4194
    %6026 = vmatprep.subr.bf16.mxu0 %v4193
    %6027 = vmatpush1.bf16.msra.mxu0 %v4192
    %6028 = vmatprep.subr.bf16.mxu0 %v4223
    %6029 = vmatpush2.bf16.msra.mxu0 %v4222
    %6030 = vmatprep.subr.bf16.mxu0 %v4221
    %6031 = vmatpush2.bf16.msra.mxu0 %v4220
    %6032 = vmatprep.subr.bf16.mxu0 %v4219
    %6033 = vmatpush2.bf16.msra.mxu0 %v4218
    %6034 = vmatprep.subr.bf16.mxu0 %v4217
    %6035 = vmatpush2.bf16.msra.mxu0 %v4216
    %6036 = vmatprep.subr.bf16.mxu0 %v4215
    %6037 = vmatpush2.bf16.msra.mxu0 %v4214
    %6038 = vmatprep.subr.bf16.mxu0 %v4213
    %6039 = vmatpush2.bf16.msra.mxu0 %v4212
    %6040 = vmatprep.subr.bf16.mxu0 %v4211
    %6041 = vmatpush2.bf16.msra.mxu0 %v4210
    %6042 = vmatprep.subr.bf16.mxu0 %v4209
    %6043 = vmatpush2.bf16.msra.mxu0 %v4208
    %6044 = vmatprep.mubr.bf16.mxu0 %v1093
    %6045 = vmatmul.mubr.bf16.gmra.mxu0 %v1092
    %v6046 = vpop.f32.mrf.mxu0
    %v6047 = vadd.f32 %v6004, %v6046
    %v6048 = vpop.f32.mrf.mxu0
    %v6049 = vadd.f32 %v6006, %v6048
    %v6050 = vpop.f32.mrf.mxu0
    %v6051 = vadd.f32 %v6008, %v6050
    %v6052 = vpop.f32.mrf.mxu0
    %v6053 = vadd.f32 %v6010, %v6052
    %6054 = vdwg.mxu0
    %6055 = vmatprep.subr.bf16.mxu0 %v4239
    %6056 = vmatpush1.bf16.msra.mxu0 %v4238
    %6057 = vmatprep.subr.bf16.mxu0 %v4237
    %6058 = vmatpush1.bf16.msra.mxu0 %v4236
    %6059 = vmatprep.subr.bf16.mxu0 %v4235
    %6060 = vmatpush1.bf16.msra.mxu0 %v4234
    %6061 = vmatprep.subr.bf16.mxu0 %v4233
    %6062 = vmatpush1.bf16.msra.mxu0 %v4232
    %6063 = vmatprep.subr.bf16.mxu0 %v4231
    %6064 = vmatpush1.bf16.msra.mxu0 %v4230
    %6065 = vmatprep.subr.bf16.mxu0 %v4229
    %6066 = vmatpush1.bf16.msra.mxu0 %v4228
    %6067 = vmatprep.subr.bf16.mxu0 %v4227
    %6068 = vmatpush1.bf16.msra.mxu0 %v4226
    %6069 = vmatprep.subr.bf16.mxu0 %v4225
    %6070 = vmatpush1.bf16.msra.mxu0 %v4224
    %6071 = vmatprep.subr.bf16.mxu0 %v4255
    %6072 = vmatpush2.bf16.msra.mxu0 %v4254
    %6073 = vmatprep.subr.bf16.mxu0 %v4253
    %6074 = vmatpush2.bf16.msra.mxu0 %v4252
    %6075 = vmatprep.subr.bf16.mxu0 %v4251
    %6076 = vmatpush2.bf16.msra.mxu0 %v4250
    %6077 = vmatprep.subr.bf16.mxu0 %v4249
    %6078 = vmatpush2.bf16.msra.mxu0 %v4248
    %6079 = vmatprep.subr.bf16.mxu0 %v4247
    %6080 = vmatpush2.bf16.msra.mxu0 %v4246
    %6081 = vmatprep.subr.bf16.mxu0 %v4245
    %6082 = vmatpush2.bf16.msra.mxu0 %v4244
    %6083 = vmatprep.subr.bf16.mxu0 %v4243
    %6084 = vmatpush2.bf16.msra.mxu0 %v4242
    %6085 = vmatprep.subr.bf16.mxu0 %v4241
    %6086 = vmatpush2.bf16.msra.mxu0 %v4240
    %6087 = vmatprep.mubr.bf16.mxu0 %v1095
    %6088 = vmatmul.mubr.bf16.gmra.mxu0 %v1094
    %v6089 = vpop.f32.mrf.mxu0
    %v6090 = vadd.f32 %v6047, %v6089
    %v6091 = vpop.f32.mrf.mxu0
    %v6092 = vadd.f32 %v6049, %v6091
    %v6093 = vpop.f32.mrf.mxu0
    %v6094 = vadd.f32 %v6051, %v6093
    %v6095 = vpop.f32.mrf.mxu0
    %v6096 = vadd.f32 %v6053, %v6095
    %6097 = vdwg.mxu0
    %6098 = vmatprep.subr.bf16.mxu0 %v4271
    %6099 = vmatpush1.bf16.msra.mxu0 %v4270
    %6100 = vmatprep.subr.bf16.mxu0 %v4269
    %6101 = vmatpush1.bf16.msra.mxu0 %v4268
    %6102 = vmatprep.subr.bf16.mxu0 %v4267
    %6103 = vmatpush1.bf16.msra.mxu0 %v4266
    %6104 = vmatprep.subr.bf16.mxu0 %v4265
    %6105 = vmatpush1.bf16.msra.mxu0 %v4264
    %6106 = vmatprep.subr.bf16.mxu0 %v4263
    %6107 = vmatpush1.bf16.msra.mxu0 %v4262
    %6108 = vmatprep.subr.bf16.mxu0 %v4261
    %6109 = vmatpush1.bf16.msra.mxu0 %v4260
    %6110 = vmatprep.subr.bf16.mxu0 %v4259
    %6111 = vmatpush1.bf16.msra.mxu0 %v4258
    %6112 = vmatprep.subr.bf16.mxu0 %v4257
    %6113 = vmatpush1.bf16.msra.mxu0 %v4256
    %6114 = vmatprep.subr.bf16.mxu0 %v4287
    %6115 = vmatpush2.bf16.msra.mxu0 %v4286
    %6116 = vmatprep.subr.bf16.mxu0 %v4285
    %6117 = vmatpush2.bf16.msra.mxu0 %v4284
    %6118 = vmatprep.subr.bf16.mxu0 %v4283
    %6119 = vmatpush2.bf16.msra.mxu0 %v4282
    %6120 = vmatprep.subr.bf16.mxu0 %v4281
    %6121 = vmatpush2.bf16.msra.mxu0 %v4280
    %6122 = vmatprep.subr.bf16.mxu0 %v4279
    %6123 = vmatpush2.bf16.msra.mxu0 %v4278
    %6124 = vmatprep.subr.bf16.mxu0 %v4277
    %6125 = vmatpush2.bf16.msra.mxu0 %v4276
    %6126 = vmatprep.subr.bf16.mxu0 %v4275
    %6127 = vmatpush2.bf16.msra.mxu0 %v4274
    %6128 = vmatprep.subr.bf16.mxu0 %v4273
    %6129 = vmatpush2.bf16.msra.mxu0 %v4272
    %6130 = vmatprep.mubr.bf16.mxu0 %v1097
    %6131 = vmatmul.mubr.bf16.gmra.mxu0 %v1096
    %v6132 = vpop.f32.mrf.mxu0
    %v6133 = vadd.f32 %v6090, %v6132
    %v6134 = vpop.f32.mrf.mxu0
    %v6135 = vadd.f32 %v6092, %v6134
    %v6136 = vpop.f32.mrf.mxu0
    %v6137 = vadd.f32 %v6094, %v6136
    %v6138 = vpop.f32.mrf.mxu0
    %v6139 = vadd.f32 %v6096, %v6138
    %6140 = vdwg.mxu0
    %6141 = vmatprep.subr.bf16.mxu0 %v4303
    %6142 = vmatpush1.bf16.msra.mxu0 %v4302
    %6143 = vmatprep.subr.bf16.mxu0 %v4301
    %6144 = vmatpush1.bf16.msra.mxu0 %v4300
    %6145 = vmatprep.subr.bf16.mxu0 %v4299
    %6146 = vmatpush1.bf16.msra.mxu0 %v4298
    %6147 = vmatprep.subr.bf16.mxu0 %v4297
    %6148 = vmatpush1.bf16.msra.mxu0 %v4296
    %6149 = vmatprep.subr.bf16.mxu0 %v4295
    %6150 = vmatpush1.bf16.msra.mxu0 %v4294
    %6151 = vmatprep.subr.bf16.mxu0 %v4293
    %6152 = vmatpush1.bf16.msra.mxu0 %v4292
    %6153 = vmatprep.subr.bf16.mxu0 %v4291
    %6154 = vmatpush1.bf16.msra.mxu0 %v4290
    %6155 = vmatprep.subr.bf16.mxu0 %v4289
    %6156 = vmatpush1.bf16.msra.mxu0 %v4288
    %6157 = vmatprep.subr.bf16.mxu0 %v4319
    %6158 = vmatpush2.bf16.msra.mxu0 %v4318
    %6159 = vmatprep.subr.bf16.mxu0 %v4317
    %6160 = vmatpush2.bf16.msra.mxu0 %v4316
    %6161 = vmatprep.subr.bf16.mxu0 %v4315
    %6162 = vmatpush2.bf16.msra.mxu0 %v4314
    %6163 = vmatprep.subr.bf16.mxu0 %v4313
    %6164 = vmatpush2.bf16.msra.mxu0 %v4312
    %6165 = vmatprep.subr.bf16.mxu0 %v4311
    %6166 = vmatpush2.bf16.msra.mxu0 %v4310
    %6167 = vmatprep.subr.bf16.mxu0 %v4309
    %6168 = vmatpush2.bf16.msra.mxu0 %v4308
    %6169 = vmatprep.subr.bf16.mxu0 %v4307
    %6170 = vmatpush2.bf16.msra.mxu0 %v4306
    %6171 = vmatprep.subr.bf16.mxu0 %v4305
    %6172 = vmatpush2.bf16.msra.mxu0 %v4304
    %6173 = vmatprep.mubr.bf16.mxu0 %v1099
    %6174 = vmatmul.mubr.bf16.gmra.mxu0 %v1098
    %v6175 = vpop.f32.mrf.mxu0
    %v6176 = vadd.f32 %v6133, %v6175
    %v6177 = vpop.f32.mrf.mxu0
    %v6178 = vadd.f32 %v6135, %v6177
    %v6179 = vpop.f32.mrf.mxu0
    %v6180 = vadd.f32 %v6137, %v6179
    %v6181 = vpop.f32.mrf.mxu0
    %v6182 = vadd.f32 %v6139, %v6181
    %6183 = vdwg.mxu0
    %6184 = vmatprep.subr.bf16.mxu0 %v4335
    %6185 = vmatpush1.bf16.msra.mxu0 %v4334
    %6186 = vmatprep.subr.bf16.mxu0 %v4333
    %6187 = vmatpush1.bf16.msra.mxu0 %v4332
    %6188 = vmatprep.subr.bf16.mxu0 %v4331
    %6189 = vmatpush1.bf16.msra.mxu0 %v4330
    %6190 = vmatprep.subr.bf16.mxu0 %v4329
    %6191 = vmatpush1.bf16.msra.mxu0 %v4328
    %6192 = vmatprep.subr.bf16.mxu0 %v4327
    %6193 = vmatpush1.bf16.msra.mxu0 %v4326
    %6194 = vmatprep.subr.bf16.mxu0 %v4325
    %6195 = vmatpush1.bf16.msra.mxu0 %v4324
    %6196 = vmatprep.subr.bf16.mxu0 %v4323
    %6197 = vmatpush1.bf16.msra.mxu0 %v4322
    %6198 = vmatprep.subr.bf16.mxu0 %v4321
    %6199 = vmatpush1.bf16.msra.mxu0 %v4320
    %6200 = vmatprep.subr.bf16.mxu0 %v4351
    %6201 = vmatpush2.bf16.msra.mxu0 %v4350
    %6202 = vmatprep.subr.bf16.mxu0 %v4349
    %6203 = vmatpush2.bf16.msra.mxu0 %v4348
    %6204 = vmatprep.subr.bf16.mxu0 %v4347
    %6205 = vmatpush2.bf16.msra.mxu0 %v4346
    %6206 = vmatprep.subr.bf16.mxu0 %v4345
    %6207 = vmatpush2.bf16.msra.mxu0 %v4344
    %6208 = vmatprep.subr.bf16.mxu0 %v4343
    %6209 = vmatpush2.bf16.msra.mxu0 %v4342
    %6210 = vmatprep.subr.bf16.mxu0 %v4341
    %6211 = vmatpush2.bf16.msra.mxu0 %v4340
    %6212 = vmatprep.subr.bf16.mxu0 %v4339
    %6213 = vmatpush2.bf16.msra.mxu0 %v4338
    %6214 = vmatprep.subr.bf16.mxu0 %v4337
    %6215 = vmatpush2.bf16.msra.mxu0 %v4336
    %6216 = vmatprep.mubr.bf16.mxu0 %v1101
    %6217 = vmatmul.mubr.bf16.gmra.mxu0 %v1100
    %v6218 = vpop.f32.mrf.mxu0
    %v6219 = vadd.f32 %v6176, %v6218
    %v6220 = vpop.f32.mrf.mxu0
    %v6221 = vadd.f32 %v6178, %v6220
    %v6222 = vpop.f32.mrf.mxu0
    %v6223 = vadd.f32 %v6180, %v6222
    %v6224 = vpop.f32.mrf.mxu0
    %v6225 = vadd.f32 %v6182, %v6224
    %6226 = vdwg.mxu0
    %v6227 = vmax.f32 %v6219, 0.0
    %v6228 = vmax.f32 %v6221, 0.0
    %v6229 = vmax.f32 %v6223, 0.0
    %v6230 = vmax.f32 %v6225, 0.0
    %v6231 = vpack.c.bf16 %v6229, %v6227
    %v6232 = vpack.c.bf16 %v6230, %v6228
    %v6235 = vunpack.c.l.b16 %v6231
    %v6236 = vunpack.c.l.b16 %v6232
    %v6237 = vunpack.c.h.b16 %v6231
    %v6238 = vunpack.c.h.b16 %v6232
    %v6239 = vpack.c.b16 %v6236, %v6235
    %v6240 = vpack.c.b16 %v6238, %v6237
    %6243 = vst [vmem:[%s3] sm:$0xff] %v6239
    %6244 = vst [vmem:[%s3 + $0x8] sm:$0xff] %v6240
    // Predicated region
    $region22: #{_forward.3} parent=1 // pred_check
      _
    $region23: #{_forward.3} parent=1 // pred_check_branch
      %6246 = sbr.rel (0) target = $region25
    $region24: #{_forward.3} parent=1 // pred_region
      _
    $region25: #{_forward.3} parent=1 // pred_fallthru
      _
    // Predicated region
    $region26: #{_forward.3} parent=1 // pred_check
      _
    $region27: #{_forward.3} parent=1 // pred_check_branch
      %6248 = sbr.rel (0) target = $region29
    $region28: #{_forward.3} parent=1 // pred_region
      _
    $region29: #{_forward.3} parent=1 // pred_fallthru
      _
    %6249 = vsyncpa [#allocation3], 1
    %6250 = vsyncpa [#allocation5], 1

</llo_original>
